<compile_context>
chip_gen: v6e
topology: v6e:2x2x1
jax: 0.10.0
libtpu: 0.0.40
codegen_flags: <defaults>
</compile_context>

<pallas_src>
import functools

import jax
import jax.numpy as jnp
from jax.experimental import pallas as pl
from jax.experimental.pallas import tpu as pltpu

HIDDEN = 8
INPUT = 1


def tiny_lstm_kernel(slab_ref, out_ref, *, t_steps, hidden):
    """Transposed (gate-on-sublane, batch-on-lane) layout; single fused input.

    slab_ref: (4H, W) f32 slab:
        [:, 0:H]        W_hh                (4H, H)
        [:, H]          W_ih  (input_size=1) column
        [:, H+1]        b_ih + b_hh         column
        [0:H, H+2]      fc weight           column
        [0,   H+3]      fc bias
        [0:T, H+4:H+4+B] input sequence x   (time on sublanes, batch on lanes)
    out_ref:  (1, B) lane-dense output.
    """
    H = hidden
    B = out_ref.shape[1]

    # ---- Loop-invariant loads: static ref slices, read once. ----------------
    whh = slab_ref[:, 0:H]                       # (4H, H)
    wih = slab_ref[:, H:H + 1]                   # (4H, 1)
    b = slab_ref[:, H + 1:H + 2]                 # (4H, 1)
    fcw = slab_ref[0:H, H + 2:H + 3]             # (H, 1)
    fcb = slab_ref[0:1, H + 3:H + 4]             # (1, 1)
    x = slab_ref[0:t_steps, H + 4:H + 4 + B]     # (T, B) — one vreg at T=8,B=2

    h = jnp.zeros((H, B), jnp.float32)
    c = jnp.zeros((H, B), jnp.float32)

    # ---- Serial recurrence, fully unrolled (T is small & static). -----------
    for t in range(t_steps):
        # Input projection: independent of h, so it overlaps the recurrence.
        xw = wih * x[t:t + 1, :] + b                        # (4H, B)
        # Recurrent term: one small MXU matmul per step replaces the 8-deep
        # broadcast-FMA chain and all per-k sublane extracts of h[k].
        gates = xw + jnp.dot(
            whh, h,
            preferred_element_type=jnp.float32,
            precision=jax.lax.Precision.HIGHEST)            # (4H, B)

        # PyTorch gate order along 4H: i, f, g, o.  Gate slices are 8-aligned
        # sublane slices -> no cross-lane movement.
        i_f = jax.nn.sigmoid(gates[0:2 * H, :])             # i and f together
        o_g = jax.nn.sigmoid(gates[3 * H:4 * H, :])
        g_g = jnp.tanh(gates[2 * H:3 * H, :])

        c = i_f[H:2 * H, :] * c + i_f[0:H, :] * g_g
        h = o_g * jnp.tanh(c)

    # ---- Final FC + sigmoid (VPU/XLU only; an N=1 matmul would waste MXU). --
    logits = jnp.sum(fcw * h, axis=0, keepdims=True) + fcb  # (1, B)
    out_ref[...] = jax.nn.sigmoid(logits)                   # lane-dense store


def tiny_lstm_forward(x, params):
    """x: (B, T, 1) batch-first, float32.  Returns (B,) like torch .squeeze()."""
    B, T, I = x.shape
    H = HIDDEN
    assert I == INPUT == 1
    # TODO(synk): for T > 4H, pass x as a separate (T, B) input instead of
    # packing it into the slab rows.
    assert T <= 4 * H

    w_hh = params["w_hh"].astype(jnp.float32)                                # (4H, H)
    w_ih = params["w_ih"].astype(jnp.float32)                                # (4H, 1)
    bias = (params["b_ih"] + params["b_hh"]).astype(jnp.float32).reshape(4 * H, 1)
    fc_w = params["fc_w"].astype(jnp.float32).reshape(H, 1)
    fc_b = params["fc_b"].astype(jnp.float32).reshape(1, 1)
    x_tb = jnp.transpose(x.astype(jnp.float32)[:, :, 0])                     # (T, B)

    # One fused f32 slab -> a single input DMA into the kernel.
    width = max(16, H + 4 + B)
    slab = jnp.zeros((4 * H, width), jnp.float32)
    slab = slab.at[:, 0:H].set(w_hh)
    slab = slab.at[:, H:H + 1].set(w_ih)
    slab = slab.at[:, H + 1:H + 2].set(bias)
    slab = slab.at[0:H, H + 2:H + 3].set(fc_w)
    slab = slab.at[0:1, H + 3:H + 4].set(fc_b)
    slab = slab.at[0:T, H + 4:H + 4 + B].set(x_tb)

    vmem = pl.BlockSpec(memory_space=pltpu.MemorySpace.VMEM)
    kernel = functools.partial(tiny_lstm_kernel, t_steps=T, hidden=H)
    out = pl.pallas_call(
        kernel,
        out_shape=jax.ShapeDtypeStruct((1, B), jnp.float32),
        in_specs=[vmem],
        out_specs=vmem,
    )(slab)
    return out[0]                                                            # (B,)


def make_params(key):
    """Deterministic init mimicking PyTorch's uniform(-1/sqrt(H), 1/sqrt(H))."""
    H, I = HIDDEN, INPUT
    ks = jax.random.split(key, 6)
    s = 1.0 / jnp.sqrt(H)
    u = lambda k, shape: jax.random.uniform(k, shape, jnp.float32, -s, s)
    return {
        "w_ih": u(ks[0], (4 * H, I)),
        "w_hh": u(ks[1], (4 * H, H)),
        "b_ih": u(ks[2], (4 * H,)),
        "b_hh": u(ks[3], (4 * H,)),
        "fc_w": u(ks[4], (1, H)),
        "fc_b": u(ks[5], (1,)),
    }


def tiny_lstm_reference(x, params):
    """Pure-JAX reference (same math, f32-accurate matmuls)."""
    B, T, _ = x.shape
    H = HIDDEN
    hp = jax.lax.Precision.HIGHEST
    h = jnp.zeros((B, H), jnp.float32)
    c = jnp.zeros((B, H), jnp.float32)
    wih_t = params["w_ih"].T
    whh_t = params["w_hh"].T
    b = params["b_ih"] + params["b_hh"]
    for t in range(T):
        gates = (jnp.dot(x[:, t, :], wih_t, precision=hp)
                 + jnp.dot(h, whh_t, precision=hp) + b)
        i = jax.nn.sigmoid(gates[:, 0 * H:1 * H])
        f = jax.nn.sigmoid(gates[:, 1 * H:2 * H])
        g = jnp.tanh(gates[:, 2 * H:3 * H])
        o = jax.nn.sigmoid(gates[:, 3 * H:4 * H])
        c = f * c + i * g
        h = o * jnp.tanh(c)
    logit = jnp.dot(h, params["fc_w"].T, precision=hp) + params["fc_b"]
    return jax.nn.sigmoid(logit)[:, 0]


if __name__ == "__main__":
    key = jax.random.PRNGKey(0)
    k_x, k_p = jax.random.split(key)

    B, T = 2, 8
    x = jax.random.normal(k_x, (B, T, 1), dtype=jnp.float32)
    params = make_params(k_p)

    y = tiny_lstm_forward(x, params)
    y = jax.block_until_ready(y)

    y_ref = tiny_lstm_reference(x, params)
    assert y.shape == (B,)
    # 1e-4 tolerance: covers EUP-vs-XLA transcendental approximation deltas;
    # any gate-order / bias / recurrence bug would be O(0.1) off.
    assert jnp.allclose(y, y_ref, atol=1e-4, rtol=1e-4), (y, y_ref)

    print("KERNEL_OK")
</pallas_src>

<mosaic_0001>
module attributes {stable_mosaic.version = 11 : i64} {
  func.func @tiny_lstm_kernel(%arg0: memref<32x16xf32, #tpu.memory_space<vmem>>, %arg1: memref<1x2xf32, #tpu.memory_space<vmem>>) attributes {dimension_semantics = [], scalar_prefetch = 0 : i64, scratch_operands = 0 : i64, tpu.core_type = #tpu.core_type<tc>} {
    %c0 = arith.constant 0 : index
    %c0_0 = arith.constant 0 : index
    %0 = vector.load %arg0[%c0, %c0_0] : memref<32x16xf32, #tpu.memory_space<vmem>>, vector<32x8xf32>
    %c0_1 = arith.constant 0 : index
    %c8 = arith.constant 8 : index
    %1 = vector.load %arg0[%c0_1, %c8] : memref<32x16xf32, #tpu.memory_space<vmem>>, vector<32x1xf32>
    %c0_2 = arith.constant 0 : index
    %c9 = arith.constant 9 : index
    %2 = vector.load %arg0[%c0_2, %c9] : memref<32x16xf32, #tpu.memory_space<vmem>>, vector<32x1xf32>
    %c0_3 = arith.constant 0 : index
    %c10 = arith.constant 10 : index
    %3 = vector.load %arg0[%c0_3, %c10] : memref<32x16xf32, #tpu.memory_space<vmem>>, vector<8x1xf32>
    %c0_4 = arith.constant 0 : index
    %c11 = arith.constant 11 : index
    %4 = vector.load %arg0[%c0_4, %c11] : memref<32x16xf32, #tpu.memory_space<vmem>>, vector<1x1xf32>
    %c0_5 = arith.constant 0 : index
    %c12 = arith.constant 12 : index
    %5 = vector.load %arg0[%c0_5, %c12] : memref<32x16xf32, #tpu.memory_space<vmem>>, vector<8x2xf32>
    %cst = arith.constant 0.000000e+00 : f32
    %6 = vector.broadcast %cst : f32 to vector<8x2xf32>
    %cst_6 = arith.constant 0.000000e+00 : f32
    %7 = vector.broadcast %cst_6 : f32 to vector<8x2xf32>
    %8 = vector.extract_strided_slice %5 {offsets = [0, 0], sizes = [1, 2], strides = [1, 1]} : vector<8x2xf32> to vector<1x2xf32>
    %9 = vector.broadcast %1 : vector<32x1xf32> to vector<32x2xf32>
    %10 = vector.broadcast %8 : vector<1x2xf32> to vector<32x2xf32>
    %11 = arith.mulf %9, %10 : vector<32x2xf32>
    %12 = vector.broadcast %2 : vector<32x1xf32> to vector<32x2xf32>
    %13 = arith.addf %11, %12 : vector<32x2xf32>
    %cst_7 = arith.constant dense<0.000000e+00> : vector<32x2xf32>
    %14 = tpu.matmul %0, %6, %cst_7 {dimension_numbers = #tpu.dot_dimension_numbers<[1], [0], [0], [1], [0, 0, 1, 1], [], []>, precision = #tpu.contract_precision<fp32>} : vector<32x8xf32>, vector<8x2xf32>, vector<32x2xf32> -> vector<32x2xf32>
    %15 = arith.addf %13, %14 : vector<32x2xf32>
    %16 = vector.extract_strided_slice %15 {offsets = [0, 0], sizes = [16, 2], strides = [1, 1]} : vector<32x2xf32> to vector<16x2xf32>
    %17 = arith.negf %16 : vector<16x2xf32>
    %18 = math.exp %17 : vector<16x2xf32>
    %cst_8 = arith.constant 1.000000e+00 : f32
    %19 = vector.broadcast %cst_8 : f32 to vector<16x2xf32>
    %20 = arith.addf %19, %18 : vector<16x2xf32>
    %21 = arith.divf %19, %20 : vector<16x2xf32>
    %22 = vector.extract_strided_slice %15 {offsets = [24, 0], sizes = [8, 2], strides = [1, 1]} : vector<32x2xf32> to vector<8x2xf32>
    %23 = arith.negf %22 : vector<8x2xf32>
    %24 = math.exp %23 : vector<8x2xf32>
    %cst_9 = arith.constant 1.000000e+00 : f32
    %25 = vector.broadcast %cst_9 : f32 to vector<8x2xf32>
    %26 = arith.addf %25, %24 : vector<8x2xf32>
    %27 = arith.divf %25, %26 : vector<8x2xf32>
    %28 = vector.extract_strided_slice %15 {offsets = [16, 0], sizes = [8, 2], strides = [1, 1]} : vector<32x2xf32> to vector<8x2xf32>
    %29 = math.tanh %28 : vector<8x2xf32>
    %30 = vector.extract_strided_slice %21 {offsets = [8, 0], sizes = [8, 2], strides = [1, 1]} : vector<16x2xf32> to vector<8x2xf32>
    %31 = arith.mulf %30, %7 : vector<8x2xf32>
    %32 = vector.extract_strided_slice %21 {offsets = [0, 0], sizes = [8, 2], strides = [1, 1]} : vector<16x2xf32> to vector<8x2xf32>
    %33 = arith.mulf %32, %29 : vector<8x2xf32>
    %34 = arith.addf %31, %33 : vector<8x2xf32>
    %35 = math.tanh %34 : vector<8x2xf32>
    %36 = arith.mulf %27, %35 : vector<8x2xf32>
    %37 = vector.extract_strided_slice %5 {offsets = [1, 0], sizes = [1, 2], strides = [1, 1]} : vector<8x2xf32> to vector<1x2xf32>
    %38 = vector.broadcast %1 : vector<32x1xf32> to vector<32x2xf32>
    %39 = vector.broadcast %37 : vector<1x2xf32> to vector<32x2xf32>
    %40 = arith.mulf %38, %39 : vector<32x2xf32>
    %41 = vector.broadcast %2 : vector<32x1xf32> to vector<32x2xf32>
    %42 = arith.addf %40, %41 : vector<32x2xf32>
    %cst_10 = arith.constant dense<0.000000e+00> : vector<32x2xf32>
    %43 = tpu.matmul %0, %36, %cst_10 {dimension_numbers = #tpu.dot_dimension_numbers<[1], [0], [0], [1], [0, 0, 1, 1], [], []>, precision = #tpu.contract_precision<fp32>} : vector<32x8xf32>, vector<8x2xf32>, vector<32x2xf32> -> vector<32x2xf32>
    %44 = arith.addf %42, %43 : vector<32x2xf32>
    %45 = vector.extract_strided_slice %44 {offsets = [0, 0], sizes = [16, 2], strides = [1, 1]} : vector<32x2xf32> to vector<16x2xf32>
    %46 = arith.negf %45 : vector<16x2xf32>
    %47 = math.exp %46 : vector<16x2xf32>
    %cst_11 = arith.constant 1.000000e+00 : f32
    %48 = vector.broadcast %cst_11 : f32 to vector<16x2xf32>
    %49 = arith.addf %48, %47 : vector<16x2xf32>
    %50 = arith.divf %48, %49 : vector<16x2xf32>
    %51 = vector.extract_strided_slice %44 {offsets = [24, 0], sizes = [8, 2], strides = [1, 1]} : vector<32x2xf32> to vector<8x2xf32>
    %52 = arith.negf %51 : vector<8x2xf32>
    %53 = math.exp %52 : vector<8x2xf32>
    %cst_12 = arith.constant 1.000000e+00 : f32
    %54 = vector.broadcast %cst_12 : f32 to vector<8x2xf32>
    %55 = arith.addf %54, %53 : vector<8x2xf32>
    %56 = arith.divf %54, %55 : vector<8x2xf32>
    %57 = vector.extract_strided_slice %44 {offsets = [16, 0], sizes = [8, 2], strides = [1, 1]} : vector<32x2xf32> to vector<8x2xf32>
    %58 = math.tanh %57 : vector<8x2xf32>
    %59 = vector.extract_strided_slice %50 {offsets = [8, 0], sizes = [8, 2], strides = [1, 1]} : vector<16x2xf32> to vector<8x2xf32>
    %60 = arith.mulf %59, %34 : vector<8x2xf32>
    %61 = vector.extract_strided_slice %50 {offsets = [0, 0], sizes = [8, 2], strides = [1, 1]} : vector<16x2xf32> to vector<8x2xf32>
    %62 = arith.mulf %61, %58 : vector<8x2xf32>
    %63 = arith.addf %60, %62 : vector<8x2xf32>
    %64 = math.tanh %63 : vector<8x2xf32>
    %65 = arith.mulf %56, %64 : vector<8x2xf32>
    %66 = vector.extract_strided_slice %5 {offsets = [2, 0], sizes = [1, 2], strides = [1, 1]} : vector<8x2xf32> to vector<1x2xf32>
    %67 = vector.broadcast %1 : vector<32x1xf32> to vector<32x2xf32>
    %68 = vector.broadcast %66 : vector<1x2xf32> to vector<32x2xf32>
    %69 = arith.mulf %67, %68 : vector<32x2xf32>
    %70 = vector.broadcast %2 : vector<32x1xf32> to vector<32x2xf32>
    %71 = arith.addf %69, %70 : vector<32x2xf32>
    %cst_13 = arith.constant dense<0.000000e+00> : vector<32x2xf32>
    %72 = tpu.matmul %0, %65, %cst_13 {dimension_numbers = #tpu.dot_dimension_numbers<[1], [0], [0], [1], [0, 0, 1, 1], [], []>, precision = #tpu.contract_precision<fp32>} : vector<32x8xf32>, vector<8x2xf32>, vector<32x2xf32> -> vector<32x2xf32>
    %73 = arith.addf %71, %72 : vector<32x2xf32>
    %74 = vector.extract_strided_slice %73 {offsets = [0, 0], sizes = [16, 2], strides = [1, 1]} : vector<32x2xf32> to vector<16x2xf32>
    %75 = arith.negf %74 : vector<16x2xf32>
    %76 = math.exp %75 : vector<16x2xf32>
    %cst_14 = arith.constant 1.000000e+00 : f32
    %77 = vector.broadcast %cst_14 : f32 to vector<16x2xf32>
    %78 = arith.addf %77, %76 : vector<16x2xf32>
    %79 = arith.divf %77, %78 : vector<16x2xf32>
    %80 = vector.extract_strided_slice %73 {offsets = [24, 0], sizes = [8, 2], strides = [1, 1]} : vector<32x2xf32> to vector<8x2xf32>
    %81 = arith.negf %80 : vector<8x2xf32>
    %82 = math.exp %81 : vector<8x2xf32>
    %cst_15 = arith.constant 1.000000e+00 : f32
    %83 = vector.broadcast %cst_15 : f32 to vector<8x2xf32>
    %84 = arith.addf %83, %82 : vector<8x2xf32>
    %85 = arith.divf %83, %84 : vector<8x2xf32>
    %86 = vector.extract_strided_slice %73 {offsets = [16, 0], sizes = [8, 2], strides = [1, 1]} : vector<32x2xf32> to vector<8x2xf32>
    %87 = math.tanh %86 : vector<8x2xf32>
    %88 = vector.extract_strided_slice %79 {offsets = [8, 0], sizes = [8, 2], strides = [1, 1]} : vector<16x2xf32> to vector<8x2xf32>
    %89 = arith.mulf %88, %63 : vector<8x2xf32>
    %90 = vector.extract_strided_slice %79 {offsets = [0, 0], sizes = [8, 2], strides = [1, 1]} : vector<16x2xf32> to vector<8x2xf32>
    %91 = arith.mulf %90, %87 : vector<8x2xf32>
    %92 = arith.addf %89, %91 : vector<8x2xf32>
    %93 = math.tanh %92 : vector<8x2xf32>
    %94 = arith.mulf %85, %93 : vector<8x2xf32>
    %95 = vector.extract_strided_slice %5 {offsets = [3, 0], sizes = [1, 2], strides = [1, 1]} : vector<8x2xf32> to vector<1x2xf32>
    %96 = vector.broadcast %1 : vector<32x1xf32> to vector<32x2xf32>
    %97 = vector.broadcast %95 : vector<1x2xf32> to vector<32x2xf32>
    %98 = arith.mulf %96, %97 : vector<32x2xf32>
    %99 = vector.broadcast %2 : vector<32x1xf32> to vector<32x2xf32>
    %100 = arith.addf %98, %99 : vector<32x2xf32>
    %cst_16 = arith.constant dense<0.000000e+00> : vector<32x2xf32>
    %101 = tpu.matmul %0, %94, %cst_16 {dimension_numbers = #tpu.dot_dimension_numbers<[1], [0], [0], [1], [0, 0, 1, 1], [], []>, precision = #tpu.contract_precision<fp32>} : vector<32x8xf32>, vector<8x2xf32>, vector<32x2xf32> -> vector<32x2xf32>
    %102 = arith.addf %100, %101 : vector<32x2xf32>
    %103 = vector.extract_strided_slice %102 {offsets = [0, 0], sizes = [16, 2], strides = [1, 1]} : vector<32x2xf32> to vector<16x2xf32>
    %104 = arith.negf %103 : vector<16x2xf32>
    %105 = math.exp %104 : vector<16x2xf32>
    %cst_17 = arith.constant 1.000000e+00 : f32
    %106 = vector.broadcast %cst_17 : f32 to vector<16x2xf32>
    %107 = arith.addf %106, %105 : vector<16x2xf32>
    %108 = arith.divf %106, %107 : vector<16x2xf32>
    %109 = vector.extract_strided_slice %102 {offsets = [24, 0], sizes = [8, 2], strides = [1, 1]} : vector<32x2xf32> to vector<8x2xf32>
    %110 = arith.negf %109 : vector<8x2xf32>
    %111 = math.exp %110 : vector<8x2xf32>
    %cst_18 = arith.constant 1.000000e+00 : f32
    %112 = vector.broadcast %cst_18 : f32 to vector<8x2xf32>
    %113 = arith.addf %112, %111 : vector<8x2xf32>
    %114 = arith.divf %112, %113 : vector<8x2xf32>
    %115 = vector.extract_strided_slice %102 {offsets = [16, 0], sizes = [8, 2], strides = [1, 1]} : vector<32x2xf32> to vector<8x2xf32>
    %116 = math.tanh %115 : vector<8x2xf32>
    %117 = vector.extract_strided_slice %108 {offsets = [8, 0], sizes = [8, 2], strides = [1, 1]} : vector<16x2xf32> to vector<8x2xf32>
    %118 = arith.mulf %117, %92 : vector<8x2xf32>
    %119 = vector.extract_strided_slice %108 {offsets = [0, 0], sizes = [8, 2], strides = [1, 1]} : vector<16x2xf32> to vector<8x2xf32>
    %120 = arith.mulf %119, %116 : vector<8x2xf32>
    %121 = arith.addf %118, %120 : vector<8x2xf32>
    %122 = math.tanh %121 : vector<8x2xf32>
    %123 = arith.mulf %114, %122 : vector<8x2xf32>
    %124 = vector.extract_strided_slice %5 {offsets = [4, 0], sizes = [1, 2], strides = [1, 1]} : vector<8x2xf32> to vector<1x2xf32>
    %125 = vector.broadcast %1 : vector<32x1xf32> to vector<32x2xf32>
    %126 = vector.broadcast %124 : vector<1x2xf32> to vector<32x2xf32>
    %127 = arith.mulf %125, %126 : vector<32x2xf32>
    %128 = vector.broadcast %2 : vector<32x1xf32> to vector<32x2xf32>
    %129 = arith.addf %127, %128 : vector<32x2xf32>
    %cst_19 = arith.constant dense<0.000000e+00> : vector<32x2xf32>
    %130 = tpu.matmul %0, %123, %cst_19 {dimension_numbers = #tpu.dot_dimension_numbers<[1], [0], [0], [1], [0, 0, 1, 1], [], []>, precision = #tpu.contract_precision<fp32>} : vector<32x8xf32>, vector<8x2xf32>, vector<32x2xf32> -> vector<32x2xf32>
    %131 = arith.addf %129, %130 : vector<32x2xf32>
    %132 = vector.extract_strided_slice %131 {offsets = [0, 0], sizes = [16, 2], strides = [1, 1]} : vector<32x2xf32> to vector<16x2xf32>
    %133 = arith.negf %132 : vector<16x2xf32>
    %134 = math.exp %133 : vector<16x2xf32>
    %cst_20 = arith.constant 1.000000e+00 : f32
    %135 = vector.broadcast %cst_20 : f32 to vector<16x2xf32>
    %136 = arith.addf %135, %134 : vector<16x2xf32>
    %137 = arith.divf %135, %136 : vector<16x2xf32>
    %138 = vector.extract_strided_slice %131 {offsets = [24, 0], sizes = [8, 2], strides = [1, 1]} : vector<32x2xf32> to vector<8x2xf32>
    %139 = arith.negf %138 : vector<8x2xf32>
    %140 = math.exp %139 : vector<8x2xf32>
    %cst_21 = arith.constant 1.000000e+00 : f32
    %141 = vector.broadcast %cst_21 : f32 to vector<8x2xf32>
    %142 = arith.addf %141, %140 : vector<8x2xf32>
    %143 = arith.divf %141, %142 : vector<8x2xf32>
    %144 = vector.extract_strided_slice %131 {offsets = [16, 0], sizes = [8, 2], strides = [1, 1]} : vector<32x2xf32> to vector<8x2xf32>
    %145 = math.tanh %144 : vector<8x2xf32>
    %146 = vector.extract_strided_slice %137 {offsets = [8, 0], sizes = [8, 2], strides = [1, 1]} : vector<16x2xf32> to vector<8x2xf32>
    %147 = arith.mulf %146, %121 : vector<8x2xf32>
    %148 = vector.extract_strided_slice %137 {offsets = [0, 0], sizes = [8, 2], strides = [1, 1]} : vector<16x2xf32> to vector<8x2xf32>
    %149 = arith.mulf %148, %145 : vector<8x2xf32>
    %150 = arith.addf %147, %149 : vector<8x2xf32>
    %151 = math.tanh %150 : vector<8x2xf32>
    %152 = arith.mulf %143, %151 : vector<8x2xf32>
    %153 = vector.extract_strided_slice %5 {offsets = [5, 0], sizes = [1, 2], strides = [1, 1]} : vector<8x2xf32> to vector<1x2xf32>
    %154 = vector.broadcast %1 : vector<32x1xf32> to vector<32x2xf32>
    %155 = vector.broadcast %153 : vector<1x2xf32> to vector<32x2xf32>
    %156 = arith.mulf %154, %155 : vector<32x2xf32>
    %157 = vector.broadcast %2 : vector<32x1xf32> to vector<32x2xf32>
    %158 = arith.addf %156, %157 : vector<32x2xf32>
    %cst_22 = arith.constant dense<0.000000e+00> : vector<32x2xf32>
    %159 = tpu.matmul %0, %152, %cst_22 {dimension_numbers = #tpu.dot_dimension_numbers<[1], [0], [0], [1], [0, 0, 1, 1], [], []>, precision = #tpu.contract_precision<fp32>} : vector<32x8xf32>, vector<8x2xf32>, vector<32x2xf32> -> vector<32x2xf32>
    %160 = arith.addf %158, %159 : vector<32x2xf32>
    %161 = vector.extract_strided_slice %160 {offsets = [0, 0], sizes = [16, 2], strides = [1, 1]} : vector<32x2xf32> to vector<16x2xf32>
    %162 = arith.negf %161 : vector<16x2xf32>
    %163 = math.exp %162 : vector<16x2xf32>
    %cst_23 = arith.constant 1.000000e+00 : f32
    %164 = vector.broadcast %cst_23 : f32 to vector<16x2xf32>
    %165 = arith.addf %164, %163 : vector<16x2xf32>
    %166 = arith.divf %164, %165 : vector<16x2xf32>
    %167 = vector.extract_strided_slice %160 {offsets = [24, 0], sizes = [8, 2], strides = [1, 1]} : vector<32x2xf32> to vector<8x2xf32>
    %168 = arith.negf %167 : vector<8x2xf32>
    %169 = math.exp %168 : vector<8x2xf32>
    %cst_24 = arith.constant 1.000000e+00 : f32
    %170 = vector.broadcast %cst_24 : f32 to vector<8x2xf32>
    %171 = arith.addf %170, %169 : vector<8x2xf32>
    %172 = arith.divf %170, %171 : vector<8x2xf32>
    %173 = vector.extract_strided_slice %160 {offsets = [16, 0], sizes = [8, 2], strides = [1, 1]} : vector<32x2xf32> to vector<8x2xf32>
    %174 = math.tanh %173 : vector<8x2xf32>
    %175 = vector.extract_strided_slice %166 {offsets = [8, 0], sizes = [8, 2], strides = [1, 1]} : vector<16x2xf32> to vector<8x2xf32>
    %176 = arith.mulf %175, %150 : vector<8x2xf32>
    %177 = vector.extract_strided_slice %166 {offsets = [0, 0], sizes = [8, 2], strides = [1, 1]} : vector<16x2xf32> to vector<8x2xf32>
    %178 = arith.mulf %177, %174 : vector<8x2xf32>
    %179 = arith.addf %176, %178 : vector<8x2xf32>
    %180 = math.tanh %179 : vector<8x2xf32>
    %181 = arith.mulf %172, %180 : vector<8x2xf32>
    %182 = vector.extract_strided_slice %5 {offsets = [6, 0], sizes = [1, 2], strides = [1, 1]} : vector<8x2xf32> to vector<1x2xf32>
    %183 = vector.broadcast %1 : vector<32x1xf32> to vector<32x2xf32>
    %184 = vector.broadcast %182 : vector<1x2xf32> to vector<32x2xf32>
    %185 = arith.mulf %183, %184 : vector<32x2xf32>
    %186 = vector.broadcast %2 : vector<32x1xf32> to vector<32x2xf32>
    %187 = arith.addf %185, %186 : vector<32x2xf32>
    %cst_25 = arith.constant dense<0.000000e+00> : vector<32x2xf32>
    %188 = tpu.matmul %0, %181, %cst_25 {dimension_numbers = #tpu.dot_dimension_numbers<[1], [0], [0], [1], [0, 0, 1, 1], [], []>, precision = #tpu.contract_precision<fp32>} : vector<32x8xf32>, vector<8x2xf32>, vector<32x2xf32> -> vector<32x2xf32>
    %189 = arith.addf %187, %188 : vector<32x2xf32>
    %190 = vector.extract_strided_slice %189 {offsets = [0, 0], sizes = [16, 2], strides = [1, 1]} : vector<32x2xf32> to vector<16x2xf32>
    %191 = arith.negf %190 : vector<16x2xf32>
    %192 = math.exp %191 : vector<16x2xf32>
    %cst_26 = arith.constant 1.000000e+00 : f32
    %193 = vector.broadcast %cst_26 : f32 to vector<16x2xf32>
    %194 = arith.addf %193, %192 : vector<16x2xf32>
    %195 = arith.divf %193, %194 : vector<16x2xf32>
    %196 = vector.extract_strided_slice %189 {offsets = [24, 0], sizes = [8, 2], strides = [1, 1]} : vector<32x2xf32> to vector<8x2xf32>
    %197 = arith.negf %196 : vector<8x2xf32>
    %198 = math.exp %197 : vector<8x2xf32>
    %cst_27 = arith.constant 1.000000e+00 : f32
    %199 = vector.broadcast %cst_27 : f32 to vector<8x2xf32>
    %200 = arith.addf %199, %198 : vector<8x2xf32>
    %201 = arith.divf %199, %200 : vector<8x2xf32>
    %202 = vector.extract_strided_slice %189 {offsets = [16, 0], sizes = [8, 2], strides = [1, 1]} : vector<32x2xf32> to vector<8x2xf32>
    %203 = math.tanh %202 : vector<8x2xf32>
    %204 = vector.extract_strided_slice %195 {offsets = [8, 0], sizes = [8, 2], strides = [1, 1]} : vector<16x2xf32> to vector<8x2xf32>
    %205 = arith.mulf %204, %179 : vector<8x2xf32>
    %206 = vector.extract_strided_slice %195 {offsets = [0, 0], sizes = [8, 2], strides = [1, 1]} : vector<16x2xf32> to vector<8x2xf32>
    %207 = arith.mulf %206, %203 : vector<8x2xf32>
    %208 = arith.addf %205, %207 : vector<8x2xf32>
    %209 = math.tanh %208 : vector<8x2xf32>
    %210 = arith.mulf %201, %209 : vector<8x2xf32>
    %211 = vector.extract_strided_slice %5 {offsets = [7, 0], sizes = [1, 2], strides = [1, 1]} : vector<8x2xf32> to vector<1x2xf32>
    %212 = vector.broadcast %1 : vector<32x1xf32> to vector<32x2xf32>
    %213 = vector.broadcast %211 : vector<1x2xf32> to vector<32x2xf32>
    %214 = arith.mulf %212, %213 : vector<32x2xf32>
    %215 = vector.broadcast %2 : vector<32x1xf32> to vector<32x2xf32>
    %216 = arith.addf %214, %215 : vector<32x2xf32>
    %cst_28 = arith.constant dense<0.000000e+00> : vector<32x2xf32>
    %217 = tpu.matmul %0, %210, %cst_28 {dimension_numbers = #tpu.dot_dimension_numbers<[1], [0], [0], [1], [0, 0, 1, 1], [], []>, precision = #tpu.contract_precision<fp32>} : vector<32x8xf32>, vector<8x2xf32>, vector<32x2xf32> -> vector<32x2xf32>
    %218 = arith.addf %216, %217 : vector<32x2xf32>
    %219 = vector.extract_strided_slice %218 {offsets = [0, 0], sizes = [16, 2], strides = [1, 1]} : vector<32x2xf32> to vector<16x2xf32>
    %220 = arith.negf %219 : vector<16x2xf32>
    %221 = math.exp %220 : vector<16x2xf32>
    %cst_29 = arith.constant 1.000000e+00 : f32
    %222 = vector.broadcast %cst_29 : f32 to vector<16x2xf32>
    %223 = arith.addf %222, %221 : vector<16x2xf32>
    %224 = arith.divf %222, %223 : vector<16x2xf32>
    %225 = vector.extract_strided_slice %218 {offsets = [24, 0], sizes = [8, 2], strides = [1, 1]} : vector<32x2xf32> to vector<8x2xf32>
    %226 = arith.negf %225 : vector<8x2xf32>
    %227 = math.exp %226 : vector<8x2xf32>
    %cst_30 = arith.constant 1.000000e+00 : f32
    %228 = vector.broadcast %cst_30 : f32 to vector<8x2xf32>
    %229 = arith.addf %228, %227 : vector<8x2xf32>
    %230 = arith.divf %228, %229 : vector<8x2xf32>
    %231 = vector.extract_strided_slice %218 {offsets = [16, 0], sizes = [8, 2], strides = [1, 1]} : vector<32x2xf32> to vector<8x2xf32>
    %232 = math.tanh %231 : vector<8x2xf32>
    %233 = vector.extract_strided_slice %224 {offsets = [8, 0], sizes = [8, 2], strides = [1, 1]} : vector<16x2xf32> to vector<8x2xf32>
    %234 = arith.mulf %233, %208 : vector<8x2xf32>
    %235 = vector.extract_strided_slice %224 {offsets = [0, 0], sizes = [8, 2], strides = [1, 1]} : vector<16x2xf32> to vector<8x2xf32>
    %236 = arith.mulf %235, %232 : vector<8x2xf32>
    %237 = arith.addf %234, %236 : vector<8x2xf32>
    %238 = math.tanh %237 : vector<8x2xf32>
    %239 = arith.mulf %230, %238 : vector<8x2xf32>
    %240 = vector.broadcast %3 : vector<8x1xf32> to vector<8x2xf32>
    %241 = arith.mulf %240, %239 : vector<8x2xf32>
    %cst_31 = arith.constant dense<0.000000e+00> : vector<2xf32>
    %242 = vector.multi_reduction <add>, %241, %cst_31 [0] : vector<8x2xf32> to vector<2xf32>
    %243 = vector.shape_cast %242 : vector<2xf32> to vector<1x2xf32>
    %244 = vector.broadcast %4 : vector<1x1xf32> to vector<1x2xf32>
    %245 = arith.addf %243, %244 : vector<1x2xf32>
    %246 = arith.negf %245 : vector<1x2xf32>
    %247 = math.exp %246 : vector<1x2xf32>
    %cst_32 = arith.constant 1.000000e+00 : f32
    %248 = vector.broadcast %cst_32 : f32 to vector<1x2xf32>
    %249 = arith.addf %248, %247 : vector<1x2xf32>
    %250 = arith.divf %248, %249 : vector<1x2xf32>
    %c0_33 = arith.constant 0 : index
    %c0_34 = arith.constant 0 : index
    %251 = vector.load %arg1[%c0_33, %c0_34] : memref<1x2xf32, #tpu.memory_space<vmem>>, vector<1x2xf32>
    tpu.vector_store %arg1[%c0_33, %c0_34], %250 {strides = array<i32>} : memref<1x2xf32, #tpu.memory_space<vmem>>, vector<1x2xf32>,
    return
  }
}

</mosaic_0001>

<llo_original>
// kernel: tpu_custom_call.1
$region0: #{tpu_custom_call.1}
  #allocation0 [shape = 'u32[]', space=smem, size = 0x4, offset = 0x4, fixed_abs, tag = 'smem constant byte address 0x4 - core index']
  #allocation1 [shape = 'u32[144,128]{1,0:T(1,128)}', space=vmem, size = 0x12000, scoped, tag = 'internal scratch']
  %s0 = inlined_call_operand.vmem [shape: f32[32,16], index: 0, kind: input, shape index: {}]
  %s1 = inlined_call_operand.hbm [shape: f32[1,2], index: 1, kind: output, shape index: {}]
  %s2 = sld [smem:[#allocation0]]
  $region14: #{tpu_custom_call.1} parent=0
    _
  %s4 = ssub.s32 1, %s2
  %s5 = scalar_select 0, %s4, %s2
  $region1: #{tpu_custom_call.1} parent=0
    #allocation2 [shape = 'u8[512]{0}', space=vmem, size = 0x400, scoped, tag = 'output window, operand 0, single buffered']
    #allocation3 [shape = 's32[1]{0}', space=sflag, size = 0x4, scoped, tag = 'scoped memory for tpu_custom_call.1']
    %6 = vsyncpa [#allocation3], 0
    // Predicated region
    $region2: #{tpu_custom_call.1} parent=1 // pred_check
      _
    $region3: #{tpu_custom_call.1} parent=1 // pred_check_branch
      %8 = sbr.rel (0) target = $region5
    $region4: #{tpu_custom_call.1} parent=1 // pred_region
      _
    $region5: #{tpu_custom_call.1} parent=1 // pred_fallthru
      _
    %v9 = vld [vmem:[%s0] sm:$0xff]
    %v10 = vld [vmem:[%s0 + $0x8] sm:$0xff]
    %v11 = vld [vmem:[%s0 + $0x10] sm:$0xff]
    %v12 = vld [vmem:[%s0 + $0x18] sm:$0xff]
    %v13 = vld [vmem:[%s0] sm:$0x1]
    %15 = vset.pattern.permute.xlu0 8
    %16 = vperm.xlu0 %15, %v9
    %v17 = vpop.permute.xlu0 %16
    %20 = vset.pattern.permute.xlu0 8
    %21 = vperm.xlu0 %20, %v10
    %v22 = vpop.permute.xlu0 %21
    %25 = vset.pattern.permute.xlu0 8
    %26 = vperm.xlu0 %25, %v11
    %v27 = vpop.permute.xlu0 %26
    %30 = vset.pattern.permute.xlu0 8
    %31 = vperm.xlu0 %30, %v12
    %v32 = vpop.permute.xlu0 %31
    %v34 = vlaneseq
    %v35 = vshrl.u32 %v34, 7
    %v36 = vsub.s32 0, %v35
    %v37 = vrot.slane %v9, %v36
    %v38 = vmul.f32 %v17, %v37
    %v39 = vmul.f32 %v22, %v37
    %v40 = vmul.f32 %v27, %v37
    %v41 = vmul.f32 %v32, %v37
    %42 = vset.pattern.permute.xlu0 9
    %43 = vperm.xlu0 %42, %v9
    %v44 = vpop.permute.xlu0 %43
    %46 = vset.pattern.permute.xlu0 9
    %47 = vperm.xlu0 %46, %v10
    %v48 = vpop.permute.xlu0 %47
    %50 = vset.pattern.permute.xlu0 9
    %51 = vperm.xlu0 %50, %v11
    %v52 = vpop.permute.xlu0 %51
    %54 = vset.pattern.permute.xlu0 9
    %55 = vperm.xlu0 %54, %v12
    %v56 = vpop.permute.xlu0 %55
    %v58 = vadd.f32 %v38, %v44
    %v59 = vadd.f32 %v39, %v48
    %v60 = vadd.f32 %v40, %v52
    %v61 = vadd.f32 %v41, %v56
    %vm62 = vcmask 64512
    %v63 = vsel %vm62, %v9, 0
    %v65 = vsel %vm62, %v10, 0
    %v67 = vsel %vm62, %v11, 0
    %v69 = vsel %vm62, %v12, 0
    %71 = vmatprep.subr.mxu0 0.0
    %72 = vmatpush1.msra.mxu0 0.0
    %73 = vmatprep.subr.mxu0 0.0
    %74 = vmatpush1.msra.mxu0 0.0
    %75 = vmatprep.subr.mxu0 0.0
    %76 = vmatpush1.msra.mxu0 0.0
    %77 = vmatprep.subr.mxu0 0.0
    %78 = vmatpush1.msra.mxu0 0.0
    %79 = vmatprep.subr.mxu0 0.0
    %80 = vmatpush1.msra.mxu0 0.0
    %81 = vmatprep.subr.mxu0 0.0
    %82 = vmatpush1.msra.mxu0 0.0
    %83 = vmatprep.subr.mxu0 0.0
    %84 = vmatpush1.msra.mxu0 0.0
    %85 = vmatprep.subr.mxu0 0.0
    %86 = vmatpush1.msra.mxu0 0.0
    %87 = vmatprep.subr.mxu0 0.0
    %88 = vmatpush1.msra.mxu0 0.0
    %89 = vmatprep.subr.mxu0 0.0
    %90 = vmatpush1.msra.mxu0 0.0
    %91 = vmatprep.subr.mxu0 0.0
    %92 = vmatpush1.msra.mxu0 0.0
    %93 = vmatprep.subr.mxu0 0.0
    %94 = vmatpush1.msra.mxu0 0.0
    %95 = vmatprep.subr.mxu0 0.0
    %96 = vmatpush1.msra.mxu0 0.0
    %97 = vmatprep.subr.mxu0 0.0
    %98 = vmatpush1.msra.mxu0 0.0
    %99 = vmatprep.subr.mxu0 0.0
    %100 = vmatpush1.msra.mxu0 0.0
    %101 = vmatprep.subr.mxu0 0.0
    %102 = vmatpush1.msra.mxu0 0.0
    %103 = vmatprep.subr.mxu0 0.0
    %104 = vmatpush2.msra.mxu0 0.0
    %105 = vmatprep.subr.mxu0 0.0
    %106 = vmatpush2.msra.mxu0 0.0
    %107 = vmatprep.subr.mxu0 0.0
    %108 = vmatpush2.msra.mxu0 0.0
    %109 = vmatprep.subr.mxu0 0.0
    %110 = vmatpush2.msra.mxu0 0.0
    %111 = vmatprep.subr.mxu0 0.0
    %112 = vmatpush2.msra.mxu0 0.0
    %113 = vmatprep.subr.mxu0 0.0
    %114 = vmatpush2.msra.mxu0 0.0
    %115 = vmatprep.subr.mxu0 0.0
    %116 = vmatpush2.msra.mxu0 0.0
    %117 = vmatprep.subr.mxu0 0.0
    %118 = vmatpush2.msra.mxu0 0.0
    %119 = vmatprep.subr.mxu0 0.0
    %120 = vmatpush2.msra.mxu0 0.0
    %121 = vmatprep.subr.mxu0 0.0
    %122 = vmatpush2.msra.mxu0 0.0
    %123 = vmatprep.subr.mxu0 0.0
    %124 = vmatpush2.msra.mxu0 0.0
    %125 = vmatprep.subr.mxu0 0.0
    %126 = vmatpush2.msra.mxu0 0.0
    %127 = vmatprep.subr.mxu0 0.0
    %128 = vmatpush2.msra.mxu0 0.0
    %129 = vmatprep.subr.mxu0 0.0
    %130 = vmatpush2.msra.mxu0 0.0
    %131 = vmatprep.subr.mxu0 0.0
    %132 = vmatpush2.msra.mxu0 0.0
    %133 = vmatprep.subr.mxu0 0.0
    %134 = vmatpush2.msra.mxu0 0.0
    %135 = vmatprep.mubr.f32.mxu0 0.0
    %v136 = vand.u32 %v63, 4294901760
    %v137 = vsub.f32 %v63, %v136
    %v138 = vand.u32 %v137, 4294901760
    %v139 = vsub.f32 %v137, %v138
    %v140 = vand.u32 %v139, 4294901760
    %141 = vmatmul.mubr.f32.gmra.mxu0 %v140
    %v142 = vpop.f32.mrf.mxu0
    %v143 = vadd.f32 0.0, %v142
    %v144 = vpop.f32.mrf.mxu0
    %145 = vmatprep.mubr.f32.mxu0 0.0
    %v146 = vand.u32 %v65, 4294901760
    %v147 = vsub.f32 %v65, %v146
    %v148 = vand.u32 %v147, 4294901760
    %v149 = vsub.f32 %v147, %v148
    %v150 = vand.u32 %v149, 4294901760
    %151 = vmatmul.mubr.f32.gmra.mxu0 %v150
    %v152 = vpop.f32.mrf.mxu0
    %v153 = vadd.f32 0.0, %v152
    %v154 = vpop.f32.mrf.mxu0
    %155 = vmatprep.mubr.f32.mxu0 0.0
    %v156 = vand.u32 %v67, 4294901760
    %v157 = vsub.f32 %v67, %v156
    %v158 = vand.u32 %v157, 4294901760
    %v159 = vsub.f32 %v157, %v158
    %v160 = vand.u32 %v159, 4294901760
    %161 = vmatmul.mubr.f32.gmra.mxu0 %v160
    %v162 = vpop.f32.mrf.mxu0
    %v163 = vadd.f32 0.0, %v162
    %v164 = vpop.f32.mrf.mxu0
    %165 = vmatprep.mubr.f32.mxu0 0.0
    %v166 = vand.u32 %v69, 4294901760
    %v167 = vsub.f32 %v69, %v166
    %v168 = vand.u32 %v167, 4294901760
    %v169 = vsub.f32 %v167, %v168
    %v170 = vand.u32 %v169, 4294901760
    %171 = vmatmul.mubr.f32.gmra.mxu0 %v170
    %v172 = vpop.f32.mrf.mxu0
    %v173 = vadd.f32 0.0, %v172
    %v174 = vpop.f32.mrf.mxu0
    %175 = vdwg.mxu0
    %176 = vmatprep.subr.mxu0 0.0
    %177 = vmatpush1.msra.mxu0 0.0
    %178 = vmatprep.subr.mxu0 0.0
    %179 = vmatpush1.msra.mxu0 0.0
    %180 = vmatprep.subr.mxu0 0.0
    %181 = vmatpush1.msra.mxu0 0.0
    %182 = vmatprep.subr.mxu0 0.0
    %183 = vmatpush1.msra.mxu0 0.0
    %184 = vmatprep.subr.mxu0 0.0
    %185 = vmatpush1.msra.mxu0 0.0
    %186 = vmatprep.subr.mxu0 0.0
    %187 = vmatpush1.msra.mxu0 0.0
    %188 = vmatprep.subr.mxu0 0.0
    %189 = vmatpush1.msra.mxu0 0.0
    %190 = vmatprep.subr.mxu0 0.0
    %191 = vmatpush1.msra.mxu0 0.0
    %192 = vmatprep.subr.mxu0 0.0
    %193 = vmatpush1.msra.mxu0 0.0
    %194 = vmatprep.subr.mxu0 0.0
    %195 = vmatpush1.msra.mxu0 0.0
    %196 = vmatprep.subr.mxu0 0.0
    %197 = vmatpush1.msra.mxu0 0.0
    %198 = vmatprep.subr.mxu0 0.0
    %199 = vmatpush1.msra.mxu0 0.0
    %200 = vmatprep.subr.mxu0 0.0
    %201 = vmatpush1.msra.mxu0 0.0
    %202 = vmatprep.subr.mxu0 0.0
    %203 = vmatpush1.msra.mxu0 0.0
    %204 = vmatprep.subr.mxu0 0.0
    %205 = vmatpush1.msra.mxu0 0.0
    %206 = vmatprep.subr.mxu0 0.0
    %207 = vmatpush1.msra.mxu0 0.0
    %208 = vmatprep.subr.mxu0 0.0
    %209 = vmatpush2.msra.mxu0 0.0
    %210 = vmatprep.subr.mxu0 0.0
    %211 = vmatpush2.msra.mxu0 0.0
    %212 = vmatprep.subr.mxu0 0.0
    %213 = vmatpush2.msra.mxu0 0.0
    %214 = vmatprep.subr.mxu0 0.0
    %215 = vmatpush2.msra.mxu0 0.0
    %216 = vmatprep.subr.mxu0 0.0
    %217 = vmatpush2.msra.mxu0 0.0
    %218 = vmatprep.subr.mxu0 0.0
    %219 = vmatpush2.msra.mxu0 0.0
    %220 = vmatprep.subr.mxu0 0.0
    %221 = vmatpush2.msra.mxu0 0.0
    %222 = vmatprep.subr.mxu0 0.0
    %223 = vmatpush2.msra.mxu0 0.0
    %224 = vmatprep.subr.mxu0 0.0
    %225 = vmatpush2.msra.mxu0 0.0
    %226 = vmatprep.subr.mxu0 0.0
    %227 = vmatpush2.msra.mxu0 0.0
    %228 = vmatprep.subr.mxu0 0.0
    %229 = vmatpush2.msra.mxu0 0.0
    %230 = vmatprep.subr.mxu0 0.0
    %231 = vmatpush2.msra.mxu0 0.0
    %232 = vmatprep.subr.mxu0 0.0
    %233 = vmatpush2.msra.mxu0 0.0
    %234 = vmatprep.subr.mxu0 0.0
    %235 = vmatpush2.msra.mxu0 0.0
    %236 = vmatprep.subr.mxu0 0.0
    %237 = vmatpush2.msra.mxu0 0.0
    %238 = vmatprep.subr.mxu0 0.0
    %239 = vmatpush2.msra.mxu0 0.0
    %240 = vmatprep.mubr.f32.mxu0 0.0
    %v241 = vand.u32 %v63, 4294901760
    %242 = vmatmul.mubr.f32.gmra.mxu0 %v241
    %v243 = vpop.f32.mrf.mxu0
    %v244 = vadd.f32 %v143, %v243
    %v245 = vpop.f32.mrf.mxu0
    %246 = vmatprep.mubr.f32.mxu0 0.0
    %v247 = vand.u32 %v65, 4294901760
    %248 = vmatmul.mubr.f32.gmra.mxu0 %v247
    %v249 = vpop.f32.mrf.mxu0
    %v250 = vadd.f32 %v153, %v249
    %v251 = vpop.f32.mrf.mxu0
    %252 = vmatprep.mubr.f32.mxu0 0.0
    %v253 = vand.u32 %v67, 4294901760
    %254 = vmatmul.mubr.f32.gmra.mxu0 %v253
    %v255 = vpop.f32.mrf.mxu0
    %v256 = vadd.f32 %v163, %v255
    %v257 = vpop.f32.mrf.mxu0
    %258 = vmatprep.mubr.f32.mxu0 0.0
    %v259 = vand.u32 %v69, 4294901760
    %260 = vmatmul.mubr.f32.gmra.mxu0 %v259
    %v261 = vpop.f32.mrf.mxu0
    %v262 = vadd.f32 %v173, %v261
    %v263 = vpop.f32.mrf.mxu0
    %264 = vdwg.mxu0
    %265 = vmatprep.subr.mxu0 0.0
    %266 = vmatpush1.msra.mxu0 0.0
    %267 = vmatprep.subr.mxu0 0.0
    %268 = vmatpush1.msra.mxu0 0.0
    %269 = vmatprep.subr.mxu0 0.0
    %270 = vmatpush1.msra.mxu0 0.0
    %271 = vmatprep.subr.mxu0 0.0
    %272 = vmatpush1.msra.mxu0 0.0
    %273 = vmatprep.subr.mxu0 0.0
    %274 = vmatpush1.msra.mxu0 0.0
    %275 = vmatprep.subr.mxu0 0.0
    %276 = vmatpush1.msra.mxu0 0.0
    %277 = vmatprep.subr.mxu0 0.0
    %278 = vmatpush1.msra.mxu0 0.0
    %279 = vmatprep.subr.mxu0 0.0
    %280 = vmatpush1.msra.mxu0 0.0
    %281 = vmatprep.subr.mxu0 0.0
    %282 = vmatpush1.msra.mxu0 0.0
    %283 = vmatprep.subr.mxu0 0.0
    %284 = vmatpush1.msra.mxu0 0.0
    %285 = vmatprep.subr.mxu0 0.0
    %286 = vmatpush1.msra.mxu0 0.0
    %287 = vmatprep.subr.mxu0 0.0
    %288 = vmatpush1.msra.mxu0 0.0
    %289 = vmatprep.subr.mxu0 0.0
    %290 = vmatpush1.msra.mxu0 0.0
    %291 = vmatprep.subr.mxu0 0.0
    %292 = vmatpush1.msra.mxu0 0.0
    %293 = vmatprep.subr.mxu0 0.0
    %294 = vmatpush1.msra.mxu0 0.0
    %295 = vmatprep.subr.mxu0 0.0
    %296 = vmatpush1.msra.mxu0 0.0
    %297 = vmatprep.subr.mxu0 0.0
    %298 = vmatpush2.msra.mxu0 0.0
    %299 = vmatprep.subr.mxu0 0.0
    %300 = vmatpush2.msra.mxu0 0.0
    %301 = vmatprep.subr.mxu0 0.0
    %302 = vmatpush2.msra.mxu0 0.0
    %303 = vmatprep.subr.mxu0 0.0
    %304 = vmatpush2.msra.mxu0 0.0
    %305 = vmatprep.subr.mxu0 0.0
    %306 = vmatpush2.msra.mxu0 0.0
    %307 = vmatprep.subr.mxu0 0.0
    %308 = vmatpush2.msra.mxu0 0.0
    %309 = vmatprep.subr.mxu0 0.0
    %310 = vmatpush2.msra.mxu0 0.0
    %311 = vmatprep.subr.mxu0 0.0
    %312 = vmatpush2.msra.mxu0 0.0
    %313 = vmatprep.subr.mxu0 0.0
    %314 = vmatpush2.msra.mxu0 0.0
    %315 = vmatprep.subr.mxu0 0.0
    %316 = vmatpush2.msra.mxu0 0.0
    %317 = vmatprep.subr.mxu0 0.0
    %318 = vmatpush2.msra.mxu0 0.0
    %319 = vmatprep.subr.mxu0 0.0
    %320 = vmatpush2.msra.mxu0 0.0
    %321 = vmatprep.subr.mxu0 0.0
    %322 = vmatpush2.msra.mxu0 0.0
    %323 = vmatprep.subr.mxu0 0.0
    %324 = vmatpush2.msra.mxu0 0.0
    %325 = vmatprep.subr.mxu0 0.0
    %326 = vmatpush2.msra.mxu0 0.0
    %327 = vmatprep.subr.mxu0 0.0
    %328 = vmatpush2.msra.mxu0 0.0
    %329 = vmatprep.mubr.f32.mxu0 0.0
    %v330 = vand.u32 %v63, 4294901760
    %v331 = vsub.f32 %v63, %v330
    %332 = vmatmul.mubr.f32.gmra.mxu0 %v331
    %v333 = vpop.f32.mrf.mxu0
    %v334 = vadd.f32 %v244, %v333
    %v335 = vpop.f32.mrf.mxu0
    %336 = vmatprep.mubr.f32.mxu0 0.0
    %v337 = vand.u32 %v65, 4294901760
    %v338 = vsub.f32 %v65, %v337
    %339 = vmatmul.mubr.f32.gmra.mxu0 %v338
    %v340 = vpop.f32.mrf.mxu0
    %v341 = vadd.f32 %v250, %v340
    %v342 = vpop.f32.mrf.mxu0
    %343 = vmatprep.mubr.f32.mxu0 0.0
    %v344 = vand.u32 %v67, 4294901760
    %v345 = vsub.f32 %v67, %v344
    %346 = vmatmul.mubr.f32.gmra.mxu0 %v345
    %v347 = vpop.f32.mrf.mxu0
    %v348 = vadd.f32 %v256, %v347
    %v349 = vpop.f32.mrf.mxu0
    %350 = vmatprep.mubr.f32.mxu0 0.0
    %v351 = vand.u32 %v69, 4294901760
    %v352 = vsub.f32 %v69, %v351
    %353 = vmatmul.mubr.f32.gmra.mxu0 %v352
    %v354 = vpop.f32.mrf.mxu0
    %v355 = vadd.f32 %v262, %v354
    %v356 = vpop.f32.mrf.mxu0
    %357 = vdwg.mxu0
    %358 = vmatprep.subr.mxu0 0.0
    %359 = vmatpush1.msra.mxu0 0.0
    %360 = vmatprep.subr.mxu0 0.0
    %361 = vmatpush1.msra.mxu0 0.0
    %362 = vmatprep.subr.mxu0 0.0
    %363 = vmatpush1.msra.mxu0 0.0
    %364 = vmatprep.subr.mxu0 0.0
    %365 = vmatpush1.msra.mxu0 0.0
    %366 = vmatprep.subr.mxu0 0.0
    %367 = vmatpush1.msra.mxu0 0.0
    %368 = vmatprep.subr.mxu0 0.0
    %369 = vmatpush1.msra.mxu0 0.0
    %370 = vmatprep.subr.mxu0 0.0
    %371 = vmatpush1.msra.mxu0 0.0
    %372 = vmatprep.subr.mxu0 0.0
    %373 = vmatpush1.msra.mxu0 0.0
    %374 = vmatprep.subr.mxu0 0.0
    %375 = vmatpush1.msra.mxu0 0.0
    %376 = vmatprep.subr.mxu0 0.0
    %377 = vmatpush1.msra.mxu0 0.0
    %378 = vmatprep.subr.mxu0 0.0
    %379 = vmatpush1.msra.mxu0 0.0
    %380 = vmatprep.subr.mxu0 0.0
    %381 = vmatpush1.msra.mxu0 0.0
    %382 = vmatprep.subr.mxu0 0.0
    %383 = vmatpush1.msra.mxu0 0.0
    %384 = vmatprep.subr.mxu0 0.0
    %385 = vmatpush1.msra.mxu0 0.0
    %386 = vmatprep.subr.mxu0 0.0
    %387 = vmatpush1.msra.mxu0 0.0
    %388 = vmatprep.subr.mxu0 0.0
    %389 = vmatpush1.msra.mxu0 0.0
    %390 = vmatprep.subr.mxu0 0.0
    %391 = vmatpush2.msra.mxu0 0.0
    %392 = vmatprep.subr.mxu0 0.0
    %393 = vmatpush2.msra.mxu0 0.0
    %394 = vmatprep.subr.mxu0 0.0
    %395 = vmatpush2.msra.mxu0 0.0
    %396 = vmatprep.subr.mxu0 0.0
    %397 = vmatpush2.msra.mxu0 0.0
    %398 = vmatprep.subr.mxu0 0.0
    %399 = vmatpush2.msra.mxu0 0.0
    %400 = vmatprep.subr.mxu0 0.0
    %401 = vmatpush2.msra.mxu0 0.0
    %402 = vmatprep.subr.mxu0 0.0
    %403 = vmatpush2.msra.mxu0 0.0
    %404 = vmatprep.subr.mxu0 0.0
    %405 = vmatpush2.msra.mxu0 0.0
    %406 = vmatprep.subr.mxu0 0.0
    %407 = vmatpush2.msra.mxu0 0.0
    %408 = vmatprep.subr.mxu0 0.0
    %409 = vmatpush2.msra.mxu0 0.0
    %410 = vmatprep.subr.mxu0 0.0
    %411 = vmatpush2.msra.mxu0 0.0
    %412 = vmatprep.subr.mxu0 0.0
    %413 = vmatpush2.msra.mxu0 0.0
    %414 = vmatprep.subr.mxu0 0.0
    %415 = vmatpush2.msra.mxu0 0.0
    %416 = vmatprep.subr.mxu0 0.0
    %417 = vmatpush2.msra.mxu0 0.0
    %418 = vmatprep.subr.mxu0 0.0
    %419 = vmatpush2.msra.mxu0 0.0
    %420 = vmatprep.subr.mxu0 0.0
    %421 = vmatpush2.msra.mxu0 0.0
    %422 = vmatprep.mubr.f32.mxu0 0.0
    %v423 = vand.u32 %v63, 4294901760
    %v424 = vsub.f32 %v63, %v423
    %v425 = vand.u32 %v424, 4294901760
    %426 = vmatmul.mubr.f32.gmra.mxu0 %v425
    %v427 = vpop.f32.mrf.mxu0
    %v428 = vadd.f32 %v334, %v427
    %v429 = vpop.f32.mrf.mxu0
    %430 = vmatprep.mubr.f32.mxu0 0.0
    %v431 = vand.u32 %v65, 4294901760
    %v432 = vsub.f32 %v65, %v431
    %v433 = vand.u32 %v432, 4294901760
    %434 = vmatmul.mubr.f32.gmra.mxu0 %v433
    %v435 = vpop.f32.mrf.mxu0
    %v436 = vadd.f32 %v341, %v435
    %v437 = vpop.f32.mrf.mxu0
    %438 = vmatprep.mubr.f32.mxu0 0.0
    %v439 = vand.u32 %v67, 4294901760
    %v440 = vsub.f32 %v67, %v439
    %v441 = vand.u32 %v440, 4294901760
    %442 = vmatmul.mubr.f32.gmra.mxu0 %v441
    %v443 = vpop.f32.mrf.mxu0
    %v444 = vadd.f32 %v348, %v443
    %v445 = vpop.f32.mrf.mxu0
    %446 = vmatprep.mubr.f32.mxu0 0.0
    %v447 = vand.u32 %v69, 4294901760
    %v448 = vsub.f32 %v69, %v447
    %v449 = vand.u32 %v448, 4294901760
    %450 = vmatmul.mubr.f32.gmra.mxu0 %v449
    %v451 = vpop.f32.mrf.mxu0
    %v452 = vadd.f32 %v355, %v451
    %v453 = vpop.f32.mrf.mxu0
    %454 = vdwg.mxu0
    %455 = vmatprep.subr.mxu0 0.0
    %456 = vmatpush1.msra.mxu0 0.0
    %457 = vmatprep.subr.mxu0 0.0
    %458 = vmatpush1.msra.mxu0 0.0
    %459 = vmatprep.subr.mxu0 0.0
    %460 = vmatpush1.msra.mxu0 0.0
    %461 = vmatprep.subr.mxu0 0.0
    %462 = vmatpush1.msra.mxu0 0.0
    %463 = vmatprep.subr.mxu0 0.0
    %464 = vmatpush1.msra.mxu0 0.0
    %465 = vmatprep.subr.mxu0 0.0
    %466 = vmatpush1.msra.mxu0 0.0
    %467 = vmatprep.subr.mxu0 0.0
    %468 = vmatpush1.msra.mxu0 0.0
    %469 = vmatprep.subr.mxu0 0.0
    %470 = vmatpush1.msra.mxu0 0.0
    %471 = vmatprep.subr.mxu0 0.0
    %472 = vmatpush1.msra.mxu0 0.0
    %473 = vmatprep.subr.mxu0 0.0
    %474 = vmatpush1.msra.mxu0 0.0
    %475 = vmatprep.subr.mxu0 0.0
    %476 = vmatpush1.msra.mxu0 0.0
    %477 = vmatprep.subr.mxu0 0.0
    %478 = vmatpush1.msra.mxu0 0.0
    %479 = vmatprep.subr.mxu0 0.0
    %480 = vmatpush1.msra.mxu0 0.0
    %481 = vmatprep.subr.mxu0 0.0
    %482 = vmatpush1.msra.mxu0 0.0
    %483 = vmatprep.subr.mxu0 0.0
    %484 = vmatpush1.msra.mxu0 0.0
    %485 = vmatprep.subr.mxu0 0.0
    %486 = vmatpush1.msra.mxu0 0.0
    %487 = vmatprep.subr.mxu0 0.0
    %488 = vmatpush2.msra.mxu0 0.0
    %489 = vmatprep.subr.mxu0 0.0
    %490 = vmatpush2.msra.mxu0 0.0
    %491 = vmatprep.subr.mxu0 0.0
    %492 = vmatpush2.msra.mxu0 0.0
    %493 = vmatprep.subr.mxu0 0.0
    %494 = vmatpush2.msra.mxu0 0.0
    %495 = vmatprep.subr.mxu0 0.0
    %496 = vmatpush2.msra.mxu0 0.0
    %497 = vmatprep.subr.mxu0 0.0
    %498 = vmatpush2.msra.mxu0 0.0
    %499 = vmatprep.subr.mxu0 0.0
    %500 = vmatpush2.msra.mxu0 0.0
    %501 = vmatprep.subr.mxu0 0.0
    %502 = vmatpush2.msra.mxu0 0.0
    %503 = vmatprep.subr.mxu0 0.0
    %504 = vmatpush2.msra.mxu0 0.0
    %505 = vmatprep.subr.mxu0 0.0
    %506 = vmatpush2.msra.mxu0 0.0
    %507 = vmatprep.subr.mxu0 0.0
    %508 = vmatpush2.msra.mxu0 0.0
    %509 = vmatprep.subr.mxu0 0.0
    %510 = vmatpush2.msra.mxu0 0.0
    %511 = vmatprep.subr.mxu0 0.0
    %512 = vmatpush2.msra.mxu0 0.0
    %513 = vmatprep.subr.mxu0 0.0
    %514 = vmatpush2.msra.mxu0 0.0
    %515 = vmatprep.subr.mxu0 0.0
    %516 = vmatpush2.msra.mxu0 0.0
    %517 = vmatprep.subr.mxu0 0.0
    %518 = vmatpush2.msra.mxu0 0.0
    %519 = vmatprep.mubr.f32.mxu0 0.0
    %v520 = vand.u32 %v63, 4294901760
    %521 = vmatmul.mubr.f32.gmra.mxu0 %v520
    %v522 = vpop.f32.mrf.mxu0
    %v523 = vadd.f32 %v428, %v522
    %v524 = vpop.f32.mrf.mxu0
    %525 = vmatprep.mubr.f32.mxu0 0.0
    %v526 = vand.u32 %v65, 4294901760
    %527 = vmatmul.mubr.f32.gmra.mxu0 %v526
    %v528 = vpop.f32.mrf.mxu0
    %v529 = vadd.f32 %v436, %v528
    %v530 = vpop.f32.mrf.mxu0
    %531 = vmatprep.mubr.f32.mxu0 0.0
    %v532 = vand.u32 %v67, 4294901760
    %533 = vmatmul.mubr.f32.gmra.mxu0 %v532
    %v534 = vpop.f32.mrf.mxu0
    %v535 = vadd.f32 %v444, %v534
    %v536 = vpop.f32.mrf.mxu0
    %537 = vmatprep.mubr.f32.mxu0 0.0
    %v538 = vand.u32 %v69, 4294901760
    %539 = vmatmul.mubr.f32.gmra.mxu0 %v538
    %v540 = vpop.f32.mrf.mxu0
    %v541 = vadd.f32 %v452, %v540
    %v542 = vpop.f32.mrf.mxu0
    %543 = vdwg.mxu0
    %544 = vmatprep.subr.mxu0 0.0
    %545 = vmatpush1.msra.mxu0 0.0
    %546 = vmatprep.subr.mxu0 0.0
    %547 = vmatpush1.msra.mxu0 0.0
    %548 = vmatprep.subr.mxu0 0.0
    %549 = vmatpush1.msra.mxu0 0.0
    %550 = vmatprep.subr.mxu0 0.0
    %551 = vmatpush1.msra.mxu0 0.0
    %552 = vmatprep.subr.mxu0 0.0
    %553 = vmatpush1.msra.mxu0 0.0
    %554 = vmatprep.subr.mxu0 0.0
    %555 = vmatpush1.msra.mxu0 0.0
    %556 = vmatprep.subr.mxu0 0.0
    %557 = vmatpush1.msra.mxu0 0.0
    %558 = vmatprep.subr.mxu0 0.0
    %559 = vmatpush1.msra.mxu0 0.0
    %560 = vmatprep.subr.mxu0 0.0
    %561 = vmatpush1.msra.mxu0 0.0
    %562 = vmatprep.subr.mxu0 0.0
    %563 = vmatpush1.msra.mxu0 0.0
    %564 = vmatprep.subr.mxu0 0.0
    %565 = vmatpush1.msra.mxu0 0.0
    %566 = vmatprep.subr.mxu0 0.0
    %567 = vmatpush1.msra.mxu0 0.0
    %568 = vmatprep.subr.mxu0 0.0
    %569 = vmatpush1.msra.mxu0 0.0
    %570 = vmatprep.subr.mxu0 0.0
    %571 = vmatpush1.msra.mxu0 0.0
    %572 = vmatprep.subr.mxu0 0.0
    %573 = vmatpush1.msra.mxu0 0.0
    %574 = vmatprep.subr.mxu0 0.0
    %575 = vmatpush1.msra.mxu0 0.0
    %576 = vmatprep.subr.mxu0 0.0
    %577 = vmatpush2.msra.mxu0 0.0
    %578 = vmatprep.subr.mxu0 0.0
    %579 = vmatpush2.msra.mxu0 0.0
    %580 = vmatprep.subr.mxu0 0.0
    %581 = vmatpush2.msra.mxu0 0.0
    %582 = vmatprep.subr.mxu0 0.0
    %583 = vmatpush2.msra.mxu0 0.0
    %584 = vmatprep.subr.mxu0 0.0
    %585 = vmatpush2.msra.mxu0 0.0
    %586 = vmatprep.subr.mxu0 0.0
    %587 = vmatpush2.msra.mxu0 0.0
    %588 = vmatprep.subr.mxu0 0.0
    %589 = vmatpush2.msra.mxu0 0.0
    %590 = vmatprep.subr.mxu0 0.0
    %591 = vmatpush2.msra.mxu0 0.0
    %592 = vmatprep.subr.mxu0 0.0
    %593 = vmatpush2.msra.mxu0 0.0
    %594 = vmatprep.subr.mxu0 0.0
    %595 = vmatpush2.msra.mxu0 0.0
    %596 = vmatprep.subr.mxu0 0.0
    %597 = vmatpush2.msra.mxu0 0.0
    %598 = vmatprep.subr.mxu0 0.0
    %599 = vmatpush2.msra.mxu0 0.0
    %600 = vmatprep.subr.mxu0 0.0
    %601 = vmatpush2.msra.mxu0 0.0
    %602 = vmatprep.subr.mxu0 0.0
    %603 = vmatpush2.msra.mxu0 0.0
    %604 = vmatprep.subr.mxu0 0.0
    %605 = vmatpush2.msra.mxu0 0.0
    %606 = vmatprep.subr.mxu0 0.0
    %607 = vmatpush2.msra.mxu0 0.0
    %608 = vmatprep.mubr.f32.mxu0 0.0
    %v609 = vand.u32 %v63, 4294901760
    %610 = vmatmul.mubr.f32.gmra.mxu0 %v609
    %v611 = vpop.f32.mrf.mxu0
    %v612 = vadd.f32 %v523, %v611
    %v613 = vpop.f32.mrf.mxu0
    %614 = vmatprep.mubr.f32.mxu0 0.0
    %v615 = vand.u32 %v65, 4294901760
    %616 = vmatmul.mubr.f32.gmra.mxu0 %v615
    %v617 = vpop.f32.mrf.mxu0
    %v618 = vadd.f32 %v529, %v617
    %v619 = vpop.f32.mrf.mxu0
    %620 = vmatprep.mubr.f32.mxu0 0.0
    %v621 = vand.u32 %v67, 4294901760
    %622 = vmatmul.mubr.f32.gmra.mxu0 %v621
    %v623 = vpop.f32.mrf.mxu0
    %v624 = vadd.f32 %v535, %v623
    %v625 = vpop.f32.mrf.mxu0
    %626 = vmatprep.mubr.f32.mxu0 0.0
    %v627 = vand.u32 %v69, 4294901760
    %628 = vmatmul.mubr.f32.gmra.mxu0 %v627
    %v629 = vpop.f32.mrf.mxu0
    %v630 = vadd.f32 %v541, %v629
    %v631 = vpop.f32.mrf.mxu0
    %632 = vdwg.mxu0
    %637 = vrot.lane.b32.xlu0 %v612, 12
    %v638 = vpop.permute.xlu0 %637
    %639 = vrot.lane.b32.xlu0 %v618, 12
    %v640 = vpop.permute.xlu0 %639
    %641 = vrot.lane.b32.xlu0 %v624, 12
    %v642 = vpop.permute.xlu0 %641
    %643 = vrot.lane.b32.xlu0 %v630, 12
    %v644 = vpop.permute.xlu0 %643
    %v649 = vadd.f32 %v58, %v638
    %v650 = vadd.f32 %v59, %v640
    %v651 = vadd.f32 %v60, %v642
    %v652 = vadd.f32 %v61, %v644
    %v653 = vxor.u32 %v649, 2147483648
    %v654 = vxor.u32 %v650, 2147483648
    %v655 = vmul.f32 %v653, 1.442695
    %v656 = vpow.pop %v655
    %v657 = vmul.f32 %v654, 1.442695
    %v658 = vpow.pop %v657
    %v659 = vadd.f32 %v656, 1.0
    %v660 = vadd.f32 %v658, 1.0
    %v661 = vrcp.pop %v659
    %v662 = vmul.f32 1.0, %v661
    %v663 = vrcp.pop %v660
    %v664 = vmul.f32 1.0, %v663
    %v665 = vxor.u32 %v652, 2147483648
    %v666 = vmul.f32 %v665, 1.442695
    %v667 = vpow.pop %v666
    %v668 = vadd.f32 %v667, 1.0
    %v669 = vrcp.pop %v668
    %v670 = vmul.f32 1.0, %v669
    %v671 = vtanh.pop %v651
    %v672 = vmul.f32 %v664, 0.0
    %v673 = vmul.f32 %v662, %v671
    %v674 = vadd.f32 %v672, %v673
    %v675 = vtanh.pop %v674
    %v676 = vmul.f32 %v670, %v675
    %v677 = vlaneseq
    %v678 = vshrl.u32 %v677, 7
    %v679 = vsub.s32 1, %v678
    %v680 = vrot.slane %v9, %v679
    %v681 = vmul.f32 %v17, %v680
    %v682 = vmul.f32 %v22, %v680
    %v683 = vmul.f32 %v27, %v680
    %v684 = vmul.f32 %v32, %v680
    %v685 = vadd.f32 %v681, %v44
    %v686 = vadd.f32 %v682, %v48
    %v687 = vadd.f32 %v683, %v52
    %v688 = vadd.f32 %v684, %v56
    %690 = vrot.lane.b32.xlu0 %v676, 116
    %v691 = vpop.permute.xlu0 %690
    %693 = vmatprep.subr.mxu0 0.0
    %694 = vmatpush1.msra.mxu0 0.0
    %695 = vmatprep.subr.mxu0 0.0
    %696 = vmatpush1.msra.mxu0 0.0
    %697 = vmatprep.subr.mxu0 0.0
    %698 = vmatpush1.msra.mxu0 0.0
    %699 = vmatprep.subr.mxu0 0.0
    %700 = vmatpush1.msra.mxu0 0.0
    %701 = vmatprep.subr.mxu0 0.0
    %702 = vmatpush1.msra.mxu0 0.0
    %703 = vmatprep.subr.mxu0 0.0
    %704 = vmatpush1.msra.mxu0 0.0
    %705 = vmatprep.subr.mxu0 0.0
    %706 = vmatpush1.msra.mxu0 0.0
    %707 = vmatprep.subr.mxu0 0.0
    %708 = vmatpush1.msra.mxu0 0.0
    %709 = vmatprep.subr.mxu0 0.0
    %710 = vmatpush1.msra.mxu0 0.0
    %711 = vmatprep.subr.mxu0 0.0
    %712 = vmatpush1.msra.mxu0 0.0
    %713 = vmatprep.subr.mxu0 0.0
    %714 = vmatpush1.msra.mxu0 0.0
    %715 = vmatprep.subr.mxu0 0.0
    %716 = vmatpush1.msra.mxu0 0.0
    %717 = vmatprep.subr.mxu0 0.0
    %718 = vmatpush1.msra.mxu0 0.0
    %719 = vmatprep.subr.mxu0 0.0
    %720 = vmatpush1.msra.mxu0 0.0
    %721 = vmatprep.subr.mxu0 0.0
    %722 = vmatpush1.msra.mxu0 0.0
    %723 = vmatprep.subr.mxu0 0.0
    %v724 = vand.u32 %v691, 4294901760
    %725 = vmatpush1.msra.mxu0 %v724
    %726 = vmatprep.subr.mxu0 0.0
    %727 = vmatpush2.msra.mxu0 0.0
    %728 = vmatprep.subr.mxu0 0.0
    %729 = vmatpush2.msra.mxu0 0.0
    %730 = vmatprep.subr.mxu0 0.0
    %731 = vmatpush2.msra.mxu0 0.0
    %732 = vmatprep.subr.mxu0 0.0
    %733 = vmatpush2.msra.mxu0 0.0
    %734 = vmatprep.subr.mxu0 0.0
    %735 = vmatpush2.msra.mxu0 0.0
    %736 = vmatprep.subr.mxu0 0.0
    %737 = vmatpush2.msra.mxu0 0.0
    %738 = vmatprep.subr.mxu0 0.0
    %739 = vmatpush2.msra.mxu0 0.0
    %740 = vmatprep.subr.mxu0 0.0
    %741 = vmatpush2.msra.mxu0 0.0
    %742 = vmatprep.subr.mxu0 0.0
    %743 = vmatpush2.msra.mxu0 0.0
    %744 = vmatprep.subr.mxu0 0.0
    %745 = vmatpush2.msra.mxu0 0.0
    %746 = vmatprep.subr.mxu0 0.0
    %747 = vmatpush2.msra.mxu0 0.0
    %748 = vmatprep.subr.mxu0 0.0
    %749 = vmatpush2.msra.mxu0 0.0
    %750 = vmatprep.subr.mxu0 0.0
    %751 = vmatpush2.msra.mxu0 0.0
    %752 = vmatprep.subr.mxu0 0.0
    %753 = vmatpush2.msra.mxu0 0.0
    %754 = vmatprep.subr.mxu0 0.0
    %755 = vmatpush2.msra.mxu0 0.0
    %756 = vmatprep.subr.mxu0 0.0
    %757 = vmatpush2.msra.mxu0 0.0
    %758 = vmatprep.mubr.f32.mxu0 0.0
    %v759 = vand.u32 %v63, 4294901760
    %v760 = vsub.f32 %v63, %v759
    %v761 = vand.u32 %v760, 4294901760
    %v762 = vsub.f32 %v760, %v761
    %v763 = vand.u32 %v762, 4294901760
    %764 = vmatmul.mubr.f32.gmra.mxu0 %v763
    %v765 = vpop.f32.mrf.mxu0
    %v766 = vadd.f32 0.0, %v765
    %v767 = vpop.f32.mrf.mxu0
    %768 = vmatprep.mubr.f32.mxu0 0.0
    %v769 = vand.u32 %v65, 4294901760
    %v770 = vsub.f32 %v65, %v769
    %v771 = vand.u32 %v770, 4294901760
    %v772 = vsub.f32 %v770, %v771
    %v773 = vand.u32 %v772, 4294901760
    %774 = vmatmul.mubr.f32.gmra.mxu0 %v773
    %v775 = vpop.f32.mrf.mxu0
    %v776 = vadd.f32 0.0, %v775
    %v777 = vpop.f32.mrf.mxu0
    %778 = vmatprep.mubr.f32.mxu0 0.0
    %v779 = vand.u32 %v67, 4294901760
    %v780 = vsub.f32 %v67, %v779
    %v781 = vand.u32 %v780, 4294901760
    %v782 = vsub.f32 %v780, %v781
    %v783 = vand.u32 %v782, 4294901760
    %784 = vmatmul.mubr.f32.gmra.mxu0 %v783
    %v785 = vpop.f32.mrf.mxu0
    %v786 = vadd.f32 0.0, %v785
    %v787 = vpop.f32.mrf.mxu0
    %788 = vmatprep.mubr.f32.mxu0 0.0
    %v789 = vand.u32 %v69, 4294901760
    %v790 = vsub.f32 %v69, %v789
    %v791 = vand.u32 %v790, 4294901760
    %v792 = vsub.f32 %v790, %v791
    %v793 = vand.u32 %v792, 4294901760
    %794 = vmatmul.mubr.f32.gmra.mxu0 %v793
    %v795 = vpop.f32.mrf.mxu0
    %v796 = vadd.f32 0.0, %v795
    %v797 = vpop.f32.mrf.mxu0
    %798 = vdwg.mxu0
    %799 = vmatprep.subr.mxu0 0.0
    %800 = vmatpush1.msra.mxu0 0.0
    %801 = vmatprep.subr.mxu0 0.0
    %802 = vmatpush1.msra.mxu0 0.0
    %803 = vmatprep.subr.mxu0 0.0
    %804 = vmatpush1.msra.mxu0 0.0
    %805 = vmatprep.subr.mxu0 0.0
    %806 = vmatpush1.msra.mxu0 0.0
    %807 = vmatprep.subr.mxu0 0.0
    %808 = vmatpush1.msra.mxu0 0.0
    %809 = vmatprep.subr.mxu0 0.0
    %810 = vmatpush1.msra.mxu0 0.0
    %811 = vmatprep.subr.mxu0 0.0
    %812 = vmatpush1.msra.mxu0 0.0
    %813 = vmatprep.subr.mxu0 0.0
    %814 = vmatpush1.msra.mxu0 0.0
    %815 = vmatprep.subr.mxu0 0.0
    %816 = vmatpush1.msra.mxu0 0.0
    %817 = vmatprep.subr.mxu0 0.0
    %818 = vmatpush1.msra.mxu0 0.0
    %819 = vmatprep.subr.mxu0 0.0
    %820 = vmatpush1.msra.mxu0 0.0
    %821 = vmatprep.subr.mxu0 0.0
    %822 = vmatpush1.msra.mxu0 0.0
    %823 = vmatprep.subr.mxu0 0.0
    %824 = vmatpush1.msra.mxu0 0.0
    %825 = vmatprep.subr.mxu0 0.0
    %826 = vmatpush1.msra.mxu0 0.0
    %827 = vmatprep.subr.mxu0 0.0
    %828 = vmatpush1.msra.mxu0 0.0
    %829 = vmatprep.subr.mxu0 0.0
    %v830 = vand.u32 %v691, 4294901760
    %v831 = vsub.f32 %v691, %v830
    %v832 = vand.u32 %v831, 4294901760
    %v833 = vsub.f32 %v831, %v832
    %v834 = vand.u32 %v833, 4294901760
    %835 = vmatpush1.msra.mxu0 %v834
    %836 = vmatprep.subr.mxu0 0.0
    %837 = vmatpush2.msra.mxu0 0.0
    %838 = vmatprep.subr.mxu0 0.0
    %839 = vmatpush2.msra.mxu0 0.0
    %840 = vmatprep.subr.mxu0 0.0
    %841 = vmatpush2.msra.mxu0 0.0
    %842 = vmatprep.subr.mxu0 0.0
    %843 = vmatpush2.msra.mxu0 0.0
    %844 = vmatprep.subr.mxu0 0.0
    %845 = vmatpush2.msra.mxu0 0.0
    %846 = vmatprep.subr.mxu0 0.0
    %847 = vmatpush2.msra.mxu0 0.0
    %848 = vmatprep.subr.mxu0 0.0
    %849 = vmatpush2.msra.mxu0 0.0
    %850 = vmatprep.subr.mxu0 0.0
    %851 = vmatpush2.msra.mxu0 0.0
    %852 = vmatprep.subr.mxu0 0.0
    %853 = vmatpush2.msra.mxu0 0.0
    %854 = vmatprep.subr.mxu0 0.0
    %855 = vmatpush2.msra.mxu0 0.0
    %856 = vmatprep.subr.mxu0 0.0
    %857 = vmatpush2.msra.mxu0 0.0
    %858 = vmatprep.subr.mxu0 0.0
    %859 = vmatpush2.msra.mxu0 0.0
    %860 = vmatprep.subr.mxu0 0.0
    %861 = vmatpush2.msra.mxu0 0.0
    %862 = vmatprep.subr.mxu0 0.0
    %863 = vmatpush2.msra.mxu0 0.0
    %864 = vmatprep.subr.mxu0 0.0
    %865 = vmatpush2.msra.mxu0 0.0
    %866 = vmatprep.subr.mxu0 0.0
    %867 = vmatpush2.msra.mxu0 0.0
    %868 = vmatprep.mubr.f32.mxu0 0.0
    %v869 = vand.u32 %v63, 4294901760
    %870 = vmatmul.mubr.f32.gmra.mxu0 %v869
    %v871 = vpop.f32.mrf.mxu0
    %v872 = vadd.f32 %v766, %v871
    %v873 = vpop.f32.mrf.mxu0
    %874 = vmatprep.mubr.f32.mxu0 0.0
    %v875 = vand.u32 %v65, 4294901760
    %876 = vmatmul.mubr.f32.gmra.mxu0 %v875
    %v877 = vpop.f32.mrf.mxu0
    %v878 = vadd.f32 %v776, %v877
    %v879 = vpop.f32.mrf.mxu0
    %880 = vmatprep.mubr.f32.mxu0 0.0
    %v881 = vand.u32 %v67, 4294901760
    %882 = vmatmul.mubr.f32.gmra.mxu0 %v881
    %v883 = vpop.f32.mrf.mxu0
    %v884 = vadd.f32 %v786, %v883
    %v885 = vpop.f32.mrf.mxu0
    %886 = vmatprep.mubr.f32.mxu0 0.0
    %v887 = vand.u32 %v69, 4294901760
    %888 = vmatmul.mubr.f32.gmra.mxu0 %v887
    %v889 = vpop.f32.mrf.mxu0
    %v890 = vadd.f32 %v796, %v889
    %v891 = vpop.f32.mrf.mxu0
    %892 = vdwg.mxu0
    %893 = vmatprep.subr.mxu0 0.0
    %894 = vmatpush1.msra.mxu0 0.0
    %895 = vmatprep.subr.mxu0 0.0
    %896 = vmatpush1.msra.mxu0 0.0
    %897 = vmatprep.subr.mxu0 0.0
    %898 = vmatpush1.msra.mxu0 0.0
    %899 = vmatprep.subr.mxu0 0.0
    %900 = vmatpush1.msra.mxu0 0.0
    %901 = vmatprep.subr.mxu0 0.0
    %902 = vmatpush1.msra.mxu0 0.0
    %903 = vmatprep.subr.mxu0 0.0
    %904 = vmatpush1.msra.mxu0 0.0
    %905 = vmatprep.subr.mxu0 0.0
    %906 = vmatpush1.msra.mxu0 0.0
    %907 = vmatprep.subr.mxu0 0.0
    %908 = vmatpush1.msra.mxu0 0.0
    %909 = vmatprep.subr.mxu0 0.0
    %910 = vmatpush1.msra.mxu0 0.0
    %911 = vmatprep.subr.mxu0 0.0
    %912 = vmatpush1.msra.mxu0 0.0
    %913 = vmatprep.subr.mxu0 0.0
    %914 = vmatpush1.msra.mxu0 0.0
    %915 = vmatprep.subr.mxu0 0.0
    %916 = vmatpush1.msra.mxu0 0.0
    %917 = vmatprep.subr.mxu0 0.0
    %918 = vmatpush1.msra.mxu0 0.0
    %919 = vmatprep.subr.mxu0 0.0
    %920 = vmatpush1.msra.mxu0 0.0
    %921 = vmatprep.subr.mxu0 0.0
    %922 = vmatpush1.msra.mxu0 0.0
    %923 = vmatprep.subr.mxu0 0.0
    %v924 = vand.u32 %v691, 4294901760
    %v925 = vsub.f32 %v691, %v924
    %926 = vmatpush1.msra.mxu0 %v925
    %927 = vmatprep.subr.mxu0 0.0
    %928 = vmatpush2.msra.mxu0 0.0
    %929 = vmatprep.subr.mxu0 0.0
    %930 = vmatpush2.msra.mxu0 0.0
    %931 = vmatprep.subr.mxu0 0.0
    %932 = vmatpush2.msra.mxu0 0.0
    %933 = vmatprep.subr.mxu0 0.0
    %934 = vmatpush2.msra.mxu0 0.0
    %935 = vmatprep.subr.mxu0 0.0
    %936 = vmatpush2.msra.mxu0 0.0
    %937 = vmatprep.subr.mxu0 0.0
    %938 = vmatpush2.msra.mxu0 0.0
    %939 = vmatprep.subr.mxu0 0.0
    %940 = vmatpush2.msra.mxu0 0.0
    %941 = vmatprep.subr.mxu0 0.0
    %942 = vmatpush2.msra.mxu0 0.0
    %943 = vmatprep.subr.mxu0 0.0
    %944 = vmatpush2.msra.mxu0 0.0
    %945 = vmatprep.subr.mxu0 0.0
    %946 = vmatpush2.msra.mxu0 0.0
    %947 = vmatprep.subr.mxu0 0.0
    %948 = vmatpush2.msra.mxu0 0.0
    %949 = vmatprep.subr.mxu0 0.0
    %950 = vmatpush2.msra.mxu0 0.0
    %951 = vmatprep.subr.mxu0 0.0
    %952 = vmatpush2.msra.mxu0 0.0
    %953 = vmatprep.subr.mxu0 0.0
    %954 = vmatpush2.msra.mxu0 0.0
    %955 = vmatprep.subr.mxu0 0.0
    %956 = vmatpush2.msra.mxu0 0.0
    %957 = vmatprep.subr.mxu0 0.0
    %958 = vmatpush2.msra.mxu0 0.0
    %959 = vmatprep.mubr.f32.mxu0 0.0
    %v960 = vand.u32 %v63, 4294901760
    %v961 = vsub.f32 %v63, %v960
    %962 = vmatmul.mubr.f32.gmra.mxu0 %v961
    %v963 = vpop.f32.mrf.mxu0
    %v964 = vadd.f32 %v872, %v963
    %v965 = vpop.f32.mrf.mxu0
    %966 = vmatprep.mubr.f32.mxu0 0.0
    %v967 = vand.u32 %v65, 4294901760
    %v968 = vsub.f32 %v65, %v967
    %969 = vmatmul.mubr.f32.gmra.mxu0 %v968
    %v970 = vpop.f32.mrf.mxu0
    %v971 = vadd.f32 %v878, %v970
    %v972 = vpop.f32.mrf.mxu0
    %973 = vmatprep.mubr.f32.mxu0 0.0
    %v974 = vand.u32 %v67, 4294901760
    %v975 = vsub.f32 %v67, %v974
    %976 = vmatmul.mubr.f32.gmra.mxu0 %v975
    %v977 = vpop.f32.mrf.mxu0
    %v978 = vadd.f32 %v884, %v977
    %v979 = vpop.f32.mrf.mxu0
    %980 = vmatprep.mubr.f32.mxu0 0.0
    %v981 = vand.u32 %v69, 4294901760
    %v982 = vsub.f32 %v69, %v981
    %983 = vmatmul.mubr.f32.gmra.mxu0 %v982
    %v984 = vpop.f32.mrf.mxu0
    %v985 = vadd.f32 %v890, %v984
    %v986 = vpop.f32.mrf.mxu0
    %987 = vdwg.mxu0
    %988 = vmatprep.subr.mxu0 0.0
    %989 = vmatpush1.msra.mxu0 0.0
    %990 = vmatprep.subr.mxu0 0.0
    %991 = vmatpush1.msra.mxu0 0.0
    %992 = vmatprep.subr.mxu0 0.0
    %993 = vmatpush1.msra.mxu0 0.0
    %994 = vmatprep.subr.mxu0 0.0
    %995 = vmatpush1.msra.mxu0 0.0
    %996 = vmatprep.subr.mxu0 0.0
    %997 = vmatpush1.msra.mxu0 0.0
    %998 = vmatprep.subr.mxu0 0.0
    %999 = vmatpush1.msra.mxu0 0.0
    %1000 = vmatprep.subr.mxu0 0.0
    %1001 = vmatpush1.msra.mxu0 0.0
    %1002 = vmatprep.subr.mxu0 0.0
    %1003 = vmatpush1.msra.mxu0 0.0
    %1004 = vmatprep.subr.mxu0 0.0
    %1005 = vmatpush1.msra.mxu0 0.0
    %1006 = vmatprep.subr.mxu0 0.0
    %1007 = vmatpush1.msra.mxu0 0.0
    %1008 = vmatprep.subr.mxu0 0.0
    %1009 = vmatpush1.msra.mxu0 0.0
    %1010 = vmatprep.subr.mxu0 0.0
    %1011 = vmatpush1.msra.mxu0 0.0
    %1012 = vmatprep.subr.mxu0 0.0
    %1013 = vmatpush1.msra.mxu0 0.0
    %1014 = vmatprep.subr.mxu0 0.0
    %1015 = vmatpush1.msra.mxu0 0.0
    %1016 = vmatprep.subr.mxu0 0.0
    %1017 = vmatpush1.msra.mxu0 0.0
    %1018 = vmatprep.subr.mxu0 0.0
    %v1019 = vand.u32 %v691, 4294901760
    %1020 = vmatpush1.msra.mxu0 %v1019
    %1021 = vmatprep.subr.mxu0 0.0
    %1022 = vmatpush2.msra.mxu0 0.0
    %1023 = vmatprep.subr.mxu0 0.0
    %1024 = vmatpush2.msra.mxu0 0.0
    %1025 = vmatprep.subr.mxu0 0.0
    %1026 = vmatpush2.msra.mxu0 0.0
    %1027 = vmatprep.subr.mxu0 0.0
    %1028 = vmatpush2.msra.mxu0 0.0
    %1029 = vmatprep.subr.mxu0 0.0
    %1030 = vmatpush2.msra.mxu0 0.0
    %1031 = vmatprep.subr.mxu0 0.0
    %1032 = vmatpush2.msra.mxu0 0.0
    %1033 = vmatprep.subr.mxu0 0.0
    %1034 = vmatpush2.msra.mxu0 0.0
    %1035 = vmatprep.subr.mxu0 0.0
    %1036 = vmatpush2.msra.mxu0 0.0
    %1037 = vmatprep.subr.mxu0 0.0
    %1038 = vmatpush2.msra.mxu0 0.0
    %1039 = vmatprep.subr.mxu0 0.0
    %1040 = vmatpush2.msra.mxu0 0.0
    %1041 = vmatprep.subr.mxu0 0.0
    %1042 = vmatpush2.msra.mxu0 0.0
    %1043 = vmatprep.subr.mxu0 0.0
    %1044 = vmatpush2.msra.mxu0 0.0
    %1045 = vmatprep.subr.mxu0 0.0
    %1046 = vmatpush2.msra.mxu0 0.0
    %1047 = vmatprep.subr.mxu0 0.0
    %1048 = vmatpush2.msra.mxu0 0.0
    %1049 = vmatprep.subr.mxu0 0.0
    %1050 = vmatpush2.msra.mxu0 0.0
    %1051 = vmatprep.subr.mxu0 0.0
    %1052 = vmatpush2.msra.mxu0 0.0
    %1053 = vmatprep.mubr.f32.mxu0 0.0
    %v1054 = vand.u32 %v63, 4294901760
    %v1055 = vsub.f32 %v63, %v1054
    %v1056 = vand.u32 %v1055, 4294901760
    %1057 = vmatmul.mubr.f32.gmra.mxu0 %v1056
    %v1058 = vpop.f32.mrf.mxu0
    %v1059 = vadd.f32 %v964, %v1058
    %v1060 = vpop.f32.mrf.mxu0
    %1061 = vmatprep.mubr.f32.mxu0 0.0
    %v1062 = vand.u32 %v65, 4294901760
    %v1063 = vsub.f32 %v65, %v1062
    %v1064 = vand.u32 %v1063, 4294901760
    %1065 = vmatmul.mubr.f32.gmra.mxu0 %v1064
    %v1066 = vpop.f32.mrf.mxu0
    %v1067 = vadd.f32 %v971, %v1066
    %v1068 = vpop.f32.mrf.mxu0
    %1069 = vmatprep.mubr.f32.mxu0 0.0
    %v1070 = vand.u32 %v67, 4294901760
    %v1071 = vsub.f32 %v67, %v1070
    %v1072 = vand.u32 %v1071, 4294901760
    %1073 = vmatmul.mubr.f32.gmra.mxu0 %v1072
    %v1074 = vpop.f32.mrf.mxu0
    %v1075 = vadd.f32 %v978, %v1074
    %v1076 = vpop.f32.mrf.mxu0
    %1077 = vmatprep.mubr.f32.mxu0 0.0
    %v1078 = vand.u32 %v69, 4294901760
    %v1079 = vsub.f32 %v69, %v1078
    %v1080 = vand.u32 %v1079, 4294901760
    %1081 = vmatmul.mubr.f32.gmra.mxu0 %v1080
    %v1082 = vpop.f32.mrf.mxu0
    %v1083 = vadd.f32 %v985, %v1082
    %v1084 = vpop.f32.mrf.mxu0
    %1085 = vdwg.mxu0
    %1086 = vmatprep.subr.mxu0 0.0
    %1087 = vmatpush1.msra.mxu0 0.0
    %1088 = vmatprep.subr.mxu0 0.0
    %1089 = vmatpush1.msra.mxu0 0.0
    %1090 = vmatprep.subr.mxu0 0.0
    %1091 = vmatpush1.msra.mxu0 0.0
    %1092 = vmatprep.subr.mxu0 0.0
    %1093 = vmatpush1.msra.mxu0 0.0
    %1094 = vmatprep.subr.mxu0 0.0
    %1095 = vmatpush1.msra.mxu0 0.0
    %1096 = vmatprep.subr.mxu0 0.0
    %1097 = vmatpush1.msra.mxu0 0.0
    %1098 = vmatprep.subr.mxu0 0.0
    %1099 = vmatpush1.msra.mxu0 0.0
    %1100 = vmatprep.subr.mxu0 0.0
    %1101 = vmatpush1.msra.mxu0 0.0
    %1102 = vmatprep.subr.mxu0 0.0
    %1103 = vmatpush1.msra.mxu0 0.0
    %1104 = vmatprep.subr.mxu0 0.0
    %1105 = vmatpush1.msra.mxu0 0.0
    %1106 = vmatprep.subr.mxu0 0.0
    %1107 = vmatpush1.msra.mxu0 0.0
    %1108 = vmatprep.subr.mxu0 0.0
    %1109 = vmatpush1.msra.mxu0 0.0
    %1110 = vmatprep.subr.mxu0 0.0
    %1111 = vmatpush1.msra.mxu0 0.0
    %1112 = vmatprep.subr.mxu0 0.0
    %1113 = vmatpush1.msra.mxu0 0.0
    %1114 = vmatprep.subr.mxu0 0.0
    %1115 = vmatpush1.msra.mxu0 0.0
    %1116 = vmatprep.subr.mxu0 0.0
    %v1117 = vand.u32 %v691, 4294901760
    %v1118 = vsub.f32 %v691, %v1117
    %v1119 = vand.u32 %v1118, 4294901760
    %1120 = vmatpush1.msra.mxu0 %v1119
    %1121 = vmatprep.subr.mxu0 0.0
    %1122 = vmatpush2.msra.mxu0 0.0
    %1123 = vmatprep.subr.mxu0 0.0
    %1124 = vmatpush2.msra.mxu0 0.0
    %1125 = vmatprep.subr.mxu0 0.0
    %1126 = vmatpush2.msra.mxu0 0.0
    %1127 = vmatprep.subr.mxu0 0.0
    %1128 = vmatpush2.msra.mxu0 0.0
    %1129 = vmatprep.subr.mxu0 0.0
    %1130 = vmatpush2.msra.mxu0 0.0
    %1131 = vmatprep.subr.mxu0 0.0
    %1132 = vmatpush2.msra.mxu0 0.0
    %1133 = vmatprep.subr.mxu0 0.0
    %1134 = vmatpush2.msra.mxu0 0.0
    %1135 = vmatprep.subr.mxu0 0.0
    %1136 = vmatpush2.msra.mxu0 0.0
    %1137 = vmatprep.subr.mxu0 0.0
    %1138 = vmatpush2.msra.mxu0 0.0
    %1139 = vmatprep.subr.mxu0 0.0
    %1140 = vmatpush2.msra.mxu0 0.0
    %1141 = vmatprep.subr.mxu0 0.0
    %1142 = vmatpush2.msra.mxu0 0.0
    %1143 = vmatprep.subr.mxu0 0.0
    %1144 = vmatpush2.msra.mxu0 0.0
    %1145 = vmatprep.subr.mxu0 0.0
    %1146 = vmatpush2.msra.mxu0 0.0
    %1147 = vmatprep.subr.mxu0 0.0
    %1148 = vmatpush2.msra.mxu0 0.0
    %1149 = vmatprep.subr.mxu0 0.0
    %1150 = vmatpush2.msra.mxu0 0.0
    %1151 = vmatprep.subr.mxu0 0.0
    %1152 = vmatpush2.msra.mxu0 0.0
    %1153 = vmatprep.mubr.f32.mxu0 0.0
    %v1154 = vand.u32 %v63, 4294901760
    %1155 = vmatmul.mubr.f32.gmra.mxu0 %v1154
    %v1156 = vpop.f32.mrf.mxu0
    %v1157 = vadd.f32 %v1059, %v1156
    %v1158 = vpop.f32.mrf.mxu0
    %1159 = vmatprep.mubr.f32.mxu0 0.0
    %v1160 = vand.u32 %v65, 4294901760
    %1161 = vmatmul.mubr.f32.gmra.mxu0 %v1160
    %v1162 = vpop.f32.mrf.mxu0
    %v1163 = vadd.f32 %v1067, %v1162
    %v1164 = vpop.f32.mrf.mxu0
    %1165 = vmatprep.mubr.f32.mxu0 0.0
    %v1166 = vand.u32 %v67, 4294901760
    %1167 = vmatmul.mubr.f32.gmra.mxu0 %v1166
    %v1168 = vpop.f32.mrf.mxu0
    %v1169 = vadd.f32 %v1075, %v1168
    %v1170 = vpop.f32.mrf.mxu0
    %1171 = vmatprep.mubr.f32.mxu0 0.0
    %v1172 = vand.u32 %v69, 4294901760
    %1173 = vmatmul.mubr.f32.gmra.mxu0 %v1172
    %v1174 = vpop.f32.mrf.mxu0
    %v1175 = vadd.f32 %v1083, %v1174
    %v1176 = vpop.f32.mrf.mxu0
    %1177 = vdwg.mxu0
    %1178 = vmatprep.subr.mxu0 0.0
    %1179 = vmatpush1.msra.mxu0 0.0
    %1180 = vmatprep.subr.mxu0 0.0
    %1181 = vmatpush1.msra.mxu0 0.0
    %1182 = vmatprep.subr.mxu0 0.0
    %1183 = vmatpush1.msra.mxu0 0.0
    %1184 = vmatprep.subr.mxu0 0.0
    %1185 = vmatpush1.msra.mxu0 0.0
    %1186 = vmatprep.subr.mxu0 0.0
    %1187 = vmatpush1.msra.mxu0 0.0
    %1188 = vmatprep.subr.mxu0 0.0
    %1189 = vmatpush1.msra.mxu0 0.0
    %1190 = vmatprep.subr.mxu0 0.0
    %1191 = vmatpush1.msra.mxu0 0.0
    %1192 = vmatprep.subr.mxu0 0.0
    %1193 = vmatpush1.msra.mxu0 0.0
    %1194 = vmatprep.subr.mxu0 0.0
    %1195 = vmatpush1.msra.mxu0 0.0
    %1196 = vmatprep.subr.mxu0 0.0
    %1197 = vmatpush1.msra.mxu0 0.0
    %1198 = vmatprep.subr.mxu0 0.0
    %1199 = vmatpush1.msra.mxu0 0.0
    %1200 = vmatprep.subr.mxu0 0.0
    %1201 = vmatpush1.msra.mxu0 0.0
    %1202 = vmatprep.subr.mxu0 0.0
    %1203 = vmatpush1.msra.mxu0 0.0
    %1204 = vmatprep.subr.mxu0 0.0
    %1205 = vmatpush1.msra.mxu0 0.0
    %1206 = vmatprep.subr.mxu0 0.0
    %1207 = vmatpush1.msra.mxu0 0.0
    %1208 = vmatprep.subr.mxu0 0.0
    %v1209 = vand.u32 %v691, 4294901760
    %1210 = vmatpush1.msra.mxu0 %v1209
    %1211 = vmatprep.subr.mxu0 0.0
    %1212 = vmatpush2.msra.mxu0 0.0
    %1213 = vmatprep.subr.mxu0 0.0
    %1214 = vmatpush2.msra.mxu0 0.0
    %1215 = vmatprep.subr.mxu0 0.0
    %1216 = vmatpush2.msra.mxu0 0.0
    %1217 = vmatprep.subr.mxu0 0.0
    %1218 = vmatpush2.msra.mxu0 0.0
    %1219 = vmatprep.subr.mxu0 0.0
    %1220 = vmatpush2.msra.mxu0 0.0
    %1221 = vmatprep.subr.mxu0 0.0
    %1222 = vmatpush2.msra.mxu0 0.0
    %1223 = vmatprep.subr.mxu0 0.0
    %1224 = vmatpush2.msra.mxu0 0.0
    %1225 = vmatprep.subr.mxu0 0.0
    %1226 = vmatpush2.msra.mxu0 0.0
    %1227 = vmatprep.subr.mxu0 0.0
    %1228 = vmatpush2.msra.mxu0 0.0
    %1229 = vmatprep.subr.mxu0 0.0
    %1230 = vmatpush2.msra.mxu0 0.0
    %1231 = vmatprep.subr.mxu0 0.0
    %1232 = vmatpush2.msra.mxu0 0.0
    %1233 = vmatprep.subr.mxu0 0.0
    %1234 = vmatpush2.msra.mxu0 0.0
    %1235 = vmatprep.subr.mxu0 0.0
    %1236 = vmatpush2.msra.mxu0 0.0
    %1237 = vmatprep.subr.mxu0 0.0
    %1238 = vmatpush2.msra.mxu0 0.0
    %1239 = vmatprep.subr.mxu0 0.0
    %1240 = vmatpush2.msra.mxu0 0.0
    %1241 = vmatprep.subr.mxu0 0.0
    %1242 = vmatpush2.msra.mxu0 0.0
    %1243 = vmatprep.mubr.f32.mxu0 0.0
    %v1244 = vand.u32 %v63, 4294901760
    %1245 = vmatmul.mubr.f32.gmra.mxu0 %v1244
    %v1246 = vpop.f32.mrf.mxu0
    %v1247 = vadd.f32 %v1157, %v1246
    %v1248 = vpop.f32.mrf.mxu0
    %1249 = vmatprep.mubr.f32.mxu0 0.0
    %v1250 = vand.u32 %v65, 4294901760
    %1251 = vmatmul.mubr.f32.gmra.mxu0 %v1250
    %v1252 = vpop.f32.mrf.mxu0
    %v1253 = vadd.f32 %v1163, %v1252
    %v1254 = vpop.f32.mrf.mxu0
    %1255 = vmatprep.mubr.f32.mxu0 0.0
    %v1256 = vand.u32 %v67, 4294901760
    %1257 = vmatmul.mubr.f32.gmra.mxu0 %v1256
    %v1258 = vpop.f32.mrf.mxu0
    %v1259 = vadd.f32 %v1169, %v1258
    %v1260 = vpop.f32.mrf.mxu0
    %1261 = vmatprep.mubr.f32.mxu0 0.0
    %v1262 = vand.u32 %v69, 4294901760
    %1263 = vmatmul.mubr.f32.gmra.mxu0 %v1262
    %v1264 = vpop.f32.mrf.mxu0
    %v1265 = vadd.f32 %v1175, %v1264
    %v1266 = vpop.f32.mrf.mxu0
    %1267 = vdwg.mxu0
    %1272 = vrot.lane.b32.xlu0 %v1247, 12
    %v1273 = vpop.permute.xlu0 %1272
    %1274 = vrot.lane.b32.xlu0 %v1253, 12
    %v1275 = vpop.permute.xlu0 %1274
    %1276 = vrot.lane.b32.xlu0 %v1259, 12
    %v1277 = vpop.permute.xlu0 %1276
    %1278 = vrot.lane.b32.xlu0 %v1265, 12
    %v1279 = vpop.permute.xlu0 %1278
    %v1284 = vadd.f32 %v685, %v1273
    %v1285 = vadd.f32 %v686, %v1275
    %v1286 = vadd.f32 %v687, %v1277
    %v1287 = vadd.f32 %v688, %v1279
    %v1288 = vxor.u32 %v1284, 2147483648
    %v1289 = vxor.u32 %v1285, 2147483648
    %v1290 = vmul.f32 %v1288, 1.442695
    %v1291 = vpow.pop %v1290
    %v1292 = vmul.f32 %v1289, 1.442695
    %v1293 = vpow.pop %v1292
    %v1294 = vadd.f32 %v1291, 1.0
    %v1295 = vadd.f32 %v1293, 1.0
    %v1296 = vrcp.pop %v1294
    %v1297 = vmul.f32 1.0, %v1296
    %v1298 = vrcp.pop %v1295
    %v1299 = vmul.f32 1.0, %v1298
    %v1300 = vxor.u32 %v1287, 2147483648
    %v1301 = vmul.f32 %v1300, 1.442695
    %v1302 = vpow.pop %v1301
    %v1303 = vadd.f32 %v1302, 1.0
    %v1304 = vrcp.pop %v1303
    %v1305 = vmul.f32 1.0, %v1304
    %v1306 = vtanh.pop %v1286
    %v1307 = vmul.f32 %v1299, %v674
    %v1308 = vmul.f32 %v1297, %v1306
    %v1309 = vadd.f32 %v1307, %v1308
    %v1310 = vtanh.pop %v1309
    %v1311 = vmul.f32 %v1305, %v1310
    %v1312 = vlaneseq
    %v1313 = vshrl.u32 %v1312, 7
    %v1314 = vsub.s32 2, %v1313
    %v1315 = vrot.slane %v9, %v1314
    %v1316 = vmul.f32 %v17, %v1315
    %v1317 = vmul.f32 %v22, %v1315
    %v1318 = vmul.f32 %v27, %v1315
    %v1319 = vmul.f32 %v32, %v1315
    %v1320 = vadd.f32 %v1316, %v44
    %v1321 = vadd.f32 %v1317, %v48
    %v1322 = vadd.f32 %v1318, %v52
    %v1323 = vadd.f32 %v1319, %v56
    %1325 = vrot.lane.b32.xlu0 %v1311, 116
    %v1326 = vpop.permute.xlu0 %1325
    %1328 = vmatprep.subr.mxu0 0.0
    %1329 = vmatpush1.msra.mxu0 0.0
    %1330 = vmatprep.subr.mxu0 0.0
    %1331 = vmatpush1.msra.mxu0 0.0
    %1332 = vmatprep.subr.mxu0 0.0
    %1333 = vmatpush1.msra.mxu0 0.0
    %1334 = vmatprep.subr.mxu0 0.0
    %1335 = vmatpush1.msra.mxu0 0.0
    %1336 = vmatprep.subr.mxu0 0.0
    %1337 = vmatpush1.msra.mxu0 0.0
    %1338 = vmatprep.subr.mxu0 0.0
    %1339 = vmatpush1.msra.mxu0 0.0
    %1340 = vmatprep.subr.mxu0 0.0
    %1341 = vmatpush1.msra.mxu0 0.0
    %1342 = vmatprep.subr.mxu0 0.0
    %1343 = vmatpush1.msra.mxu0 0.0
    %1344 = vmatprep.subr.mxu0 0.0
    %1345 = vmatpush1.msra.mxu0 0.0
    %1346 = vmatprep.subr.mxu0 0.0
    %1347 = vmatpush1.msra.mxu0 0.0
    %1348 = vmatprep.subr.mxu0 0.0
    %1349 = vmatpush1.msra.mxu0 0.0
    %1350 = vmatprep.subr.mxu0 0.0
    %1351 = vmatpush1.msra.mxu0 0.0
    %1352 = vmatprep.subr.mxu0 0.0
    %1353 = vmatpush1.msra.mxu0 0.0
    %1354 = vmatprep.subr.mxu0 0.0
    %1355 = vmatpush1.msra.mxu0 0.0
    %1356 = vmatprep.subr.mxu0 0.0
    %1357 = vmatpush1.msra.mxu0 0.0
    %1358 = vmatprep.subr.mxu0 0.0
    %v1359 = vand.u32 %v1326, 4294901760
    %1360 = vmatpush1.msra.mxu0 %v1359
    %1361 = vmatprep.subr.mxu0 0.0
    %1362 = vmatpush2.msra.mxu0 0.0
    %1363 = vmatprep.subr.mxu0 0.0
    %1364 = vmatpush2.msra.mxu0 0.0
    %1365 = vmatprep.subr.mxu0 0.0
    %1366 = vmatpush2.msra.mxu0 0.0
    %1367 = vmatprep.subr.mxu0 0.0
    %1368 = vmatpush2.msra.mxu0 0.0
    %1369 = vmatprep.subr.mxu0 0.0
    %1370 = vmatpush2.msra.mxu0 0.0
    %1371 = vmatprep.subr.mxu0 0.0
    %1372 = vmatpush2.msra.mxu0 0.0
    %1373 = vmatprep.subr.mxu0 0.0
    %1374 = vmatpush2.msra.mxu0 0.0
    %1375 = vmatprep.subr.mxu0 0.0
    %1376 = vmatpush2.msra.mxu0 0.0
    %1377 = vmatprep.subr.mxu0 0.0
    %1378 = vmatpush2.msra.mxu0 0.0
    %1379 = vmatprep.subr.mxu0 0.0
    %1380 = vmatpush2.msra.mxu0 0.0
    %1381 = vmatprep.subr.mxu0 0.0
    %1382 = vmatpush2.msra.mxu0 0.0
    %1383 = vmatprep.subr.mxu0 0.0
    %1384 = vmatpush2.msra.mxu0 0.0
    %1385 = vmatprep.subr.mxu0 0.0
    %1386 = vmatpush2.msra.mxu0 0.0
    %1387 = vmatprep.subr.mxu0 0.0
    %1388 = vmatpush2.msra.mxu0 0.0
    %1389 = vmatprep.subr.mxu0 0.0
    %1390 = vmatpush2.msra.mxu0 0.0
    %1391 = vmatprep.subr.mxu0 0.0
    %1392 = vmatpush2.msra.mxu0 0.0
    %1393 = vmatprep.mubr.f32.mxu0 0.0
    %v1394 = vand.u32 %v63, 4294901760
    %v1395 = vsub.f32 %v63, %v1394
    %v1396 = vand.u32 %v1395, 4294901760
    %v1397 = vsub.f32 %v1395, %v1396
    %v1398 = vand.u32 %v1397, 4294901760
    %1399 = vmatmul.mubr.f32.gmra.mxu0 %v1398
    %v1400 = vpop.f32.mrf.mxu0
    %v1401 = vadd.f32 0.0, %v1400
    %v1402 = vpop.f32.mrf.mxu0
    %1403 = vmatprep.mubr.f32.mxu0 0.0
    %v1404 = vand.u32 %v65, 4294901760
    %v1405 = vsub.f32 %v65, %v1404
    %v1406 = vand.u32 %v1405, 4294901760
    %v1407 = vsub.f32 %v1405, %v1406
    %v1408 = vand.u32 %v1407, 4294901760
    %1409 = vmatmul.mubr.f32.gmra.mxu0 %v1408
    %v1410 = vpop.f32.mrf.mxu0
    %v1411 = vadd.f32 0.0, %v1410
    %v1412 = vpop.f32.mrf.mxu0
    %1413 = vmatprep.mubr.f32.mxu0 0.0
    %v1414 = vand.u32 %v67, 4294901760
    %v1415 = vsub.f32 %v67, %v1414
    %v1416 = vand.u32 %v1415, 4294901760
    %v1417 = vsub.f32 %v1415, %v1416
    %v1418 = vand.u32 %v1417, 4294901760
    %1419 = vmatmul.mubr.f32.gmra.mxu0 %v1418
    %v1420 = vpop.f32.mrf.mxu0
    %v1421 = vadd.f32 0.0, %v1420
    %v1422 = vpop.f32.mrf.mxu0
    %1423 = vmatprep.mubr.f32.mxu0 0.0
    %v1424 = vand.u32 %v69, 4294901760
    %v1425 = vsub.f32 %v69, %v1424
    %v1426 = vand.u32 %v1425, 4294901760
    %v1427 = vsub.f32 %v1425, %v1426
    %v1428 = vand.u32 %v1427, 4294901760
    %1429 = vmatmul.mubr.f32.gmra.mxu0 %v1428
    %v1430 = vpop.f32.mrf.mxu0
    %v1431 = vadd.f32 0.0, %v1430
    %v1432 = vpop.f32.mrf.mxu0
    %1433 = vdwg.mxu0
    %1434 = vmatprep.subr.mxu0 0.0
    %1435 = vmatpush1.msra.mxu0 0.0
    %1436 = vmatprep.subr.mxu0 0.0
    %1437 = vmatpush1.msra.mxu0 0.0
    %1438 = vmatprep.subr.mxu0 0.0
    %1439 = vmatpush1.msra.mxu0 0.0
    %1440 = vmatprep.subr.mxu0 0.0
    %1441 = vmatpush1.msra.mxu0 0.0
    %1442 = vmatprep.subr.mxu0 0.0
    %1443 = vmatpush1.msra.mxu0 0.0
    %1444 = vmatprep.subr.mxu0 0.0
    %1445 = vmatpush1.msra.mxu0 0.0
    %1446 = vmatprep.subr.mxu0 0.0
    %1447 = vmatpush1.msra.mxu0 0.0
    %1448 = vmatprep.subr.mxu0 0.0
    %1449 = vmatpush1.msra.mxu0 0.0
    %1450 = vmatprep.subr.mxu0 0.0
    %1451 = vmatpush1.msra.mxu0 0.0
    %1452 = vmatprep.subr.mxu0 0.0
    %1453 = vmatpush1.msra.mxu0 0.0
    %1454 = vmatprep.subr.mxu0 0.0
    %1455 = vmatpush1.msra.mxu0 0.0
    %1456 = vmatprep.subr.mxu0 0.0
    %1457 = vmatpush1.msra.mxu0 0.0
    %1458 = vmatprep.subr.mxu0 0.0
    %1459 = vmatpush1.msra.mxu0 0.0
    %1460 = vmatprep.subr.mxu0 0.0
    %1461 = vmatpush1.msra.mxu0 0.0
    %1462 = vmatprep.subr.mxu0 0.0
    %1463 = vmatpush1.msra.mxu0 0.0
    %1464 = vmatprep.subr.mxu0 0.0
    %v1465 = vand.u32 %v1326, 4294901760
    %v1466 = vsub.f32 %v1326, %v1465
    %v1467 = vand.u32 %v1466, 4294901760
    %v1468 = vsub.f32 %v1466, %v1467
    %v1469 = vand.u32 %v1468, 4294901760
    %1470 = vmatpush1.msra.mxu0 %v1469
    %1471 = vmatprep.subr.mxu0 0.0
    %1472 = vmatpush2.msra.mxu0 0.0
    %1473 = vmatprep.subr.mxu0 0.0
    %1474 = vmatpush2.msra.mxu0 0.0
    %1475 = vmatprep.subr.mxu0 0.0
    %1476 = vmatpush2.msra.mxu0 0.0
    %1477 = vmatprep.subr.mxu0 0.0
    %1478 = vmatpush2.msra.mxu0 0.0
    %1479 = vmatprep.subr.mxu0 0.0
    %1480 = vmatpush2.msra.mxu0 0.0
    %1481 = vmatprep.subr.mxu0 0.0
    %1482 = vmatpush2.msra.mxu0 0.0
    %1483 = vmatprep.subr.mxu0 0.0
    %1484 = vmatpush2.msra.mxu0 0.0
    %1485 = vmatprep.subr.mxu0 0.0
    %1486 = vmatpush2.msra.mxu0 0.0
    %1487 = vmatprep.subr.mxu0 0.0
    %1488 = vmatpush2.msra.mxu0 0.0
    %1489 = vmatprep.subr.mxu0 0.0
    %1490 = vmatpush2.msra.mxu0 0.0
    %1491 = vmatprep.subr.mxu0 0.0
    %1492 = vmatpush2.msra.mxu0 0.0
    %1493 = vmatprep.subr.mxu0 0.0
    %1494 = vmatpush2.msra.mxu0 0.0
    %1495 = vmatprep.subr.mxu0 0.0
    %1496 = vmatpush2.msra.mxu0 0.0
    %1497 = vmatprep.subr.mxu0 0.0
    %1498 = vmatpush2.msra.mxu0 0.0
    %1499 = vmatprep.subr.mxu0 0.0
    %1500 = vmatpush2.msra.mxu0 0.0
    %1501 = vmatprep.subr.mxu0 0.0
    %1502 = vmatpush2.msra.mxu0 0.0
    %1503 = vmatprep.mubr.f32.mxu0 0.0
    %v1504 = vand.u32 %v63, 4294901760
    %1505 = vmatmul.mubr.f32.gmra.mxu0 %v1504
    %v1506 = vpop.f32.mrf.mxu0
    %v1507 = vadd.f32 %v1401, %v1506
    %v1508 = vpop.f32.mrf.mxu0
    %1509 = vmatprep.mubr.f32.mxu0 0.0
    %v1510 = vand.u32 %v65, 4294901760
    %1511 = vmatmul.mubr.f32.gmra.mxu0 %v1510
    %v1512 = vpop.f32.mrf.mxu0
    %v1513 = vadd.f32 %v1411, %v1512
    %v1514 = vpop.f32.mrf.mxu0
    %1515 = vmatprep.mubr.f32.mxu0 0.0
    %v1516 = vand.u32 %v67, 4294901760
    %1517 = vmatmul.mubr.f32.gmra.mxu0 %v1516
    %v1518 = vpop.f32.mrf.mxu0
    %v1519 = vadd.f32 %v1421, %v1518
    %v1520 = vpop.f32.mrf.mxu0
    %1521 = vmatprep.mubr.f32.mxu0 0.0
    %v1522 = vand.u32 %v69, 4294901760
    %1523 = vmatmul.mubr.f32.gmra.mxu0 %v1522
    %v1524 = vpop.f32.mrf.mxu0
    %v1525 = vadd.f32 %v1431, %v1524
    %v1526 = vpop.f32.mrf.mxu0
    %1527 = vdwg.mxu0
    %1528 = vmatprep.subr.mxu0 0.0
    %1529 = vmatpush1.msra.mxu0 0.0
    %1530 = vmatprep.subr.mxu0 0.0
    %1531 = vmatpush1.msra.mxu0 0.0
    %1532 = vmatprep.subr.mxu0 0.0
    %1533 = vmatpush1.msra.mxu0 0.0
    %1534 = vmatprep.subr.mxu0 0.0
    %1535 = vmatpush1.msra.mxu0 0.0
    %1536 = vmatprep.subr.mxu0 0.0
    %1537 = vmatpush1.msra.mxu0 0.0
    %1538 = vmatprep.subr.mxu0 0.0
    %1539 = vmatpush1.msra.mxu0 0.0
    %1540 = vmatprep.subr.mxu0 0.0
    %1541 = vmatpush1.msra.mxu0 0.0
    %1542 = vmatprep.subr.mxu0 0.0
    %1543 = vmatpush1.msra.mxu0 0.0
    %1544 = vmatprep.subr.mxu0 0.0
    %1545 = vmatpush1.msra.mxu0 0.0
    %1546 = vmatprep.subr.mxu0 0.0
    %1547 = vmatpush1.msra.mxu0 0.0
    %1548 = vmatprep.subr.mxu0 0.0
    %1549 = vmatpush1.msra.mxu0 0.0
    %1550 = vmatprep.subr.mxu0 0.0
    %1551 = vmatpush1.msra.mxu0 0.0
    %1552 = vmatprep.subr.mxu0 0.0
    %1553 = vmatpush1.msra.mxu0 0.0
    %1554 = vmatprep.subr.mxu0 0.0
    %1555 = vmatpush1.msra.mxu0 0.0
    %1556 = vmatprep.subr.mxu0 0.0
    %1557 = vmatpush1.msra.mxu0 0.0
    %1558 = vmatprep.subr.mxu0 0.0
    %v1559 = vand.u32 %v1326, 4294901760
    %v1560 = vsub.f32 %v1326, %v1559
    %1561 = vmatpush1.msra.mxu0 %v1560
    %1562 = vmatprep.subr.mxu0 0.0
    %1563 = vmatpush2.msra.mxu0 0.0
    %1564 = vmatprep.subr.mxu0 0.0
    %1565 = vmatpush2.msra.mxu0 0.0
    %1566 = vmatprep.subr.mxu0 0.0
    %1567 = vmatpush2.msra.mxu0 0.0
    %1568 = vmatprep.subr.mxu0 0.0
    %1569 = vmatpush2.msra.mxu0 0.0
    %1570 = vmatprep.subr.mxu0 0.0
    %1571 = vmatpush2.msra.mxu0 0.0
    %1572 = vmatprep.subr.mxu0 0.0
    %1573 = vmatpush2.msra.mxu0 0.0
    %1574 = vmatprep.subr.mxu0 0.0
    %1575 = vmatpush2.msra.mxu0 0.0
    %1576 = vmatprep.subr.mxu0 0.0
    %1577 = vmatpush2.msra.mxu0 0.0
    %1578 = vmatprep.subr.mxu0 0.0
    %1579 = vmatpush2.msra.mxu0 0.0
    %1580 = vmatprep.subr.mxu0 0.0
    %1581 = vmatpush2.msra.mxu0 0.0
    %1582 = vmatprep.subr.mxu0 0.0
    %1583 = vmatpush2.msra.mxu0 0.0
    %1584 = vmatprep.subr.mxu0 0.0
    %1585 = vmatpush2.msra.mxu0 0.0
    %1586 = vmatprep.subr.mxu0 0.0
    %1587 = vmatpush2.msra.mxu0 0.0
    %1588 = vmatprep.subr.mxu0 0.0
    %1589 = vmatpush2.msra.mxu0 0.0
    %1590 = vmatprep.subr.mxu0 0.0
    %1591 = vmatpush2.msra.mxu0 0.0
    %1592 = vmatprep.subr.mxu0 0.0
    %1593 = vmatpush2.msra.mxu0 0.0
    %1594 = vmatprep.mubr.f32.mxu0 0.0
    %v1595 = vand.u32 %v63, 4294901760
    %v1596 = vsub.f32 %v63, %v1595
    %1597 = vmatmul.mubr.f32.gmra.mxu0 %v1596
    %v1598 = vpop.f32.mrf.mxu0
    %v1599 = vadd.f32 %v1507, %v1598
    %v1600 = vpop.f32.mrf.mxu0
    %1601 = vmatprep.mubr.f32.mxu0 0.0
    %v1602 = vand.u32 %v65, 4294901760
    %v1603 = vsub.f32 %v65, %v1602
    %1604 = vmatmul.mubr.f32.gmra.mxu0 %v1603
    %v1605 = vpop.f32.mrf.mxu0
    %v1606 = vadd.f32 %v1513, %v1605
    %v1607 = vpop.f32.mrf.mxu0
    %1608 = vmatprep.mubr.f32.mxu0 0.0
    %v1609 = vand.u32 %v67, 4294901760
    %v1610 = vsub.f32 %v67, %v1609
    %1611 = vmatmul.mubr.f32.gmra.mxu0 %v1610
    %v1612 = vpop.f32.mrf.mxu0
    %v1613 = vadd.f32 %v1519, %v1612
    %v1614 = vpop.f32.mrf.mxu0
    %1615 = vmatprep.mubr.f32.mxu0 0.0
    %v1616 = vand.u32 %v69, 4294901760
    %v1617 = vsub.f32 %v69, %v1616
    %1618 = vmatmul.mubr.f32.gmra.mxu0 %v1617
    %v1619 = vpop.f32.mrf.mxu0
    %v1620 = vadd.f32 %v1525, %v1619
    %v1621 = vpop.f32.mrf.mxu0
    %1622 = vdwg.mxu0
    %1623 = vmatprep.subr.mxu0 0.0
    %1624 = vmatpush1.msra.mxu0 0.0
    %1625 = vmatprep.subr.mxu0 0.0
    %1626 = vmatpush1.msra.mxu0 0.0
    %1627 = vmatprep.subr.mxu0 0.0
    %1628 = vmatpush1.msra.mxu0 0.0
    %1629 = vmatprep.subr.mxu0 0.0
    %1630 = vmatpush1.msra.mxu0 0.0
    %1631 = vmatprep.subr.mxu0 0.0
    %1632 = vmatpush1.msra.mxu0 0.0
    %1633 = vmatprep.subr.mxu0 0.0
    %1634 = vmatpush1.msra.mxu0 0.0
    %1635 = vmatprep.subr.mxu0 0.0
    %1636 = vmatpush1.msra.mxu0 0.0
    %1637 = vmatprep.subr.mxu0 0.0
    %1638 = vmatpush1.msra.mxu0 0.0
    %1639 = vmatprep.subr.mxu0 0.0
    %1640 = vmatpush1.msra.mxu0 0.0
    %1641 = vmatprep.subr.mxu0 0.0
    %1642 = vmatpush1.msra.mxu0 0.0
    %1643 = vmatprep.subr.mxu0 0.0
    %1644 = vmatpush1.msra.mxu0 0.0
    %1645 = vmatprep.subr.mxu0 0.0
    %1646 = vmatpush1.msra.mxu0 0.0
    %1647 = vmatprep.subr.mxu0 0.0
    %1648 = vmatpush1.msra.mxu0 0.0
    %1649 = vmatprep.subr.mxu0 0.0
    %1650 = vmatpush1.msra.mxu0 0.0
    %1651 = vmatprep.subr.mxu0 0.0
    %1652 = vmatpush1.msra.mxu0 0.0
    %1653 = vmatprep.subr.mxu0 0.0
    %v1654 = vand.u32 %v1326, 4294901760
    %1655 = vmatpush1.msra.mxu0 %v1654
    %1656 = vmatprep.subr.mxu0 0.0
    %1657 = vmatpush2.msra.mxu0 0.0
    %1658 = vmatprep.subr.mxu0 0.0
    %1659 = vmatpush2.msra.mxu0 0.0
    %1660 = vmatprep.subr.mxu0 0.0
    %1661 = vmatpush2.msra.mxu0 0.0
    %1662 = vmatprep.subr.mxu0 0.0
    %1663 = vmatpush2.msra.mxu0 0.0
    %1664 = vmatprep.subr.mxu0 0.0
    %1665 = vmatpush2.msra.mxu0 0.0
    %1666 = vmatprep.subr.mxu0 0.0
    %1667 = vmatpush2.msra.mxu0 0.0
    %1668 = vmatprep.subr.mxu0 0.0
    %1669 = vmatpush2.msra.mxu0 0.0
    %1670 = vmatprep.subr.mxu0 0.0
    %1671 = vmatpush2.msra.mxu0 0.0
    %1672 = vmatprep.subr.mxu0 0.0
    %1673 = vmatpush2.msra.mxu0 0.0
    %1674 = vmatprep.subr.mxu0 0.0
    %1675 = vmatpush2.msra.mxu0 0.0
    %1676 = vmatprep.subr.mxu0 0.0
    %1677 = vmatpush2.msra.mxu0 0.0
    %1678 = vmatprep.subr.mxu0 0.0
    %1679 = vmatpush2.msra.mxu0 0.0
    %1680 = vmatprep.subr.mxu0 0.0
    %1681 = vmatpush2.msra.mxu0 0.0
    %1682 = vmatprep.subr.mxu0 0.0
    %1683 = vmatpush2.msra.mxu0 0.0
    %1684 = vmatprep.subr.mxu0 0.0
    %1685 = vmatpush2.msra.mxu0 0.0
    %1686 = vmatprep.subr.mxu0 0.0
    %1687 = vmatpush2.msra.mxu0 0.0
    %1688 = vmatprep.mubr.f32.mxu0 0.0
    %v1689 = vand.u32 %v63, 4294901760
    %v1690 = vsub.f32 %v63, %v1689
    %v1691 = vand.u32 %v1690, 4294901760
    %1692 = vmatmul.mubr.f32.gmra.mxu0 %v1691
    %v1693 = vpop.f32.mrf.mxu0
    %v1694 = vadd.f32 %v1599, %v1693
    %v1695 = vpop.f32.mrf.mxu0
    %1696 = vmatprep.mubr.f32.mxu0 0.0
    %v1697 = vand.u32 %v65, 4294901760
    %v1698 = vsub.f32 %v65, %v1697
    %v1699 = vand.u32 %v1698, 4294901760
    %1700 = vmatmul.mubr.f32.gmra.mxu0 %v1699
    %v1701 = vpop.f32.mrf.mxu0
    %v1702 = vadd.f32 %v1606, %v1701
    %v1703 = vpop.f32.mrf.mxu0
    %1704 = vmatprep.mubr.f32.mxu0 0.0
    %v1705 = vand.u32 %v67, 4294901760
    %v1706 = vsub.f32 %v67, %v1705
    %v1707 = vand.u32 %v1706, 4294901760
    %1708 = vmatmul.mubr.f32.gmra.mxu0 %v1707
    %v1709 = vpop.f32.mrf.mxu0
    %v1710 = vadd.f32 %v1613, %v1709
    %v1711 = vpop.f32.mrf.mxu0
    %1712 = vmatprep.mubr.f32.mxu0 0.0
    %v1713 = vand.u32 %v69, 4294901760
    %v1714 = vsub.f32 %v69, %v1713
    %v1715 = vand.u32 %v1714, 4294901760
    %1716 = vmatmul.mubr.f32.gmra.mxu0 %v1715
    %v1717 = vpop.f32.mrf.mxu0
    %v1718 = vadd.f32 %v1620, %v1717
    %v1719 = vpop.f32.mrf.mxu0
    %1720 = vdwg.mxu0
    %1721 = vmatprep.subr.mxu0 0.0
    %1722 = vmatpush1.msra.mxu0 0.0
    %1723 = vmatprep.subr.mxu0 0.0
    %1724 = vmatpush1.msra.mxu0 0.0
    %1725 = vmatprep.subr.mxu0 0.0
    %1726 = vmatpush1.msra.mxu0 0.0
    %1727 = vmatprep.subr.mxu0 0.0
    %1728 = vmatpush1.msra.mxu0 0.0
    %1729 = vmatprep.subr.mxu0 0.0
    %1730 = vmatpush1.msra.mxu0 0.0
    %1731 = vmatprep.subr.mxu0 0.0
    %1732 = vmatpush1.msra.mxu0 0.0
    %1733 = vmatprep.subr.mxu0 0.0
    %1734 = vmatpush1.msra.mxu0 0.0
    %1735 = vmatprep.subr.mxu0 0.0
    %1736 = vmatpush1.msra.mxu0 0.0
    %1737 = vmatprep.subr.mxu0 0.0
    %1738 = vmatpush1.msra.mxu0 0.0
    %1739 = vmatprep.subr.mxu0 0.0
    %1740 = vmatpush1.msra.mxu0 0.0
    %1741 = vmatprep.subr.mxu0 0.0
    %1742 = vmatpush1.msra.mxu0 0.0
    %1743 = vmatprep.subr.mxu0 0.0
    %1744 = vmatpush1.msra.mxu0 0.0
    %1745 = vmatprep.subr.mxu0 0.0
    %1746 = vmatpush1.msra.mxu0 0.0
    %1747 = vmatprep.subr.mxu0 0.0
    %1748 = vmatpush1.msra.mxu0 0.0
    %1749 = vmatprep.subr.mxu0 0.0
    %1750 = vmatpush1.msra.mxu0 0.0
    %1751 = vmatprep.subr.mxu0 0.0
    %v1752 = vand.u32 %v1326, 4294901760
    %v1753 = vsub.f32 %v1326, %v1752
    %v1754 = vand.u32 %v1753, 4294901760
    %1755 = vmatpush1.msra.mxu0 %v1754
    %1756 = vmatprep.subr.mxu0 0.0
    %1757 = vmatpush2.msra.mxu0 0.0
    %1758 = vmatprep.subr.mxu0 0.0
    %1759 = vmatpush2.msra.mxu0 0.0
    %1760 = vmatprep.subr.mxu0 0.0
    %1761 = vmatpush2.msra.mxu0 0.0
    %1762 = vmatprep.subr.mxu0 0.0
    %1763 = vmatpush2.msra.mxu0 0.0
    %1764 = vmatprep.subr.mxu0 0.0
    %1765 = vmatpush2.msra.mxu0 0.0
    %1766 = vmatprep.subr.mxu0 0.0
    %1767 = vmatpush2.msra.mxu0 0.0
    %1768 = vmatprep.subr.mxu0 0.0
    %1769 = vmatpush2.msra.mxu0 0.0
    %1770 = vmatprep.subr.mxu0 0.0
    %1771 = vmatpush2.msra.mxu0 0.0
    %1772 = vmatprep.subr.mxu0 0.0
    %1773 = vmatpush2.msra.mxu0 0.0
    %1774 = vmatprep.subr.mxu0 0.0
    %1775 = vmatpush2.msra.mxu0 0.0
    %1776 = vmatprep.subr.mxu0 0.0
    %1777 = vmatpush2.msra.mxu0 0.0
    %1778 = vmatprep.subr.mxu0 0.0
    %1779 = vmatpush2.msra.mxu0 0.0
    %1780 = vmatprep.subr.mxu0 0.0
    %1781 = vmatpush2.msra.mxu0 0.0
    %1782 = vmatprep.subr.mxu0 0.0
    %1783 = vmatpush2.msra.mxu0 0.0
    %1784 = vmatprep.subr.mxu0 0.0
    %1785 = vmatpush2.msra.mxu0 0.0
    %1786 = vmatprep.subr.mxu0 0.0
    %1787 = vmatpush2.msra.mxu0 0.0
    %1788 = vmatprep.mubr.f32.mxu0 0.0
    %v1789 = vand.u32 %v63, 4294901760
    %1790 = vmatmul.mubr.f32.gmra.mxu0 %v1789
    %v1791 = vpop.f32.mrf.mxu0
    %v1792 = vadd.f32 %v1694, %v1791
    %v1793 = vpop.f32.mrf.mxu0
    %1794 = vmatprep.mubr.f32.mxu0 0.0
    %v1795 = vand.u32 %v65, 4294901760
    %1796 = vmatmul.mubr.f32.gmra.mxu0 %v1795
    %v1797 = vpop.f32.mrf.mxu0
    %v1798 = vadd.f32 %v1702, %v1797
    %v1799 = vpop.f32.mrf.mxu0
    %1800 = vmatprep.mubr.f32.mxu0 0.0
    %v1801 = vand.u32 %v67, 4294901760
    %1802 = vmatmul.mubr.f32.gmra.mxu0 %v1801
    %v1803 = vpop.f32.mrf.mxu0
    %v1804 = vadd.f32 %v1710, %v1803
    %v1805 = vpop.f32.mrf.mxu0
    %1806 = vmatprep.mubr.f32.mxu0 0.0
    %v1807 = vand.u32 %v69, 4294901760
    %1808 = vmatmul.mubr.f32.gmra.mxu0 %v1807
    %v1809 = vpop.f32.mrf.mxu0
    %v1810 = vadd.f32 %v1718, %v1809
    %v1811 = vpop.f32.mrf.mxu0
    %1812 = vdwg.mxu0
    %1813 = vmatprep.subr.mxu0 0.0
    %1814 = vmatpush1.msra.mxu0 0.0
    %1815 = vmatprep.subr.mxu0 0.0
    %1816 = vmatpush1.msra.mxu0 0.0
    %1817 = vmatprep.subr.mxu0 0.0
    %1818 = vmatpush1.msra.mxu0 0.0
    %1819 = vmatprep.subr.mxu0 0.0
    %1820 = vmatpush1.msra.mxu0 0.0
    %1821 = vmatprep.subr.mxu0 0.0
    %1822 = vmatpush1.msra.mxu0 0.0
    %1823 = vmatprep.subr.mxu0 0.0
    %1824 = vmatpush1.msra.mxu0 0.0
    %1825 = vmatprep.subr.mxu0 0.0
    %1826 = vmatpush1.msra.mxu0 0.0
    %1827 = vmatprep.subr.mxu0 0.0
    %1828 = vmatpush1.msra.mxu0 0.0
    %1829 = vmatprep.subr.mxu0 0.0
    %1830 = vmatpush1.msra.mxu0 0.0
    %1831 = vmatprep.subr.mxu0 0.0
    %1832 = vmatpush1.msra.mxu0 0.0
    %1833 = vmatprep.subr.mxu0 0.0
    %1834 = vmatpush1.msra.mxu0 0.0
    %1835 = vmatprep.subr.mxu0 0.0
    %1836 = vmatpush1.msra.mxu0 0.0
    %1837 = vmatprep.subr.mxu0 0.0
    %1838 = vmatpush1.msra.mxu0 0.0
    %1839 = vmatprep.subr.mxu0 0.0
    %1840 = vmatpush1.msra.mxu0 0.0
    %1841 = vmatprep.subr.mxu0 0.0
    %1842 = vmatpush1.msra.mxu0 0.0
    %1843 = vmatprep.subr.mxu0 0.0
    %v1844 = vand.u32 %v1326, 4294901760
    %1845 = vmatpush1.msra.mxu0 %v1844
    %1846 = vmatprep.subr.mxu0 0.0
    %1847 = vmatpush2.msra.mxu0 0.0
    %1848 = vmatprep.subr.mxu0 0.0
    %1849 = vmatpush2.msra.mxu0 0.0
    %1850 = vmatprep.subr.mxu0 0.0
    %1851 = vmatpush2.msra.mxu0 0.0
    %1852 = vmatprep.subr.mxu0 0.0
    %1853 = vmatpush2.msra.mxu0 0.0
    %1854 = vmatprep.subr.mxu0 0.0
    %1855 = vmatpush2.msra.mxu0 0.0
    %1856 = vmatprep.subr.mxu0 0.0
    %1857 = vmatpush2.msra.mxu0 0.0
    %1858 = vmatprep.subr.mxu0 0.0
    %1859 = vmatpush2.msra.mxu0 0.0
    %1860 = vmatprep.subr.mxu0 0.0
    %1861 = vmatpush2.msra.mxu0 0.0
    %1862 = vmatprep.subr.mxu0 0.0
    %1863 = vmatpush2.msra.mxu0 0.0
    %1864 = vmatprep.subr.mxu0 0.0
    %1865 = vmatpush2.msra.mxu0 0.0
    %1866 = vmatprep.subr.mxu0 0.0
    %1867 = vmatpush2.msra.mxu0 0.0
    %1868 = vmatprep.subr.mxu0 0.0
    %1869 = vmatpush2.msra.mxu0 0.0
    %1870 = vmatprep.subr.mxu0 0.0
    %1871 = vmatpush2.msra.mxu0 0.0
    %1872 = vmatprep.subr.mxu0 0.0
    %1873 = vmatpush2.msra.mxu0 0.0
    %1874 = vmatprep.subr.mxu0 0.0
    %1875 = vmatpush2.msra.mxu0 0.0
    %1876 = vmatprep.subr.mxu0 0.0
    %1877 = vmatpush2.msra.mxu0 0.0
    %1878 = vmatprep.mubr.f32.mxu0 0.0
    %v1879 = vand.u32 %v63, 4294901760
    %1880 = vmatmul.mubr.f32.gmra.mxu0 %v1879
    %v1881 = vpop.f32.mrf.mxu0
    %v1882 = vadd.f32 %v1792, %v1881
    %v1883 = vpop.f32.mrf.mxu0
    %1884 = vmatprep.mubr.f32.mxu0 0.0
    %v1885 = vand.u32 %v65, 4294901760
    %1886 = vmatmul.mubr.f32.gmra.mxu0 %v1885
    %v1887 = vpop.f32.mrf.mxu0
    %v1888 = vadd.f32 %v1798, %v1887
    %v1889 = vpop.f32.mrf.mxu0
    %1890 = vmatprep.mubr.f32.mxu0 0.0
    %v1891 = vand.u32 %v67, 4294901760
    %1892 = vmatmul.mubr.f32.gmra.mxu0 %v1891
    %v1893 = vpop.f32.mrf.mxu0
    %v1894 = vadd.f32 %v1804, %v1893
    %v1895 = vpop.f32.mrf.mxu0
    %1896 = vmatprep.mubr.f32.mxu0 0.0
    %v1897 = vand.u32 %v69, 4294901760
    %1898 = vmatmul.mubr.f32.gmra.mxu0 %v1897
    %v1899 = vpop.f32.mrf.mxu0
    %v1900 = vadd.f32 %v1810, %v1899
    %v1901 = vpop.f32.mrf.mxu0
    %1902 = vdwg.mxu0
    %1907 = vrot.lane.b32.xlu0 %v1882, 12
    %v1908 = vpop.permute.xlu0 %1907
    %1909 = vrot.lane.b32.xlu0 %v1888, 12
    %v1910 = vpop.permute.xlu0 %1909
    %1911 = vrot.lane.b32.xlu0 %v1894, 12
    %v1912 = vpop.permute.xlu0 %1911
    %1913 = vrot.lane.b32.xlu0 %v1900, 12
    %v1914 = vpop.permute.xlu0 %1913
    %v1919 = vadd.f32 %v1320, %v1908
    %v1920 = vadd.f32 %v1321, %v1910
    %v1921 = vadd.f32 %v1322, %v1912
    %v1922 = vadd.f32 %v1323, %v1914
    %v1923 = vxor.u32 %v1919, 2147483648
    %v1924 = vxor.u32 %v1920, 2147483648
    %v1925 = vmul.f32 %v1923, 1.442695
    %v1926 = vpow.pop %v1925
    %v1927 = vmul.f32 %v1924, 1.442695
    %v1928 = vpow.pop %v1927
    %v1929 = vadd.f32 %v1926, 1.0
    %v1930 = vadd.f32 %v1928, 1.0
    %v1931 = vrcp.pop %v1929
    %v1932 = vmul.f32 1.0, %v1931
    %v1933 = vrcp.pop %v1930
    %v1934 = vmul.f32 1.0, %v1933
    %v1935 = vxor.u32 %v1922, 2147483648
    %v1936 = vmul.f32 %v1935, 1.442695
    %v1937 = vpow.pop %v1936
    %v1938 = vadd.f32 %v1937, 1.0
    %v1939 = vrcp.pop %v1938
    %v1940 = vmul.f32 1.0, %v1939
    %v1941 = vtanh.pop %v1921
    %v1942 = vmul.f32 %v1934, %v1309
    %v1943 = vmul.f32 %v1932, %v1941
    %v1944 = vadd.f32 %v1942, %v1943
    %v1945 = vtanh.pop %v1944
    %v1946 = vmul.f32 %v1940, %v1945
    %v1947 = vlaneseq
    %v1948 = vshrl.u32 %v1947, 7
    %v1949 = vsub.s32 3, %v1948
    %v1950 = vrot.slane %v9, %v1949
    %v1951 = vmul.f32 %v17, %v1950
    %v1952 = vmul.f32 %v22, %v1950
    %v1953 = vmul.f32 %v27, %v1950
    %v1954 = vmul.f32 %v32, %v1950
    %v1955 = vadd.f32 %v1951, %v44
    %v1956 = vadd.f32 %v1952, %v48
    %v1957 = vadd.f32 %v1953, %v52
    %v1958 = vadd.f32 %v1954, %v56
    %1960 = vrot.lane.b32.xlu0 %v1946, 116
    %v1961 = vpop.permute.xlu0 %1960
    %1963 = vmatprep.subr.mxu0 0.0
    %1964 = vmatpush1.msra.mxu0 0.0
    %1965 = vmatprep.subr.mxu0 0.0
    %1966 = vmatpush1.msra.mxu0 0.0
    %1967 = vmatprep.subr.mxu0 0.0
    %1968 = vmatpush1.msra.mxu0 0.0
    %1969 = vmatprep.subr.mxu0 0.0
    %1970 = vmatpush1.msra.mxu0 0.0
    %1971 = vmatprep.subr.mxu0 0.0
    %1972 = vmatpush1.msra.mxu0 0.0
    %1973 = vmatprep.subr.mxu0 0.0
    %1974 = vmatpush1.msra.mxu0 0.0
    %1975 = vmatprep.subr.mxu0 0.0
    %1976 = vmatpush1.msra.mxu0 0.0
    %1977 = vmatprep.subr.mxu0 0.0
    %1978 = vmatpush1.msra.mxu0 0.0
    %1979 = vmatprep.subr.mxu0 0.0
    %1980 = vmatpush1.msra.mxu0 0.0
    %1981 = vmatprep.subr.mxu0 0.0
    %1982 = vmatpush1.msra.mxu0 0.0
    %1983 = vmatprep.subr.mxu0 0.0
    %1984 = vmatpush1.msra.mxu0 0.0
    %1985 = vmatprep.subr.mxu0 0.0
    %1986 = vmatpush1.msra.mxu0 0.0
    %1987 = vmatprep.subr.mxu0 0.0
    %1988 = vmatpush1.msra.mxu0 0.0
    %1989 = vmatprep.subr.mxu0 0.0
    %1990 = vmatpush1.msra.mxu0 0.0
    %1991 = vmatprep.subr.mxu0 0.0
    %1992 = vmatpush1.msra.mxu0 0.0
    %1993 = vmatprep.subr.mxu0 0.0
    %v1994 = vand.u32 %v1961, 4294901760
    %1995 = vmatpush1.msra.mxu0 %v1994
    %1996 = vmatprep.subr.mxu0 0.0
    %1997 = vmatpush2.msra.mxu0 0.0
    %1998 = vmatprep.subr.mxu0 0.0
    %1999 = vmatpush2.msra.mxu0 0.0
    %2000 = vmatprep.subr.mxu0 0.0
    %2001 = vmatpush2.msra.mxu0 0.0
    %2002 = vmatprep.subr.mxu0 0.0
    %2003 = vmatpush2.msra.mxu0 0.0
    %2004 = vmatprep.subr.mxu0 0.0
    %2005 = vmatpush2.msra.mxu0 0.0
    %2006 = vmatprep.subr.mxu0 0.0
    %2007 = vmatpush2.msra.mxu0 0.0
    %2008 = vmatprep.subr.mxu0 0.0
    %2009 = vmatpush2.msra.mxu0 0.0
    %2010 = vmatprep.subr.mxu0 0.0
    %2011 = vmatpush2.msra.mxu0 0.0
    %2012 = vmatprep.subr.mxu0 0.0
    %2013 = vmatpush2.msra.mxu0 0.0
    %2014 = vmatprep.subr.mxu0 0.0
    %2015 = vmatpush2.msra.mxu0 0.0
    %2016 = vmatprep.subr.mxu0 0.0
    %2017 = vmatpush2.msra.mxu0 0.0
    %2018 = vmatprep.subr.mxu0 0.0
    %2019 = vmatpush2.msra.mxu0 0.0
    %2020 = vmatprep.subr.mxu0 0.0
    %2021 = vmatpush2.msra.mxu0 0.0
    %2022 = vmatprep.subr.mxu0 0.0
    %2023 = vmatpush2.msra.mxu0 0.0
    %2024 = vmatprep.subr.mxu0 0.0
    %2025 = vmatpush2.msra.mxu0 0.0
    %2026 = vmatprep.subr.mxu0 0.0
    %2027 = vmatpush2.msra.mxu0 0.0
    %2028 = vmatprep.mubr.f32.mxu0 0.0
    %v2029 = vand.u32 %v63, 4294901760
    %v2030 = vsub.f32 %v63, %v2029
    %v2031 = vand.u32 %v2030, 4294901760
    %v2032 = vsub.f32 %v2030, %v2031
    %v2033 = vand.u32 %v2032, 4294901760
    %2034 = vmatmul.mubr.f32.gmra.mxu0 %v2033
    %v2035 = vpop.f32.mrf.mxu0
    %v2036 = vadd.f32 0.0, %v2035
    %v2037 = vpop.f32.mrf.mxu0
    %2038 = vmatprep.mubr.f32.mxu0 0.0
    %v2039 = vand.u32 %v65, 4294901760
    %v2040 = vsub.f32 %v65, %v2039
    %v2041 = vand.u32 %v2040, 4294901760
    %v2042 = vsub.f32 %v2040, %v2041
    %v2043 = vand.u32 %v2042, 4294901760
    %2044 = vmatmul.mubr.f32.gmra.mxu0 %v2043
    %v2045 = vpop.f32.mrf.mxu0
    %v2046 = vadd.f32 0.0, %v2045
    %v2047 = vpop.f32.mrf.mxu0
    %2048 = vmatprep.mubr.f32.mxu0 0.0
    %v2049 = vand.u32 %v67, 4294901760
    %v2050 = vsub.f32 %v67, %v2049
    %v2051 = vand.u32 %v2050, 4294901760
    %v2052 = vsub.f32 %v2050, %v2051
    %v2053 = vand.u32 %v2052, 4294901760
    %2054 = vmatmul.mubr.f32.gmra.mxu0 %v2053
    %v2055 = vpop.f32.mrf.mxu0
    %v2056 = vadd.f32 0.0, %v2055
    %v2057 = vpop.f32.mrf.mxu0
    %2058 = vmatprep.mubr.f32.mxu0 0.0
    %v2059 = vand.u32 %v69, 4294901760
    %v2060 = vsub.f32 %v69, %v2059
    %v2061 = vand.u32 %v2060, 4294901760
    %v2062 = vsub.f32 %v2060, %v2061
    %v2063 = vand.u32 %v2062, 4294901760
    %2064 = vmatmul.mubr.f32.gmra.mxu0 %v2063
    %v2065 = vpop.f32.mrf.mxu0
    %v2066 = vadd.f32 0.0, %v2065
    %v2067 = vpop.f32.mrf.mxu0
    %2068 = vdwg.mxu0
    %2069 = vmatprep.subr.mxu0 0.0
    %2070 = vmatpush1.msra.mxu0 0.0
    %2071 = vmatprep.subr.mxu0 0.0
    %2072 = vmatpush1.msra.mxu0 0.0
    %2073 = vmatprep.subr.mxu0 0.0
    %2074 = vmatpush1.msra.mxu0 0.0
    %2075 = vmatprep.subr.mxu0 0.0
    %2076 = vmatpush1.msra.mxu0 0.0
    %2077 = vmatprep.subr.mxu0 0.0
    %2078 = vmatpush1.msra.mxu0 0.0
    %2079 = vmatprep.subr.mxu0 0.0
    %2080 = vmatpush1.msra.mxu0 0.0
    %2081 = vmatprep.subr.mxu0 0.0
    %2082 = vmatpush1.msra.mxu0 0.0
    %2083 = vmatprep.subr.mxu0 0.0
    %2084 = vmatpush1.msra.mxu0 0.0
    %2085 = vmatprep.subr.mxu0 0.0
    %2086 = vmatpush1.msra.mxu0 0.0
    %2087 = vmatprep.subr.mxu0 0.0
    %2088 = vmatpush1.msra.mxu0 0.0
    %2089 = vmatprep.subr.mxu0 0.0
    %2090 = vmatpush1.msra.mxu0 0.0
    %2091 = vmatprep.subr.mxu0 0.0
    %2092 = vmatpush1.msra.mxu0 0.0
    %2093 = vmatprep.subr.mxu0 0.0
    %2094 = vmatpush1.msra.mxu0 0.0
    %2095 = vmatprep.subr.mxu0 0.0
    %2096 = vmatpush1.msra.mxu0 0.0
    %2097 = vmatprep.subr.mxu0 0.0
    %2098 = vmatpush1.msra.mxu0 0.0
    %2099 = vmatprep.subr.mxu0 0.0
    %v2100 = vand.u32 %v1961, 4294901760
    %v2101 = vsub.f32 %v1961, %v2100
    %v2102 = vand.u32 %v2101, 4294901760
    %v2103 = vsub.f32 %v2101, %v2102
    %v2104 = vand.u32 %v2103, 4294901760
    %2105 = vmatpush1.msra.mxu0 %v2104
    %2106 = vmatprep.subr.mxu0 0.0
    %2107 = vmatpush2.msra.mxu0 0.0
    %2108 = vmatprep.subr.mxu0 0.0
    %2109 = vmatpush2.msra.mxu0 0.0
    %2110 = vmatprep.subr.mxu0 0.0
    %2111 = vmatpush2.msra.mxu0 0.0
    %2112 = vmatprep.subr.mxu0 0.0
    %2113 = vmatpush2.msra.mxu0 0.0
    %2114 = vmatprep.subr.mxu0 0.0
    %2115 = vmatpush2.msra.mxu0 0.0
    %2116 = vmatprep.subr.mxu0 0.0
    %2117 = vmatpush2.msra.mxu0 0.0
    %2118 = vmatprep.subr.mxu0 0.0
    %2119 = vmatpush2.msra.mxu0 0.0
    %2120 = vmatprep.subr.mxu0 0.0
    %2121 = vmatpush2.msra.mxu0 0.0
    %2122 = vmatprep.subr.mxu0 0.0
    %2123 = vmatpush2.msra.mxu0 0.0
    %2124 = vmatprep.subr.mxu0 0.0
    %2125 = vmatpush2.msra.mxu0 0.0
    %2126 = vmatprep.subr.mxu0 0.0
    %2127 = vmatpush2.msra.mxu0 0.0
    %2128 = vmatprep.subr.mxu0 0.0
    %2129 = vmatpush2.msra.mxu0 0.0
    %2130 = vmatprep.subr.mxu0 0.0
    %2131 = vmatpush2.msra.mxu0 0.0
    %2132 = vmatprep.subr.mxu0 0.0
    %2133 = vmatpush2.msra.mxu0 0.0
    %2134 = vmatprep.subr.mxu0 0.0
    %2135 = vmatpush2.msra.mxu0 0.0
    %2136 = vmatprep.subr.mxu0 0.0
    %2137 = vmatpush2.msra.mxu0 0.0
    %2138 = vmatprep.mubr.f32.mxu0 0.0
    %v2139 = vand.u32 %v63, 4294901760
    %2140 = vmatmul.mubr.f32.gmra.mxu0 %v2139
    %v2141 = vpop.f32.mrf.mxu0
    %v2142 = vadd.f32 %v2036, %v2141
    %v2143 = vpop.f32.mrf.mxu0
    %2144 = vmatprep.mubr.f32.mxu0 0.0
    %v2145 = vand.u32 %v65, 4294901760
    %2146 = vmatmul.mubr.f32.gmra.mxu0 %v2145
    %v2147 = vpop.f32.mrf.mxu0
    %v2148 = vadd.f32 %v2046, %v2147
    %v2149 = vpop.f32.mrf.mxu0
    %2150 = vmatprep.mubr.f32.mxu0 0.0
    %v2151 = vand.u32 %v67, 4294901760
    %2152 = vmatmul.mubr.f32.gmra.mxu0 %v2151
    %v2153 = vpop.f32.mrf.mxu0
    %v2154 = vadd.f32 %v2056, %v2153
    %v2155 = vpop.f32.mrf.mxu0
    %2156 = vmatprep.mubr.f32.mxu0 0.0
    %v2157 = vand.u32 %v69, 4294901760
    %2158 = vmatmul.mubr.f32.gmra.mxu0 %v2157
    %v2159 = vpop.f32.mrf.mxu0
    %v2160 = vadd.f32 %v2066, %v2159
    %v2161 = vpop.f32.mrf.mxu0
    %2162 = vdwg.mxu0
    %2163 = vmatprep.subr.mxu0 0.0
    %2164 = vmatpush1.msra.mxu0 0.0
    %2165 = vmatprep.subr.mxu0 0.0
    %2166 = vmatpush1.msra.mxu0 0.0
    %2167 = vmatprep.subr.mxu0 0.0
    %2168 = vmatpush1.msra.mxu0 0.0
    %2169 = vmatprep.subr.mxu0 0.0
    %2170 = vmatpush1.msra.mxu0 0.0
    %2171 = vmatprep.subr.mxu0 0.0
    %2172 = vmatpush1.msra.mxu0 0.0
    %2173 = vmatprep.subr.mxu0 0.0
    %2174 = vmatpush1.msra.mxu0 0.0
    %2175 = vmatprep.subr.mxu0 0.0
    %2176 = vmatpush1.msra.mxu0 0.0
    %2177 = vmatprep.subr.mxu0 0.0
    %2178 = vmatpush1.msra.mxu0 0.0
    %2179 = vmatprep.subr.mxu0 0.0
    %2180 = vmatpush1.msra.mxu0 0.0
    %2181 = vmatprep.subr.mxu0 0.0
    %2182 = vmatpush1.msra.mxu0 0.0
    %2183 = vmatprep.subr.mxu0 0.0
    %2184 = vmatpush1.msra.mxu0 0.0
    %2185 = vmatprep.subr.mxu0 0.0
    %2186 = vmatpush1.msra.mxu0 0.0
    %2187 = vmatprep.subr.mxu0 0.0
    %2188 = vmatpush1.msra.mxu0 0.0
    %2189 = vmatprep.subr.mxu0 0.0
    %2190 = vmatpush1.msra.mxu0 0.0
    %2191 = vmatprep.subr.mxu0 0.0
    %2192 = vmatpush1.msra.mxu0 0.0
    %2193 = vmatprep.subr.mxu0 0.0
    %v2194 = vand.u32 %v1961, 4294901760
    %v2195 = vsub.f32 %v1961, %v2194
    %2196 = vmatpush1.msra.mxu0 %v2195
    %2197 = vmatprep.subr.mxu0 0.0
    %2198 = vmatpush2.msra.mxu0 0.0
    %2199 = vmatprep.subr.mxu0 0.0
    %2200 = vmatpush2.msra.mxu0 0.0
    %2201 = vmatprep.subr.mxu0 0.0
    %2202 = vmatpush2.msra.mxu0 0.0
    %2203 = vmatprep.subr.mxu0 0.0
    %2204 = vmatpush2.msra.mxu0 0.0
    %2205 = vmatprep.subr.mxu0 0.0
    %2206 = vmatpush2.msra.mxu0 0.0
    %2207 = vmatprep.subr.mxu0 0.0
    %2208 = vmatpush2.msra.mxu0 0.0
    %2209 = vmatprep.subr.mxu0 0.0
    %2210 = vmatpush2.msra.mxu0 0.0
    %2211 = vmatprep.subr.mxu0 0.0
    %2212 = vmatpush2.msra.mxu0 0.0
    %2213 = vmatprep.subr.mxu0 0.0
    %2214 = vmatpush2.msra.mxu0 0.0
    %2215 = vmatprep.subr.mxu0 0.0
    %2216 = vmatpush2.msra.mxu0 0.0
    %2217 = vmatprep.subr.mxu0 0.0
    %2218 = vmatpush2.msra.mxu0 0.0
    %2219 = vmatprep.subr.mxu0 0.0
    %2220 = vmatpush2.msra.mxu0 0.0
    %2221 = vmatprep.subr.mxu0 0.0
    %2222 = vmatpush2.msra.mxu0 0.0
    %2223 = vmatprep.subr.mxu0 0.0
    %2224 = vmatpush2.msra.mxu0 0.0
    %2225 = vmatprep.subr.mxu0 0.0
    %2226 = vmatpush2.msra.mxu0 0.0
    %2227 = vmatprep.subr.mxu0 0.0
    %2228 = vmatpush2.msra.mxu0 0.0
    %2229 = vmatprep.mubr.f32.mxu0 0.0
    %v2230 = vand.u32 %v63, 4294901760
    %v2231 = vsub.f32 %v63, %v2230
    %2232 = vmatmul.mubr.f32.gmra.mxu0 %v2231
    %v2233 = vpop.f32.mrf.mxu0
    %v2234 = vadd.f32 %v2142, %v2233
    %v2235 = vpop.f32.mrf.mxu0
    %2236 = vmatprep.mubr.f32.mxu0 0.0
    %v2237 = vand.u32 %v65, 4294901760
    %v2238 = vsub.f32 %v65, %v2237
    %2239 = vmatmul.mubr.f32.gmra.mxu0 %v2238
    %v2240 = vpop.f32.mrf.mxu0
    %v2241 = vadd.f32 %v2148, %v2240
    %v2242 = vpop.f32.mrf.mxu0
    %2243 = vmatprep.mubr.f32.mxu0 0.0
    %v2244 = vand.u32 %v67, 4294901760
    %v2245 = vsub.f32 %v67, %v2244
    %2246 = vmatmul.mubr.f32.gmra.mxu0 %v2245
    %v2247 = vpop.f32.mrf.mxu0
    %v2248 = vadd.f32 %v2154, %v2247
    %v2249 = vpop.f32.mrf.mxu0
    %2250 = vmatprep.mubr.f32.mxu0 0.0
    %v2251 = vand.u32 %v69, 4294901760
    %v2252 = vsub.f32 %v69, %v2251
    %2253 = vmatmul.mubr.f32.gmra.mxu0 %v2252
    %v2254 = vpop.f32.mrf.mxu0
    %v2255 = vadd.f32 %v2160, %v2254
    %v2256 = vpop.f32.mrf.mxu0
    %2257 = vdwg.mxu0
    %2258 = vmatprep.subr.mxu0 0.0
    %2259 = vmatpush1.msra.mxu0 0.0
    %2260 = vmatprep.subr.mxu0 0.0
    %2261 = vmatpush1.msra.mxu0 0.0
    %2262 = vmatprep.subr.mxu0 0.0
    %2263 = vmatpush1.msra.mxu0 0.0
    %2264 = vmatprep.subr.mxu0 0.0
    %2265 = vmatpush1.msra.mxu0 0.0
    %2266 = vmatprep.subr.mxu0 0.0
    %2267 = vmatpush1.msra.mxu0 0.0
    %2268 = vmatprep.subr.mxu0 0.0
    %2269 = vmatpush1.msra.mxu0 0.0
    %2270 = vmatprep.subr.mxu0 0.0
    %2271 = vmatpush1.msra.mxu0 0.0
    %2272 = vmatprep.subr.mxu0 0.0
    %2273 = vmatpush1.msra.mxu0 0.0
    %2274 = vmatprep.subr.mxu0 0.0
    %2275 = vmatpush1.msra.mxu0 0.0
    %2276 = vmatprep.subr.mxu0 0.0
    %2277 = vmatpush1.msra.mxu0 0.0
    %2278 = vmatprep.subr.mxu0 0.0
    %2279 = vmatpush1.msra.mxu0 0.0
    %2280 = vmatprep.subr.mxu0 0.0
    %2281 = vmatpush1.msra.mxu0 0.0
    %2282 = vmatprep.subr.mxu0 0.0
    %2283 = vmatpush1.msra.mxu0 0.0
    %2284 = vmatprep.subr.mxu0 0.0
    %2285 = vmatpush1.msra.mxu0 0.0
    %2286 = vmatprep.subr.mxu0 0.0
    %2287 = vmatpush1.msra.mxu0 0.0
    %2288 = vmatprep.subr.mxu0 0.0
    %v2289 = vand.u32 %v1961, 4294901760
    %2290 = vmatpush1.msra.mxu0 %v2289
    %2291 = vmatprep.subr.mxu0 0.0
    %2292 = vmatpush2.msra.mxu0 0.0
    %2293 = vmatprep.subr.mxu0 0.0
    %2294 = vmatpush2.msra.mxu0 0.0
    %2295 = vmatprep.subr.mxu0 0.0
    %2296 = vmatpush2.msra.mxu0 0.0
    %2297 = vmatprep.subr.mxu0 0.0
    %2298 = vmatpush2.msra.mxu0 0.0
    %2299 = vmatprep.subr.mxu0 0.0
    %2300 = vmatpush2.msra.mxu0 0.0
    %2301 = vmatprep.subr.mxu0 0.0
    %2302 = vmatpush2.msra.mxu0 0.0
    %2303 = vmatprep.subr.mxu0 0.0
    %2304 = vmatpush2.msra.mxu0 0.0
    %2305 = vmatprep.subr.mxu0 0.0
    %2306 = vmatpush2.msra.mxu0 0.0
    %2307 = vmatprep.subr.mxu0 0.0
    %2308 = vmatpush2.msra.mxu0 0.0
    %2309 = vmatprep.subr.mxu0 0.0
    %2310 = vmatpush2.msra.mxu0 0.0
    %2311 = vmatprep.subr.mxu0 0.0
    %2312 = vmatpush2.msra.mxu0 0.0
    %2313 = vmatprep.subr.mxu0 0.0
    %2314 = vmatpush2.msra.mxu0 0.0
    %2315 = vmatprep.subr.mxu0 0.0
    %2316 = vmatpush2.msra.mxu0 0.0
    %2317 = vmatprep.subr.mxu0 0.0
    %2318 = vmatpush2.msra.mxu0 0.0
    %2319 = vmatprep.subr.mxu0 0.0
    %2320 = vmatpush2.msra.mxu0 0.0
    %2321 = vmatprep.subr.mxu0 0.0
    %2322 = vmatpush2.msra.mxu0 0.0
    %2323 = vmatprep.mubr.f32.mxu0 0.0
    %v2324 = vand.u32 %v63, 4294901760
    %v2325 = vsub.f32 %v63, %v2324
    %v2326 = vand.u32 %v2325, 4294901760
    %2327 = vmatmul.mubr.f32.gmra.mxu0 %v2326
    %v2328 = vpop.f32.mrf.mxu0
    %v2329 = vadd.f32 %v2234, %v2328
    %v2330 = vpop.f32.mrf.mxu0
    %2331 = vmatprep.mubr.f32.mxu0 0.0
    %v2332 = vand.u32 %v65, 4294901760
    %v2333 = vsub.f32 %v65, %v2332
    %v2334 = vand.u32 %v2333, 4294901760
    %2335 = vmatmul.mubr.f32.gmra.mxu0 %v2334
    %v2336 = vpop.f32.mrf.mxu0
    %v2337 = vadd.f32 %v2241, %v2336
    %v2338 = vpop.f32.mrf.mxu0
    %2339 = vmatprep.mubr.f32.mxu0 0.0
    %v2340 = vand.u32 %v67, 4294901760
    %v2341 = vsub.f32 %v67, %v2340
    %v2342 = vand.u32 %v2341, 4294901760
    %2343 = vmatmul.mubr.f32.gmra.mxu0 %v2342
    %v2344 = vpop.f32.mrf.mxu0
    %v2345 = vadd.f32 %v2248, %v2344
    %v2346 = vpop.f32.mrf.mxu0
    %2347 = vmatprep.mubr.f32.mxu0 0.0
    %v2348 = vand.u32 %v69, 4294901760
    %v2349 = vsub.f32 %v69, %v2348
    %v2350 = vand.u32 %v2349, 4294901760
    %2351 = vmatmul.mubr.f32.gmra.mxu0 %v2350
    %v2352 = vpop.f32.mrf.mxu0
    %v2353 = vadd.f32 %v2255, %v2352
    %v2354 = vpop.f32.mrf.mxu0
    %2355 = vdwg.mxu0
    %2356 = vmatprep.subr.mxu0 0.0
    %2357 = vmatpush1.msra.mxu0 0.0
    %2358 = vmatprep.subr.mxu0 0.0
    %2359 = vmatpush1.msra.mxu0 0.0
    %2360 = vmatprep.subr.mxu0 0.0
    %2361 = vmatpush1.msra.mxu0 0.0
    %2362 = vmatprep.subr.mxu0 0.0
    %2363 = vmatpush1.msra.mxu0 0.0
    %2364 = vmatprep.subr.mxu0 0.0
    %2365 = vmatpush1.msra.mxu0 0.0
    %2366 = vmatprep.subr.mxu0 0.0
    %2367 = vmatpush1.msra.mxu0 0.0
    %2368 = vmatprep.subr.mxu0 0.0
    %2369 = vmatpush1.msra.mxu0 0.0
    %2370 = vmatprep.subr.mxu0 0.0
    %2371 = vmatpush1.msra.mxu0 0.0
    %2372 = vmatprep.subr.mxu0 0.0
    %2373 = vmatpush1.msra.mxu0 0.0
    %2374 = vmatprep.subr.mxu0 0.0
    %2375 = vmatpush1.msra.mxu0 0.0
    %2376 = vmatprep.subr.mxu0 0.0
    %2377 = vmatpush1.msra.mxu0 0.0
    %2378 = vmatprep.subr.mxu0 0.0
    %2379 = vmatpush1.msra.mxu0 0.0
    %2380 = vmatprep.subr.mxu0 0.0
    %2381 = vmatpush1.msra.mxu0 0.0
    %2382 = vmatprep.subr.mxu0 0.0
    %2383 = vmatpush1.msra.mxu0 0.0
    %2384 = vmatprep.subr.mxu0 0.0
    %2385 = vmatpush1.msra.mxu0 0.0
    %2386 = vmatprep.subr.mxu0 0.0
    %v2387 = vand.u32 %v1961, 4294901760
    %v2388 = vsub.f32 %v1961, %v2387
    %v2389 = vand.u32 %v2388, 4294901760
    %2390 = vmatpush1.msra.mxu0 %v2389
    %2391 = vmatprep.subr.mxu0 0.0
    %2392 = vmatpush2.msra.mxu0 0.0
    %2393 = vmatprep.subr.mxu0 0.0
    %2394 = vmatpush2.msra.mxu0 0.0
    %2395 = vmatprep.subr.mxu0 0.0
    %2396 = vmatpush2.msra.mxu0 0.0
    %2397 = vmatprep.subr.mxu0 0.0
    %2398 = vmatpush2.msra.mxu0 0.0
    %2399 = vmatprep.subr.mxu0 0.0
    %2400 = vmatpush2.msra.mxu0 0.0
    %2401 = vmatprep.subr.mxu0 0.0
    %2402 = vmatpush2.msra.mxu0 0.0
    %2403 = vmatprep.subr.mxu0 0.0
    %2404 = vmatpush2.msra.mxu0 0.0
    %2405 = vmatprep.subr.mxu0 0.0
    %2406 = vmatpush2.msra.mxu0 0.0
    %2407 = vmatprep.subr.mxu0 0.0
    %2408 = vmatpush2.msra.mxu0 0.0
    %2409 = vmatprep.subr.mxu0 0.0
    %2410 = vmatpush2.msra.mxu0 0.0
    %2411 = vmatprep.subr.mxu0 0.0
    %2412 = vmatpush2.msra.mxu0 0.0
    %2413 = vmatprep.subr.mxu0 0.0
    %2414 = vmatpush2.msra.mxu0 0.0
    %2415 = vmatprep.subr.mxu0 0.0
    %2416 = vmatpush2.msra.mxu0 0.0
    %2417 = vmatprep.subr.mxu0 0.0
    %2418 = vmatpush2.msra.mxu0 0.0
    %2419 = vmatprep.subr.mxu0 0.0
    %2420 = vmatpush2.msra.mxu0 0.0
    %2421 = vmatprep.subr.mxu0 0.0
    %2422 = vmatpush2.msra.mxu0 0.0
    %2423 = vmatprep.mubr.f32.mxu0 0.0
    %v2424 = vand.u32 %v63, 4294901760
    %2425 = vmatmul.mubr.f32.gmra.mxu0 %v2424
    %v2426 = vpop.f32.mrf.mxu0
    %v2427 = vadd.f32 %v2329, %v2426
    %v2428 = vpop.f32.mrf.mxu0
    %2429 = vmatprep.mubr.f32.mxu0 0.0
    %v2430 = vand.u32 %v65, 4294901760
    %2431 = vmatmul.mubr.f32.gmra.mxu0 %v2430
    %v2432 = vpop.f32.mrf.mxu0
    %v2433 = vadd.f32 %v2337, %v2432
    %v2434 = vpop.f32.mrf.mxu0
    %2435 = vmatprep.mubr.f32.mxu0 0.0
    %v2436 = vand.u32 %v67, 4294901760
    %2437 = vmatmul.mubr.f32.gmra.mxu0 %v2436
    %v2438 = vpop.f32.mrf.mxu0
    %v2439 = vadd.f32 %v2345, %v2438
    %v2440 = vpop.f32.mrf.mxu0
    %2441 = vmatprep.mubr.f32.mxu0 0.0
    %v2442 = vand.u32 %v69, 4294901760
    %2443 = vmatmul.mubr.f32.gmra.mxu0 %v2442
    %v2444 = vpop.f32.mrf.mxu0
    %v2445 = vadd.f32 %v2353, %v2444
    %v2446 = vpop.f32.mrf.mxu0
    %2447 = vdwg.mxu0
    %2448 = vmatprep.subr.mxu0 0.0
    %2449 = vmatpush1.msra.mxu0 0.0
    %2450 = vmatprep.subr.mxu0 0.0
    %2451 = vmatpush1.msra.mxu0 0.0
    %2452 = vmatprep.subr.mxu0 0.0
    %2453 = vmatpush1.msra.mxu0 0.0
    %2454 = vmatprep.subr.mxu0 0.0
    %2455 = vmatpush1.msra.mxu0 0.0
    %2456 = vmatprep.subr.mxu0 0.0
    %2457 = vmatpush1.msra.mxu0 0.0
    %2458 = vmatprep.subr.mxu0 0.0
    %2459 = vmatpush1.msra.mxu0 0.0
    %2460 = vmatprep.subr.mxu0 0.0
    %2461 = vmatpush1.msra.mxu0 0.0
    %2462 = vmatprep.subr.mxu0 0.0
    %2463 = vmatpush1.msra.mxu0 0.0
    %2464 = vmatprep.subr.mxu0 0.0
    %2465 = vmatpush1.msra.mxu0 0.0
    %2466 = vmatprep.subr.mxu0 0.0
    %2467 = vmatpush1.msra.mxu0 0.0
    %2468 = vmatprep.subr.mxu0 0.0
    %2469 = vmatpush1.msra.mxu0 0.0
    %2470 = vmatprep.subr.mxu0 0.0
    %2471 = vmatpush1.msra.mxu0 0.0
    %2472 = vmatprep.subr.mxu0 0.0
    %2473 = vmatpush1.msra.mxu0 0.0
    %2474 = vmatprep.subr.mxu0 0.0
    %2475 = vmatpush1.msra.mxu0 0.0
    %2476 = vmatprep.subr.mxu0 0.0
    %2477 = vmatpush1.msra.mxu0 0.0
    %2478 = vmatprep.subr.mxu0 0.0
    %v2479 = vand.u32 %v1961, 4294901760
    %2480 = vmatpush1.msra.mxu0 %v2479
    %2481 = vmatprep.subr.mxu0 0.0
    %2482 = vmatpush2.msra.mxu0 0.0
    %2483 = vmatprep.subr.mxu0 0.0
    %2484 = vmatpush2.msra.mxu0 0.0
    %2485 = vmatprep.subr.mxu0 0.0
    %2486 = vmatpush2.msra.mxu0 0.0
    %2487 = vmatprep.subr.mxu0 0.0
    %2488 = vmatpush2.msra.mxu0 0.0
    %2489 = vmatprep.subr.mxu0 0.0
    %2490 = vmatpush2.msra.mxu0 0.0
    %2491 = vmatprep.subr.mxu0 0.0
    %2492 = vmatpush2.msra.mxu0 0.0
    %2493 = vmatprep.subr.mxu0 0.0
    %2494 = vmatpush2.msra.mxu0 0.0
    %2495 = vmatprep.subr.mxu0 0.0
    %2496 = vmatpush2.msra.mxu0 0.0
    %2497 = vmatprep.subr.mxu0 0.0
    %2498 = vmatpush2.msra.mxu0 0.0
    %2499 = vmatprep.subr.mxu0 0.0
    %2500 = vmatpush2.msra.mxu0 0.0
    %2501 = vmatprep.subr.mxu0 0.0
    %2502 = vmatpush2.msra.mxu0 0.0
    %2503 = vmatprep.subr.mxu0 0.0
    %2504 = vmatpush2.msra.mxu0 0.0
    %2505 = vmatprep.subr.mxu0 0.0
    %2506 = vmatpush2.msra.mxu0 0.0
    %2507 = vmatprep.subr.mxu0 0.0
    %2508 = vmatpush2.msra.mxu0 0.0
    %2509 = vmatprep.subr.mxu0 0.0
    %2510 = vmatpush2.msra.mxu0 0.0
    %2511 = vmatprep.subr.mxu0 0.0
    %2512 = vmatpush2.msra.mxu0 0.0
    %2513 = vmatprep.mubr.f32.mxu0 0.0
    %v2514 = vand.u32 %v63, 4294901760
    %2515 = vmatmul.mubr.f32.gmra.mxu0 %v2514
    %v2516 = vpop.f32.mrf.mxu0
    %v2517 = vadd.f32 %v2427, %v2516
    %v2518 = vpop.f32.mrf.mxu0
    %2519 = vmatprep.mubr.f32.mxu0 0.0
    %v2520 = vand.u32 %v65, 4294901760
    %2521 = vmatmul.mubr.f32.gmra.mxu0 %v2520
    %v2522 = vpop.f32.mrf.mxu0
    %v2523 = vadd.f32 %v2433, %v2522
    %v2524 = vpop.f32.mrf.mxu0
    %2525 = vmatprep.mubr.f32.mxu0 0.0
    %v2526 = vand.u32 %v67, 4294901760
    %2527 = vmatmul.mubr.f32.gmra.mxu0 %v2526
    %v2528 = vpop.f32.mrf.mxu0
    %v2529 = vadd.f32 %v2439, %v2528
    %v2530 = vpop.f32.mrf.mxu0
    %2531 = vmatprep.mubr.f32.mxu0 0.0
    %v2532 = vand.u32 %v69, 4294901760
    %2533 = vmatmul.mubr.f32.gmra.mxu0 %v2532
    %v2534 = vpop.f32.mrf.mxu0
    %v2535 = vadd.f32 %v2445, %v2534
    %v2536 = vpop.f32.mrf.mxu0
    %2537 = vdwg.mxu0
    %2542 = vrot.lane.b32.xlu0 %v2517, 12
    %v2543 = vpop.permute.xlu0 %2542
    %2544 = vrot.lane.b32.xlu0 %v2523, 12
    %v2545 = vpop.permute.xlu0 %2544
    %2546 = vrot.lane.b32.xlu0 %v2529, 12
    %v2547 = vpop.permute.xlu0 %2546
    %2548 = vrot.lane.b32.xlu0 %v2535, 12
    %v2549 = vpop.permute.xlu0 %2548
    %v2554 = vadd.f32 %v1955, %v2543
    %v2555 = vadd.f32 %v1956, %v2545
    %v2556 = vadd.f32 %v1957, %v2547
    %v2557 = vadd.f32 %v1958, %v2549
    %v2558 = vxor.u32 %v2554, 2147483648
    %v2559 = vxor.u32 %v2555, 2147483648
    %v2560 = vmul.f32 %v2558, 1.442695
    %v2561 = vpow.pop %v2560
    %v2562 = vmul.f32 %v2559, 1.442695
    %v2563 = vpow.pop %v2562
    %v2564 = vadd.f32 %v2561, 1.0
    %v2565 = vadd.f32 %v2563, 1.0
    %v2566 = vrcp.pop %v2564
    %v2567 = vmul.f32 1.0, %v2566
    %v2568 = vrcp.pop %v2565
    %v2569 = vmul.f32 1.0, %v2568
    %v2570 = vxor.u32 %v2557, 2147483648
    %v2571 = vmul.f32 %v2570, 1.442695
    %v2572 = vpow.pop %v2571
    %v2573 = vadd.f32 %v2572, 1.0
    %v2574 = vrcp.pop %v2573
    %v2575 = vmul.f32 1.0, %v2574
    %v2576 = vtanh.pop %v2556
    %v2577 = vmul.f32 %v2569, %v1944
    %v2578 = vmul.f32 %v2567, %v2576
    %v2579 = vadd.f32 %v2577, %v2578
    %v2580 = vtanh.pop %v2579
    %v2581 = vmul.f32 %v2575, %v2580
    %v2582 = vlaneseq
    %v2583 = vshrl.u32 %v2582, 7
    %v2584 = vsub.s32 4, %v2583
    %v2585 = vrot.slane %v9, %v2584
    %v2586 = vmul.f32 %v17, %v2585
    %v2587 = vmul.f32 %v22, %v2585
    %v2588 = vmul.f32 %v27, %v2585
    %v2589 = vmul.f32 %v32, %v2585
    %v2590 = vadd.f32 %v2586, %v44
    %v2591 = vadd.f32 %v2587, %v48
    %v2592 = vadd.f32 %v2588, %v52
    %v2593 = vadd.f32 %v2589, %v56
    %2595 = vrot.lane.b32.xlu0 %v2581, 116
    %v2596 = vpop.permute.xlu0 %2595
    %2598 = vmatprep.subr.mxu0 0.0
    %2599 = vmatpush1.msra.mxu0 0.0
    %2600 = vmatprep.subr.mxu0 0.0
    %2601 = vmatpush1.msra.mxu0 0.0
    %2602 = vmatprep.subr.mxu0 0.0
    %2603 = vmatpush1.msra.mxu0 0.0
    %2604 = vmatprep.subr.mxu0 0.0
    %2605 = vmatpush1.msra.mxu0 0.0
    %2606 = vmatprep.subr.mxu0 0.0
    %2607 = vmatpush1.msra.mxu0 0.0
    %2608 = vmatprep.subr.mxu0 0.0
    %2609 = vmatpush1.msra.mxu0 0.0
    %2610 = vmatprep.subr.mxu0 0.0
    %2611 = vmatpush1.msra.mxu0 0.0
    %2612 = vmatprep.subr.mxu0 0.0
    %2613 = vmatpush1.msra.mxu0 0.0
    %2614 = vmatprep.subr.mxu0 0.0
    %2615 = vmatpush1.msra.mxu0 0.0
    %2616 = vmatprep.subr.mxu0 0.0
    %2617 = vmatpush1.msra.mxu0 0.0
    %2618 = vmatprep.subr.mxu0 0.0
    %2619 = vmatpush1.msra.mxu0 0.0
    %2620 = vmatprep.subr.mxu0 0.0
    %2621 = vmatpush1.msra.mxu0 0.0
    %2622 = vmatprep.subr.mxu0 0.0
    %2623 = vmatpush1.msra.mxu0 0.0
    %2624 = vmatprep.subr.mxu0 0.0
    %2625 = vmatpush1.msra.mxu0 0.0
    %2626 = vmatprep.subr.mxu0 0.0
    %2627 = vmatpush1.msra.mxu0 0.0
    %2628 = vmatprep.subr.mxu0 0.0
    %v2629 = vand.u32 %v2596, 4294901760
    %2630 = vmatpush1.msra.mxu0 %v2629
    %2631 = vmatprep.subr.mxu0 0.0
    %2632 = vmatpush2.msra.mxu0 0.0
    %2633 = vmatprep.subr.mxu0 0.0
    %2634 = vmatpush2.msra.mxu0 0.0
    %2635 = vmatprep.subr.mxu0 0.0
    %2636 = vmatpush2.msra.mxu0 0.0
    %2637 = vmatprep.subr.mxu0 0.0
    %2638 = vmatpush2.msra.mxu0 0.0
    %2639 = vmatprep.subr.mxu0 0.0
    %2640 = vmatpush2.msra.mxu0 0.0
    %2641 = vmatprep.subr.mxu0 0.0
    %2642 = vmatpush2.msra.mxu0 0.0
    %2643 = vmatprep.subr.mxu0 0.0
    %2644 = vmatpush2.msra.mxu0 0.0
    %2645 = vmatprep.subr.mxu0 0.0
    %2646 = vmatpush2.msra.mxu0 0.0
    %2647 = vmatprep.subr.mxu0 0.0
    %2648 = vmatpush2.msra.mxu0 0.0
    %2649 = vmatprep.subr.mxu0 0.0
    %2650 = vmatpush2.msra.mxu0 0.0
    %2651 = vmatprep.subr.mxu0 0.0
    %2652 = vmatpush2.msra.mxu0 0.0
    %2653 = vmatprep.subr.mxu0 0.0
    %2654 = vmatpush2.msra.mxu0 0.0
    %2655 = vmatprep.subr.mxu0 0.0
    %2656 = vmatpush2.msra.mxu0 0.0
    %2657 = vmatprep.subr.mxu0 0.0
    %2658 = vmatpush2.msra.mxu0 0.0
    %2659 = vmatprep.subr.mxu0 0.0
    %2660 = vmatpush2.msra.mxu0 0.0
    %2661 = vmatprep.subr.mxu0 0.0
    %2662 = vmatpush2.msra.mxu0 0.0
    %2663 = vmatprep.mubr.f32.mxu0 0.0
    %v2664 = vand.u32 %v63, 4294901760
    %v2665 = vsub.f32 %v63, %v2664
    %v2666 = vand.u32 %v2665, 4294901760
    %v2667 = vsub.f32 %v2665, %v2666
    %v2668 = vand.u32 %v2667, 4294901760
    %2669 = vmatmul.mubr.f32.gmra.mxu0 %v2668
    %v2670 = vpop.f32.mrf.mxu0
    %v2671 = vadd.f32 0.0, %v2670
    %v2672 = vpop.f32.mrf.mxu0
    %2673 = vmatprep.mubr.f32.mxu0 0.0
    %v2674 = vand.u32 %v65, 4294901760
    %v2675 = vsub.f32 %v65, %v2674
    %v2676 = vand.u32 %v2675, 4294901760
    %v2677 = vsub.f32 %v2675, %v2676
    %v2678 = vand.u32 %v2677, 4294901760
    %2679 = vmatmul.mubr.f32.gmra.mxu0 %v2678
    %v2680 = vpop.f32.mrf.mxu0
    %v2681 = vadd.f32 0.0, %v2680
    %v2682 = vpop.f32.mrf.mxu0
    %2683 = vmatprep.mubr.f32.mxu0 0.0
    %v2684 = vand.u32 %v67, 4294901760
    %v2685 = vsub.f32 %v67, %v2684
    %v2686 = vand.u32 %v2685, 4294901760
    %v2687 = vsub.f32 %v2685, %v2686
    %v2688 = vand.u32 %v2687, 4294901760
    %2689 = vmatmul.mubr.f32.gmra.mxu0 %v2688
    %v2690 = vpop.f32.mrf.mxu0
    %v2691 = vadd.f32 0.0, %v2690
    %v2692 = vpop.f32.mrf.mxu0
    %2693 = vmatprep.mubr.f32.mxu0 0.0
    %v2694 = vand.u32 %v69, 4294901760
    %v2695 = vsub.f32 %v69, %v2694
    %v2696 = vand.u32 %v2695, 4294901760
    %v2697 = vsub.f32 %v2695, %v2696
    %v2698 = vand.u32 %v2697, 4294901760
    %2699 = vmatmul.mubr.f32.gmra.mxu0 %v2698
    %v2700 = vpop.f32.mrf.mxu0
    %v2701 = vadd.f32 0.0, %v2700
    %v2702 = vpop.f32.mrf.mxu0
    %2703 = vdwg.mxu0
    %2704 = vmatprep.subr.mxu0 0.0
    %2705 = vmatpush1.msra.mxu0 0.0
    %2706 = vmatprep.subr.mxu0 0.0
    %2707 = vmatpush1.msra.mxu0 0.0
    %2708 = vmatprep.subr.mxu0 0.0
    %2709 = vmatpush1.msra.mxu0 0.0
    %2710 = vmatprep.subr.mxu0 0.0
    %2711 = vmatpush1.msra.mxu0 0.0
    %2712 = vmatprep.subr.mxu0 0.0
    %2713 = vmatpush1.msra.mxu0 0.0
    %2714 = vmatprep.subr.mxu0 0.0
    %2715 = vmatpush1.msra.mxu0 0.0
    %2716 = vmatprep.subr.mxu0 0.0
    %2717 = vmatpush1.msra.mxu0 0.0
    %2718 = vmatprep.subr.mxu0 0.0
    %2719 = vmatpush1.msra.mxu0 0.0
    %2720 = vmatprep.subr.mxu0 0.0
    %2721 = vmatpush1.msra.mxu0 0.0
    %2722 = vmatprep.subr.mxu0 0.0
    %2723 = vmatpush1.msra.mxu0 0.0
    %2724 = vmatprep.subr.mxu0 0.0
    %2725 = vmatpush1.msra.mxu0 0.0
    %2726 = vmatprep.subr.mxu0 0.0
    %2727 = vmatpush1.msra.mxu0 0.0
    %2728 = vmatprep.subr.mxu0 0.0
    %2729 = vmatpush1.msra.mxu0 0.0
    %2730 = vmatprep.subr.mxu0 0.0
    %2731 = vmatpush1.msra.mxu0 0.0
    %2732 = vmatprep.subr.mxu0 0.0
    %2733 = vmatpush1.msra.mxu0 0.0
    %2734 = vmatprep.subr.mxu0 0.0
    %v2735 = vand.u32 %v2596, 4294901760
    %v2736 = vsub.f32 %v2596, %v2735
    %v2737 = vand.u32 %v2736, 4294901760
    %v2738 = vsub.f32 %v2736, %v2737
    %v2739 = vand.u32 %v2738, 4294901760
    %2740 = vmatpush1.msra.mxu0 %v2739
    %2741 = vmatprep.subr.mxu0 0.0
    %2742 = vmatpush2.msra.mxu0 0.0
    %2743 = vmatprep.subr.mxu0 0.0
    %2744 = vmatpush2.msra.mxu0 0.0
    %2745 = vmatprep.subr.mxu0 0.0
    %2746 = vmatpush2.msra.mxu0 0.0
    %2747 = vmatprep.subr.mxu0 0.0
    %2748 = vmatpush2.msra.mxu0 0.0
    %2749 = vmatprep.subr.mxu0 0.0
    %2750 = vmatpush2.msra.mxu0 0.0
    %2751 = vmatprep.subr.mxu0 0.0
    %2752 = vmatpush2.msra.mxu0 0.0
    %2753 = vmatprep.subr.mxu0 0.0
    %2754 = vmatpush2.msra.mxu0 0.0
    %2755 = vmatprep.subr.mxu0 0.0
    %2756 = vmatpush2.msra.mxu0 0.0
    %2757 = vmatprep.subr.mxu0 0.0
    %2758 = vmatpush2.msra.mxu0 0.0
    %2759 = vmatprep.subr.mxu0 0.0
    %2760 = vmatpush2.msra.mxu0 0.0
    %2761 = vmatprep.subr.mxu0 0.0
    %2762 = vmatpush2.msra.mxu0 0.0
    %2763 = vmatprep.subr.mxu0 0.0
    %2764 = vmatpush2.msra.mxu0 0.0
    %2765 = vmatprep.subr.mxu0 0.0
    %2766 = vmatpush2.msra.mxu0 0.0
    %2767 = vmatprep.subr.mxu0 0.0
    %2768 = vmatpush2.msra.mxu0 0.0
    %2769 = vmatprep.subr.mxu0 0.0
    %2770 = vmatpush2.msra.mxu0 0.0
    %2771 = vmatprep.subr.mxu0 0.0
    %2772 = vmatpush2.msra.mxu0 0.0
    %2773 = vmatprep.mubr.f32.mxu0 0.0
    %v2774 = vand.u32 %v63, 4294901760
    %2775 = vmatmul.mubr.f32.gmra.mxu0 %v2774
    %v2776 = vpop.f32.mrf.mxu0
    %v2777 = vadd.f32 %v2671, %v2776
    %v2778 = vpop.f32.mrf.mxu0
    %2779 = vmatprep.mubr.f32.mxu0 0.0
    %v2780 = vand.u32 %v65, 4294901760
    %2781 = vmatmul.mubr.f32.gmra.mxu0 %v2780
    %v2782 = vpop.f32.mrf.mxu0
    %v2783 = vadd.f32 %v2681, %v2782
    %v2784 = vpop.f32.mrf.mxu0
    %2785 = vmatprep.mubr.f32.mxu0 0.0
    %v2786 = vand.u32 %v67, 4294901760
    %2787 = vmatmul.mubr.f32.gmra.mxu0 %v2786
    %v2788 = vpop.f32.mrf.mxu0
    %v2789 = vadd.f32 %v2691, %v2788
    %v2790 = vpop.f32.mrf.mxu0
    %2791 = vmatprep.mubr.f32.mxu0 0.0
    %v2792 = vand.u32 %v69, 4294901760
    %2793 = vmatmul.mubr.f32.gmra.mxu0 %v2792
    %v2794 = vpop.f32.mrf.mxu0
    %v2795 = vadd.f32 %v2701, %v2794
    %v2796 = vpop.f32.mrf.mxu0
    %2797 = vdwg.mxu0
    %2798 = vmatprep.subr.mxu0 0.0
    %2799 = vmatpush1.msra.mxu0 0.0
    %2800 = vmatprep.subr.mxu0 0.0
    %2801 = vmatpush1.msra.mxu0 0.0
    %2802 = vmatprep.subr.mxu0 0.0
    %2803 = vmatpush1.msra.mxu0 0.0
    %2804 = vmatprep.subr.mxu0 0.0
    %2805 = vmatpush1.msra.mxu0 0.0
    %2806 = vmatprep.subr.mxu0 0.0
    %2807 = vmatpush1.msra.mxu0 0.0
    %2808 = vmatprep.subr.mxu0 0.0
    %2809 = vmatpush1.msra.mxu0 0.0
    %2810 = vmatprep.subr.mxu0 0.0
    %2811 = vmatpush1.msra.mxu0 0.0
    %2812 = vmatprep.subr.mxu0 0.0
    %2813 = vmatpush1.msra.mxu0 0.0
    %2814 = vmatprep.subr.mxu0 0.0
    %2815 = vmatpush1.msra.mxu0 0.0
    %2816 = vmatprep.subr.mxu0 0.0
    %2817 = vmatpush1.msra.mxu0 0.0
    %2818 = vmatprep.subr.mxu0 0.0
    %2819 = vmatpush1.msra.mxu0 0.0
    %2820 = vmatprep.subr.mxu0 0.0
    %2821 = vmatpush1.msra.mxu0 0.0
    %2822 = vmatprep.subr.mxu0 0.0
    %2823 = vmatpush1.msra.mxu0 0.0
    %2824 = vmatprep.subr.mxu0 0.0
    %2825 = vmatpush1.msra.mxu0 0.0
    %2826 = vmatprep.subr.mxu0 0.0
    %2827 = vmatpush1.msra.mxu0 0.0
    %2828 = vmatprep.subr.mxu0 0.0
    %v2829 = vand.u32 %v2596, 4294901760
    %v2830 = vsub.f32 %v2596, %v2829
    %2831 = vmatpush1.msra.mxu0 %v2830
    %2832 = vmatprep.subr.mxu0 0.0
    %2833 = vmatpush2.msra.mxu0 0.0
    %2834 = vmatprep.subr.mxu0 0.0
    %2835 = vmatpush2.msra.mxu0 0.0
    %2836 = vmatprep.subr.mxu0 0.0
    %2837 = vmatpush2.msra.mxu0 0.0
    %2838 = vmatprep.subr.mxu0 0.0
    %2839 = vmatpush2.msra.mxu0 0.0
    %2840 = vmatprep.subr.mxu0 0.0
    %2841 = vmatpush2.msra.mxu0 0.0
    %2842 = vmatprep.subr.mxu0 0.0
    %2843 = vmatpush2.msra.mxu0 0.0
    %2844 = vmatprep.subr.mxu0 0.0
    %2845 = vmatpush2.msra.mxu0 0.0
    %2846 = vmatprep.subr.mxu0 0.0
    %2847 = vmatpush2.msra.mxu0 0.0
    %2848 = vmatprep.subr.mxu0 0.0
    %2849 = vmatpush2.msra.mxu0 0.0
    %2850 = vmatprep.subr.mxu0 0.0
    %2851 = vmatpush2.msra.mxu0 0.0
    %2852 = vmatprep.subr.mxu0 0.0
    %2853 = vmatpush2.msra.mxu0 0.0
    %2854 = vmatprep.subr.mxu0 0.0
    %2855 = vmatpush2.msra.mxu0 0.0
    %2856 = vmatprep.subr.mxu0 0.0
    %2857 = vmatpush2.msra.mxu0 0.0
    %2858 = vmatprep.subr.mxu0 0.0
    %2859 = vmatpush2.msra.mxu0 0.0
    %2860 = vmatprep.subr.mxu0 0.0
    %2861 = vmatpush2.msra.mxu0 0.0
    %2862 = vmatprep.subr.mxu0 0.0
    %2863 = vmatpush2.msra.mxu0 0.0
    %2864 = vmatprep.mubr.f32.mxu0 0.0
    %v2865 = vand.u32 %v63, 4294901760
    %v2866 = vsub.f32 %v63, %v2865
    %2867 = vmatmul.mubr.f32.gmra.mxu0 %v2866
    %v2868 = vpop.f32.mrf.mxu0
    %v2869 = vadd.f32 %v2777, %v2868
    %v2870 = vpop.f32.mrf.mxu0
    %2871 = vmatprep.mubr.f32.mxu0 0.0
    %v2872 = vand.u32 %v65, 4294901760
    %v2873 = vsub.f32 %v65, %v2872
    %2874 = vmatmul.mubr.f32.gmra.mxu0 %v2873
    %v2875 = vpop.f32.mrf.mxu0
    %v2876 = vadd.f32 %v2783, %v2875
    %v2877 = vpop.f32.mrf.mxu0
    %2878 = vmatprep.mubr.f32.mxu0 0.0
    %v2879 = vand.u32 %v67, 4294901760
    %v2880 = vsub.f32 %v67, %v2879
    %2881 = vmatmul.mubr.f32.gmra.mxu0 %v2880
    %v2882 = vpop.f32.mrf.mxu0
    %v2883 = vadd.f32 %v2789, %v2882
    %v2884 = vpop.f32.mrf.mxu0
    %2885 = vmatprep.mubr.f32.mxu0 0.0
    %v2886 = vand.u32 %v69, 4294901760
    %v2887 = vsub.f32 %v69, %v2886
    %2888 = vmatmul.mubr.f32.gmra.mxu0 %v2887
    %v2889 = vpop.f32.mrf.mxu0
    %v2890 = vadd.f32 %v2795, %v2889
    %v2891 = vpop.f32.mrf.mxu0
    %2892 = vdwg.mxu0
    %2893 = vmatprep.subr.mxu0 0.0
    %2894 = vmatpush1.msra.mxu0 0.0
    %2895 = vmatprep.subr.mxu0 0.0
    %2896 = vmatpush1.msra.mxu0 0.0
    %2897 = vmatprep.subr.mxu0 0.0
    %2898 = vmatpush1.msra.mxu0 0.0
    %2899 = vmatprep.subr.mxu0 0.0
    %2900 = vmatpush1.msra.mxu0 0.0
    %2901 = vmatprep.subr.mxu0 0.0
    %2902 = vmatpush1.msra.mxu0 0.0
    %2903 = vmatprep.subr.mxu0 0.0
    %2904 = vmatpush1.msra.mxu0 0.0
    %2905 = vmatprep.subr.mxu0 0.0
    %2906 = vmatpush1.msra.mxu0 0.0
    %2907 = vmatprep.subr.mxu0 0.0
    %2908 = vmatpush1.msra.mxu0 0.0
    %2909 = vmatprep.subr.mxu0 0.0
    %2910 = vmatpush1.msra.mxu0 0.0
    %2911 = vmatprep.subr.mxu0 0.0
    %2912 = vmatpush1.msra.mxu0 0.0
    %2913 = vmatprep.subr.mxu0 0.0
    %2914 = vmatpush1.msra.mxu0 0.0
    %2915 = vmatprep.subr.mxu0 0.0
    %2916 = vmatpush1.msra.mxu0 0.0
    %2917 = vmatprep.subr.mxu0 0.0
    %2918 = vmatpush1.msra.mxu0 0.0
    %2919 = vmatprep.subr.mxu0 0.0
    %2920 = vmatpush1.msra.mxu0 0.0
    %2921 = vmatprep.subr.mxu0 0.0
    %2922 = vmatpush1.msra.mxu0 0.0
    %2923 = vmatprep.subr.mxu0 0.0
    %v2924 = vand.u32 %v2596, 4294901760
    %2925 = vmatpush1.msra.mxu0 %v2924
    %2926 = vmatprep.subr.mxu0 0.0
    %2927 = vmatpush2.msra.mxu0 0.0
    %2928 = vmatprep.subr.mxu0 0.0
    %2929 = vmatpush2.msra.mxu0 0.0
    %2930 = vmatprep.subr.mxu0 0.0
    %2931 = vmatpush2.msra.mxu0 0.0
    %2932 = vmatprep.subr.mxu0 0.0
    %2933 = vmatpush2.msra.mxu0 0.0
    %2934 = vmatprep.subr.mxu0 0.0
    %2935 = vmatpush2.msra.mxu0 0.0
    %2936 = vmatprep.subr.mxu0 0.0
    %2937 = vmatpush2.msra.mxu0 0.0
    %2938 = vmatprep.subr.mxu0 0.0
    %2939 = vmatpush2.msra.mxu0 0.0
    %2940 = vmatprep.subr.mxu0 0.0
    %2941 = vmatpush2.msra.mxu0 0.0
    %2942 = vmatprep.subr.mxu0 0.0
    %2943 = vmatpush2.msra.mxu0 0.0
    %2944 = vmatprep.subr.mxu0 0.0
    %2945 = vmatpush2.msra.mxu0 0.0
    %2946 = vmatprep.subr.mxu0 0.0
    %2947 = vmatpush2.msra.mxu0 0.0
    %2948 = vmatprep.subr.mxu0 0.0
    %2949 = vmatpush2.msra.mxu0 0.0
    %2950 = vmatprep.subr.mxu0 0.0
    %2951 = vmatpush2.msra.mxu0 0.0
    %2952 = vmatprep.subr.mxu0 0.0
    %2953 = vmatpush2.msra.mxu0 0.0
    %2954 = vmatprep.subr.mxu0 0.0
    %2955 = vmatpush2.msra.mxu0 0.0
    %2956 = vmatprep.subr.mxu0 0.0
    %2957 = vmatpush2.msra.mxu0 0.0
    %2958 = vmatprep.mubr.f32.mxu0 0.0
    %v2959 = vand.u32 %v63, 4294901760
    %v2960 = vsub.f32 %v63, %v2959
    %v2961 = vand.u32 %v2960, 4294901760
    %2962 = vmatmul.mubr.f32.gmra.mxu0 %v2961
    %v2963 = vpop.f32.mrf.mxu0
    %v2964 = vadd.f32 %v2869, %v2963
    %v2965 = vpop.f32.mrf.mxu0
    %2966 = vmatprep.mubr.f32.mxu0 0.0
    %v2967 = vand.u32 %v65, 4294901760
    %v2968 = vsub.f32 %v65, %v2967
    %v2969 = vand.u32 %v2968, 4294901760
    %2970 = vmatmul.mubr.f32.gmra.mxu0 %v2969
    %v2971 = vpop.f32.mrf.mxu0
    %v2972 = vadd.f32 %v2876, %v2971
    %v2973 = vpop.f32.mrf.mxu0
    %2974 = vmatprep.mubr.f32.mxu0 0.0
    %v2975 = vand.u32 %v67, 4294901760
    %v2976 = vsub.f32 %v67, %v2975
    %v2977 = vand.u32 %v2976, 4294901760
    %2978 = vmatmul.mubr.f32.gmra.mxu0 %v2977
    %v2979 = vpop.f32.mrf.mxu0
    %v2980 = vadd.f32 %v2883, %v2979
    %v2981 = vpop.f32.mrf.mxu0
    %2982 = vmatprep.mubr.f32.mxu0 0.0
    %v2983 = vand.u32 %v69, 4294901760
    %v2984 = vsub.f32 %v69, %v2983
    %v2985 = vand.u32 %v2984, 4294901760
    %2986 = vmatmul.mubr.f32.gmra.mxu0 %v2985
    %v2987 = vpop.f32.mrf.mxu0
    %v2988 = vadd.f32 %v2890, %v2987
    %v2989 = vpop.f32.mrf.mxu0
    %2990 = vdwg.mxu0
    %2991 = vmatprep.subr.mxu0 0.0
    %2992 = vmatpush1.msra.mxu0 0.0
    %2993 = vmatprep.subr.mxu0 0.0
    %2994 = vmatpush1.msra.mxu0 0.0
    %2995 = vmatprep.subr.mxu0 0.0
    %2996 = vmatpush1.msra.mxu0 0.0
    %2997 = vmatprep.subr.mxu0 0.0
    %2998 = vmatpush1.msra.mxu0 0.0
    %2999 = vmatprep.subr.mxu0 0.0
    %3000 = vmatpush1.msra.mxu0 0.0
    %3001 = vmatprep.subr.mxu0 0.0
    %3002 = vmatpush1.msra.mxu0 0.0
    %3003 = vmatprep.subr.mxu0 0.0
    %3004 = vmatpush1.msra.mxu0 0.0
    %3005 = vmatprep.subr.mxu0 0.0
    %3006 = vmatpush1.msra.mxu0 0.0
    %3007 = vmatprep.subr.mxu0 0.0
    %3008 = vmatpush1.msra.mxu0 0.0
    %3009 = vmatprep.subr.mxu0 0.0
    %3010 = vmatpush1.msra.mxu0 0.0
    %3011 = vmatprep.subr.mxu0 0.0
    %3012 = vmatpush1.msra.mxu0 0.0
    %3013 = vmatprep.subr.mxu0 0.0
    %3014 = vmatpush1.msra.mxu0 0.0
    %3015 = vmatprep.subr.mxu0 0.0
    %3016 = vmatpush1.msra.mxu0 0.0
    %3017 = vmatprep.subr.mxu0 0.0
    %3018 = vmatpush1.msra.mxu0 0.0
    %3019 = vmatprep.subr.mxu0 0.0
    %3020 = vmatpush1.msra.mxu0 0.0
    %3021 = vmatprep.subr.mxu0 0.0
    %v3022 = vand.u32 %v2596, 4294901760
    %v3023 = vsub.f32 %v2596, %v3022
    %v3024 = vand.u32 %v3023, 4294901760
    %3025 = vmatpush1.msra.mxu0 %v3024
    %3026 = vmatprep.subr.mxu0 0.0
    %3027 = vmatpush2.msra.mxu0 0.0
    %3028 = vmatprep.subr.mxu0 0.0
    %3029 = vmatpush2.msra.mxu0 0.0
    %3030 = vmatprep.subr.mxu0 0.0
    %3031 = vmatpush2.msra.mxu0 0.0
    %3032 = vmatprep.subr.mxu0 0.0
    %3033 = vmatpush2.msra.mxu0 0.0
    %3034 = vmatprep.subr.mxu0 0.0
    %3035 = vmatpush2.msra.mxu0 0.0
    %3036 = vmatprep.subr.mxu0 0.0
    %3037 = vmatpush2.msra.mxu0 0.0
    %3038 = vmatprep.subr.mxu0 0.0
    %3039 = vmatpush2.msra.mxu0 0.0
    %3040 = vmatprep.subr.mxu0 0.0
    %3041 = vmatpush2.msra.mxu0 0.0
    %3042 = vmatprep.subr.mxu0 0.0
    %3043 = vmatpush2.msra.mxu0 0.0
    %3044 = vmatprep.subr.mxu0 0.0
    %3045 = vmatpush2.msra.mxu0 0.0
    %3046 = vmatprep.subr.mxu0 0.0
    %3047 = vmatpush2.msra.mxu0 0.0
    %3048 = vmatprep.subr.mxu0 0.0
    %3049 = vmatpush2.msra.mxu0 0.0
    %3050 = vmatprep.subr.mxu0 0.0
    %3051 = vmatpush2.msra.mxu0 0.0
    %3052 = vmatprep.subr.mxu0 0.0
    %3053 = vmatpush2.msra.mxu0 0.0
    %3054 = vmatprep.subr.mxu0 0.0
    %3055 = vmatpush2.msra.mxu0 0.0
    %3056 = vmatprep.subr.mxu0 0.0
    %3057 = vmatpush2.msra.mxu0 0.0
    %3058 = vmatprep.mubr.f32.mxu0 0.0
    %v3059 = vand.u32 %v63, 4294901760
    %3060 = vmatmul.mubr.f32.gmra.mxu0 %v3059
    %v3061 = vpop.f32.mrf.mxu0
    %v3062 = vadd.f32 %v2964, %v3061
    %v3063 = vpop.f32.mrf.mxu0
    %3064 = vmatprep.mubr.f32.mxu0 0.0
    %v3065 = vand.u32 %v65, 4294901760
    %3066 = vmatmul.mubr.f32.gmra.mxu0 %v3065
    %v3067 = vpop.f32.mrf.mxu0
    %v3068 = vadd.f32 %v2972, %v3067
    %v3069 = vpop.f32.mrf.mxu0
    %3070 = vmatprep.mubr.f32.mxu0 0.0
    %v3071 = vand.u32 %v67, 4294901760
    %3072 = vmatmul.mubr.f32.gmra.mxu0 %v3071
    %v3073 = vpop.f32.mrf.mxu0
    %v3074 = vadd.f32 %v2980, %v3073
    %v3075 = vpop.f32.mrf.mxu0
    %3076 = vmatprep.mubr.f32.mxu0 0.0
    %v3077 = vand.u32 %v69, 4294901760
    %3078 = vmatmul.mubr.f32.gmra.mxu0 %v3077
    %v3079 = vpop.f32.mrf.mxu0
    %v3080 = vadd.f32 %v2988, %v3079
    %v3081 = vpop.f32.mrf.mxu0
    %3082 = vdwg.mxu0
    %3083 = vmatprep.subr.mxu0 0.0
    %3084 = vmatpush1.msra.mxu0 0.0
    %3085 = vmatprep.subr.mxu0 0.0
    %3086 = vmatpush1.msra.mxu0 0.0
    %3087 = vmatprep.subr.mxu0 0.0
    %3088 = vmatpush1.msra.mxu0 0.0
    %3089 = vmatprep.subr.mxu0 0.0
    %3090 = vmatpush1.msra.mxu0 0.0
    %3091 = vmatprep.subr.mxu0 0.0
    %3092 = vmatpush1.msra.mxu0 0.0
    %3093 = vmatprep.subr.mxu0 0.0
    %3094 = vmatpush1.msra.mxu0 0.0
    %3095 = vmatprep.subr.mxu0 0.0
    %3096 = vmatpush1.msra.mxu0 0.0
    %3097 = vmatprep.subr.mxu0 0.0
    %3098 = vmatpush1.msra.mxu0 0.0
    %3099 = vmatprep.subr.mxu0 0.0
    %3100 = vmatpush1.msra.mxu0 0.0
    %3101 = vmatprep.subr.mxu0 0.0
    %3102 = vmatpush1.msra.mxu0 0.0
    %3103 = vmatprep.subr.mxu0 0.0
    %3104 = vmatpush1.msra.mxu0 0.0
    %3105 = vmatprep.subr.mxu0 0.0
    %3106 = vmatpush1.msra.mxu0 0.0
    %3107 = vmatprep.subr.mxu0 0.0
    %3108 = vmatpush1.msra.mxu0 0.0
    %3109 = vmatprep.subr.mxu0 0.0
    %3110 = vmatpush1.msra.mxu0 0.0
    %3111 = vmatprep.subr.mxu0 0.0
    %3112 = vmatpush1.msra.mxu0 0.0
    %3113 = vmatprep.subr.mxu0 0.0
    %v3114 = vand.u32 %v2596, 4294901760
    %3115 = vmatpush1.msra.mxu0 %v3114
    %3116 = vmatprep.subr.mxu0 0.0
    %3117 = vmatpush2.msra.mxu0 0.0
    %3118 = vmatprep.subr.mxu0 0.0
    %3119 = vmatpush2.msra.mxu0 0.0
    %3120 = vmatprep.subr.mxu0 0.0
    %3121 = vmatpush2.msra.mxu0 0.0
    %3122 = vmatprep.subr.mxu0 0.0
    %3123 = vmatpush2.msra.mxu0 0.0
    %3124 = vmatprep.subr.mxu0 0.0
    %3125 = vmatpush2.msra.mxu0 0.0
    %3126 = vmatprep.subr.mxu0 0.0
    %3127 = vmatpush2.msra.mxu0 0.0
    %3128 = vmatprep.subr.mxu0 0.0
    %3129 = vmatpush2.msra.mxu0 0.0
    %3130 = vmatprep.subr.mxu0 0.0
    %3131 = vmatpush2.msra.mxu0 0.0
    %3132 = vmatprep.subr.mxu0 0.0
    %3133 = vmatpush2.msra.mxu0 0.0
    %3134 = vmatprep.subr.mxu0 0.0
    %3135 = vmatpush2.msra.mxu0 0.0
    %3136 = vmatprep.subr.mxu0 0.0
    %3137 = vmatpush2.msra.mxu0 0.0
    %3138 = vmatprep.subr.mxu0 0.0
    %3139 = vmatpush2.msra.mxu0 0.0
    %3140 = vmatprep.subr.mxu0 0.0
    %3141 = vmatpush2.msra.mxu0 0.0
    %3142 = vmatprep.subr.mxu0 0.0
    %3143 = vmatpush2.msra.mxu0 0.0
    %3144 = vmatprep.subr.mxu0 0.0
    %3145 = vmatpush2.msra.mxu0 0.0
    %3146 = vmatprep.subr.mxu0 0.0
    %3147 = vmatpush2.msra.mxu0 0.0
    %3148 = vmatprep.mubr.f32.mxu0 0.0
    %v3149 = vand.u32 %v63, 4294901760
    %3150 = vmatmul.mubr.f32.gmra.mxu0 %v3149
    %v3151 = vpop.f32.mrf.mxu0
    %v3152 = vadd.f32 %v3062, %v3151
    %v3153 = vpop.f32.mrf.mxu0
    %3154 = vmatprep.mubr.f32.mxu0 0.0
    %v3155 = vand.u32 %v65, 4294901760
    %3156 = vmatmul.mubr.f32.gmra.mxu0 %v3155
    %v3157 = vpop.f32.mrf.mxu0
    %v3158 = vadd.f32 %v3068, %v3157
    %v3159 = vpop.f32.mrf.mxu0
    %3160 = vmatprep.mubr.f32.mxu0 0.0
    %v3161 = vand.u32 %v67, 4294901760
    %3162 = vmatmul.mubr.f32.gmra.mxu0 %v3161
    %v3163 = vpop.f32.mrf.mxu0
    %v3164 = vadd.f32 %v3074, %v3163
    %v3165 = vpop.f32.mrf.mxu0
    %3166 = vmatprep.mubr.f32.mxu0 0.0
    %v3167 = vand.u32 %v69, 4294901760
    %3168 = vmatmul.mubr.f32.gmra.mxu0 %v3167
    %v3169 = vpop.f32.mrf.mxu0
    %v3170 = vadd.f32 %v3080, %v3169
    %v3171 = vpop.f32.mrf.mxu0
    %3172 = vdwg.mxu0
    %3177 = vrot.lane.b32.xlu0 %v3152, 12
    %v3178 = vpop.permute.xlu0 %3177
    %3179 = vrot.lane.b32.xlu0 %v3158, 12
    %v3180 = vpop.permute.xlu0 %3179
    %3181 = vrot.lane.b32.xlu0 %v3164, 12
    %v3182 = vpop.permute.xlu0 %3181
    %3183 = vrot.lane.b32.xlu0 %v3170, 12
    %v3184 = vpop.permute.xlu0 %3183
    %v3189 = vadd.f32 %v2590, %v3178
    %v3190 = vadd.f32 %v2591, %v3180
    %v3191 = vadd.f32 %v2592, %v3182
    %v3192 = vadd.f32 %v2593, %v3184
    %v3193 = vxor.u32 %v3189, 2147483648
    %v3194 = vxor.u32 %v3190, 2147483648
    %v3195 = vmul.f32 %v3193, 1.442695
    %v3196 = vpow.pop %v3195
    %v3197 = vmul.f32 %v3194, 1.442695
    %v3198 = vpow.pop %v3197
    %v3199 = vadd.f32 %v3196, 1.0
    %v3200 = vadd.f32 %v3198, 1.0
    %v3201 = vrcp.pop %v3199
    %v3202 = vmul.f32 1.0, %v3201
    %v3203 = vrcp.pop %v3200
    %v3204 = vmul.f32 1.0, %v3203
    %v3205 = vxor.u32 %v3192, 2147483648
    %v3206 = vmul.f32 %v3205, 1.442695
    %v3207 = vpow.pop %v3206
    %v3208 = vadd.f32 %v3207, 1.0
    %v3209 = vrcp.pop %v3208
    %v3210 = vmul.f32 1.0, %v3209
    %v3211 = vtanh.pop %v3191
    %v3212 = vmul.f32 %v3204, %v2579
    %v3213 = vmul.f32 %v3202, %v3211
    %v3214 = vadd.f32 %v3212, %v3213
    %v3215 = vtanh.pop %v3214
    %v3216 = vmul.f32 %v3210, %v3215
    %v3217 = vlaneseq
    %v3218 = vshrl.u32 %v3217, 7
    %v3219 = vsub.s32 5, %v3218
    %v3220 = vrot.slane %v9, %v3219
    %v3221 = vmul.f32 %v17, %v3220
    %v3222 = vmul.f32 %v22, %v3220
    %v3223 = vmul.f32 %v27, %v3220
    %v3224 = vmul.f32 %v32, %v3220
    %v3225 = vadd.f32 %v3221, %v44
    %v3226 = vadd.f32 %v3222, %v48
    %v3227 = vadd.f32 %v3223, %v52
    %v3228 = vadd.f32 %v3224, %v56
    %3230 = vrot.lane.b32.xlu0 %v3216, 116
    %v3231 = vpop.permute.xlu0 %3230
    %3233 = vmatprep.subr.mxu0 0.0
    %3234 = vmatpush1.msra.mxu0 0.0
    %3235 = vmatprep.subr.mxu0 0.0
    %3236 = vmatpush1.msra.mxu0 0.0
    %3237 = vmatprep.subr.mxu0 0.0
    %3238 = vmatpush1.msra.mxu0 0.0
    %3239 = vmatprep.subr.mxu0 0.0
    %3240 = vmatpush1.msra.mxu0 0.0
    %3241 = vmatprep.subr.mxu0 0.0
    %3242 = vmatpush1.msra.mxu0 0.0
    %3243 = vmatprep.subr.mxu0 0.0
    %3244 = vmatpush1.msra.mxu0 0.0
    %3245 = vmatprep.subr.mxu0 0.0
    %3246 = vmatpush1.msra.mxu0 0.0
    %3247 = vmatprep.subr.mxu0 0.0
    %3248 = vmatpush1.msra.mxu0 0.0
    %3249 = vmatprep.subr.mxu0 0.0
    %3250 = vmatpush1.msra.mxu0 0.0
    %3251 = vmatprep.subr.mxu0 0.0
    %3252 = vmatpush1.msra.mxu0 0.0
    %3253 = vmatprep.subr.mxu0 0.0
    %3254 = vmatpush1.msra.mxu0 0.0
    %3255 = vmatprep.subr.mxu0 0.0
    %3256 = vmatpush1.msra.mxu0 0.0
    %3257 = vmatprep.subr.mxu0 0.0
    %3258 = vmatpush1.msra.mxu0 0.0
    %3259 = vmatprep.subr.mxu0 0.0
    %3260 = vmatpush1.msra.mxu0 0.0
    %3261 = vmatprep.subr.mxu0 0.0
    %3262 = vmatpush1.msra.mxu0 0.0
    %3263 = vmatprep.subr.mxu0 0.0
    %v3264 = vand.u32 %v3231, 4294901760
    %3265 = vmatpush1.msra.mxu0 %v3264
    %3266 = vmatprep.subr.mxu0 0.0
    %3267 = vmatpush2.msra.mxu0 0.0
    %3268 = vmatprep.subr.mxu0 0.0
    %3269 = vmatpush2.msra.mxu0 0.0
    %3270 = vmatprep.subr.mxu0 0.0
    %3271 = vmatpush2.msra.mxu0 0.0
    %3272 = vmatprep.subr.mxu0 0.0
    %3273 = vmatpush2.msra.mxu0 0.0
    %3274 = vmatprep.subr.mxu0 0.0
    %3275 = vmatpush2.msra.mxu0 0.0
    %3276 = vmatprep.subr.mxu0 0.0
    %3277 = vmatpush2.msra.mxu0 0.0
    %3278 = vmatprep.subr.mxu0 0.0
    %3279 = vmatpush2.msra.mxu0 0.0
    %3280 = vmatprep.subr.mxu0 0.0
    %3281 = vmatpush2.msra.mxu0 0.0
    %3282 = vmatprep.subr.mxu0 0.0
    %3283 = vmatpush2.msra.mxu0 0.0
    %3284 = vmatprep.subr.mxu0 0.0
    %3285 = vmatpush2.msra.mxu0 0.0
    %3286 = vmatprep.subr.mxu0 0.0
    %3287 = vmatpush2.msra.mxu0 0.0
    %3288 = vmatprep.subr.mxu0 0.0
    %3289 = vmatpush2.msra.mxu0 0.0
    %3290 = vmatprep.subr.mxu0 0.0
    %3291 = vmatpush2.msra.mxu0 0.0
    %3292 = vmatprep.subr.mxu0 0.0
    %3293 = vmatpush2.msra.mxu0 0.0
    %3294 = vmatprep.subr.mxu0 0.0
    %3295 = vmatpush2.msra.mxu0 0.0
    %3296 = vmatprep.subr.mxu0 0.0
    %3297 = vmatpush2.msra.mxu0 0.0
    %3298 = vmatprep.mubr.f32.mxu0 0.0
    %v3299 = vand.u32 %v63, 4294901760
    %v3300 = vsub.f32 %v63, %v3299
    %v3301 = vand.u32 %v3300, 4294901760
    %v3302 = vsub.f32 %v3300, %v3301
    %v3303 = vand.u32 %v3302, 4294901760
    %3304 = vmatmul.mubr.f32.gmra.mxu0 %v3303
    %v3305 = vpop.f32.mrf.mxu0
    %v3306 = vadd.f32 0.0, %v3305
    %v3307 = vpop.f32.mrf.mxu0
    %3308 = vmatprep.mubr.f32.mxu0 0.0
    %v3309 = vand.u32 %v65, 4294901760
    %v3310 = vsub.f32 %v65, %v3309
    %v3311 = vand.u32 %v3310, 4294901760
    %v3312 = vsub.f32 %v3310, %v3311
    %v3313 = vand.u32 %v3312, 4294901760
    %3314 = vmatmul.mubr.f32.gmra.mxu0 %v3313
    %v3315 = vpop.f32.mrf.mxu0
    %v3316 = vadd.f32 0.0, %v3315
    %v3317 = vpop.f32.mrf.mxu0
    %3318 = vmatprep.mubr.f32.mxu0 0.0
    %v3319 = vand.u32 %v67, 4294901760
    %v3320 = vsub.f32 %v67, %v3319
    %v3321 = vand.u32 %v3320, 4294901760
    %v3322 = vsub.f32 %v3320, %v3321
    %v3323 = vand.u32 %v3322, 4294901760
    %3324 = vmatmul.mubr.f32.gmra.mxu0 %v3323
    %v3325 = vpop.f32.mrf.mxu0
    %v3326 = vadd.f32 0.0, %v3325
    %v3327 = vpop.f32.mrf.mxu0
    %3328 = vmatprep.mubr.f32.mxu0 0.0
    %v3329 = vand.u32 %v69, 4294901760
    %v3330 = vsub.f32 %v69, %v3329
    %v3331 = vand.u32 %v3330, 4294901760
    %v3332 = vsub.f32 %v3330, %v3331
    %v3333 = vand.u32 %v3332, 4294901760
    %3334 = vmatmul.mubr.f32.gmra.mxu0 %v3333
    %v3335 = vpop.f32.mrf.mxu0
    %v3336 = vadd.f32 0.0, %v3335
    %v3337 = vpop.f32.mrf.mxu0
    %3338 = vdwg.mxu0
    %3339 = vmatprep.subr.mxu0 0.0
    %3340 = vmatpush1.msra.mxu0 0.0
    %3341 = vmatprep.subr.mxu0 0.0
    %3342 = vmatpush1.msra.mxu0 0.0
    %3343 = vmatprep.subr.mxu0 0.0
    %3344 = vmatpush1.msra.mxu0 0.0
    %3345 = vmatprep.subr.mxu0 0.0
    %3346 = vmatpush1.msra.mxu0 0.0
    %3347 = vmatprep.subr.mxu0 0.0
    %3348 = vmatpush1.msra.mxu0 0.0
    %3349 = vmatprep.subr.mxu0 0.0
    %3350 = vmatpush1.msra.mxu0 0.0
    %3351 = vmatprep.subr.mxu0 0.0
    %3352 = vmatpush1.msra.mxu0 0.0
    %3353 = vmatprep.subr.mxu0 0.0
    %3354 = vmatpush1.msra.mxu0 0.0
    %3355 = vmatprep.subr.mxu0 0.0
    %3356 = vmatpush1.msra.mxu0 0.0
    %3357 = vmatprep.subr.mxu0 0.0
    %3358 = vmatpush1.msra.mxu0 0.0
    %3359 = vmatprep.subr.mxu0 0.0
    %3360 = vmatpush1.msra.mxu0 0.0
    %3361 = vmatprep.subr.mxu0 0.0
    %3362 = vmatpush1.msra.mxu0 0.0
    %3363 = vmatprep.subr.mxu0 0.0
    %3364 = vmatpush1.msra.mxu0 0.0
    %3365 = vmatprep.subr.mxu0 0.0
    %3366 = vmatpush1.msra.mxu0 0.0
    %3367 = vmatprep.subr.mxu0 0.0
    %3368 = vmatpush1.msra.mxu0 0.0
    %3369 = vmatprep.subr.mxu0 0.0
    %v3370 = vand.u32 %v3231, 4294901760
    %v3371 = vsub.f32 %v3231, %v3370
    %v3372 = vand.u32 %v3371, 4294901760
    %v3373 = vsub.f32 %v3371, %v3372
    %v3374 = vand.u32 %v3373, 4294901760
    %3375 = vmatpush1.msra.mxu0 %v3374
    %3376 = vmatprep.subr.mxu0 0.0
    %3377 = vmatpush2.msra.mxu0 0.0
    %3378 = vmatprep.subr.mxu0 0.0
    %3379 = vmatpush2.msra.mxu0 0.0
    %3380 = vmatprep.subr.mxu0 0.0
    %3381 = vmatpush2.msra.mxu0 0.0
    %3382 = vmatprep.subr.mxu0 0.0
    %3383 = vmatpush2.msra.mxu0 0.0
    %3384 = vmatprep.subr.mxu0 0.0
    %3385 = vmatpush2.msra.mxu0 0.0
    %3386 = vmatprep.subr.mxu0 0.0
    %3387 = vmatpush2.msra.mxu0 0.0
    %3388 = vmatprep.subr.mxu0 0.0
    %3389 = vmatpush2.msra.mxu0 0.0
    %3390 = vmatprep.subr.mxu0 0.0
    %3391 = vmatpush2.msra.mxu0 0.0
    %3392 = vmatprep.subr.mxu0 0.0
    %3393 = vmatpush2.msra.mxu0 0.0
    %3394 = vmatprep.subr.mxu0 0.0
    %3395 = vmatpush2.msra.mxu0 0.0
    %3396 = vmatprep.subr.mxu0 0.0
    %3397 = vmatpush2.msra.mxu0 0.0
    %3398 = vmatprep.subr.mxu0 0.0
    %3399 = vmatpush2.msra.mxu0 0.0
    %3400 = vmatprep.subr.mxu0 0.0
    %3401 = vmatpush2.msra.mxu0 0.0
    %3402 = vmatprep.subr.mxu0 0.0
    %3403 = vmatpush2.msra.mxu0 0.0
    %3404 = vmatprep.subr.mxu0 0.0
    %3405 = vmatpush2.msra.mxu0 0.0
    %3406 = vmatprep.subr.mxu0 0.0
    %3407 = vmatpush2.msra.mxu0 0.0
    %3408 = vmatprep.mubr.f32.mxu0 0.0
    %v3409 = vand.u32 %v63, 4294901760
    %3410 = vmatmul.mubr.f32.gmra.mxu0 %v3409
    %v3411 = vpop.f32.mrf.mxu0
    %v3412 = vadd.f32 %v3306, %v3411
    %v3413 = vpop.f32.mrf.mxu0
    %3414 = vmatprep.mubr.f32.mxu0 0.0
    %v3415 = vand.u32 %v65, 4294901760
    %3416 = vmatmul.mubr.f32.gmra.mxu0 %v3415
    %v3417 = vpop.f32.mrf.mxu0
    %v3418 = vadd.f32 %v3316, %v3417
    %v3419 = vpop.f32.mrf.mxu0
    %3420 = vmatprep.mubr.f32.mxu0 0.0
    %v3421 = vand.u32 %v67, 4294901760
    %3422 = vmatmul.mubr.f32.gmra.mxu0 %v3421
    %v3423 = vpop.f32.mrf.mxu0
    %v3424 = vadd.f32 %v3326, %v3423
    %v3425 = vpop.f32.mrf.mxu0
    %3426 = vmatprep.mubr.f32.mxu0 0.0
    %v3427 = vand.u32 %v69, 4294901760
    %3428 = vmatmul.mubr.f32.gmra.mxu0 %v3427
    %v3429 = vpop.f32.mrf.mxu0
    %v3430 = vadd.f32 %v3336, %v3429
    %v3431 = vpop.f32.mrf.mxu0
    %3432 = vdwg.mxu0
    %3433 = vmatprep.subr.mxu0 0.0
    %3434 = vmatpush1.msra.mxu0 0.0
    %3435 = vmatprep.subr.mxu0 0.0
    %3436 = vmatpush1.msra.mxu0 0.0
    %3437 = vmatprep.subr.mxu0 0.0
    %3438 = vmatpush1.msra.mxu0 0.0
    %3439 = vmatprep.subr.mxu0 0.0
    %3440 = vmatpush1.msra.mxu0 0.0
    %3441 = vmatprep.subr.mxu0 0.0
    %3442 = vmatpush1.msra.mxu0 0.0
    %3443 = vmatprep.subr.mxu0 0.0
    %3444 = vmatpush1.msra.mxu0 0.0
    %3445 = vmatprep.subr.mxu0 0.0
    %3446 = vmatpush1.msra.mxu0 0.0
    %3447 = vmatprep.subr.mxu0 0.0
    %3448 = vmatpush1.msra.mxu0 0.0
    %3449 = vmatprep.subr.mxu0 0.0
    %3450 = vmatpush1.msra.mxu0 0.0
    %3451 = vmatprep.subr.mxu0 0.0
    %3452 = vmatpush1.msra.mxu0 0.0
    %3453 = vmatprep.subr.mxu0 0.0
    %3454 = vmatpush1.msra.mxu0 0.0
    %3455 = vmatprep.subr.mxu0 0.0
    %3456 = vmatpush1.msra.mxu0 0.0
    %3457 = vmatprep.subr.mxu0 0.0
    %3458 = vmatpush1.msra.mxu0 0.0
    %3459 = vmatprep.subr.mxu0 0.0
    %3460 = vmatpush1.msra.mxu0 0.0
    %3461 = vmatprep.subr.mxu0 0.0
    %3462 = vmatpush1.msra.mxu0 0.0
    %3463 = vmatprep.subr.mxu0 0.0
    %v3464 = vand.u32 %v3231, 4294901760
    %v3465 = vsub.f32 %v3231, %v3464
    %3466 = vmatpush1.msra.mxu0 %v3465
    %3467 = vmatprep.subr.mxu0 0.0
    %3468 = vmatpush2.msra.mxu0 0.0
    %3469 = vmatprep.subr.mxu0 0.0
    %3470 = vmatpush2.msra.mxu0 0.0
    %3471 = vmatprep.subr.mxu0 0.0
    %3472 = vmatpush2.msra.mxu0 0.0
    %3473 = vmatprep.subr.mxu0 0.0
    %3474 = vmatpush2.msra.mxu0 0.0
    %3475 = vmatprep.subr.mxu0 0.0
    %3476 = vmatpush2.msra.mxu0 0.0
    %3477 = vmatprep.subr.mxu0 0.0
    %3478 = vmatpush2.msra.mxu0 0.0
    %3479 = vmatprep.subr.mxu0 0.0
    %3480 = vmatpush2.msra.mxu0 0.0
    %3481 = vmatprep.subr.mxu0 0.0
    %3482 = vmatpush2.msra.mxu0 0.0
    %3483 = vmatprep.subr.mxu0 0.0
    %3484 = vmatpush2.msra.mxu0 0.0
    %3485 = vmatprep.subr.mxu0 0.0
    %3486 = vmatpush2.msra.mxu0 0.0
    %3487 = vmatprep.subr.mxu0 0.0
    %3488 = vmatpush2.msra.mxu0 0.0
    %3489 = vmatprep.subr.mxu0 0.0
    %3490 = vmatpush2.msra.mxu0 0.0
    %3491 = vmatprep.subr.mxu0 0.0
    %3492 = vmatpush2.msra.mxu0 0.0
    %3493 = vmatprep.subr.mxu0 0.0
    %3494 = vmatpush2.msra.mxu0 0.0
    %3495 = vmatprep.subr.mxu0 0.0
    %3496 = vmatpush2.msra.mxu0 0.0
    %3497 = vmatprep.subr.mxu0 0.0
    %3498 = vmatpush2.msra.mxu0 0.0
    %3499 = vmatprep.mubr.f32.mxu0 0.0
    %v3500 = vand.u32 %v63, 4294901760
    %v3501 = vsub.f32 %v63, %v3500
    %3502 = vmatmul.mubr.f32.gmra.mxu0 %v3501
    %v3503 = vpop.f32.mrf.mxu0
    %v3504 = vadd.f32 %v3412, %v3503
    %v3505 = vpop.f32.mrf.mxu0
    %3506 = vmatprep.mubr.f32.mxu0 0.0
    %v3507 = vand.u32 %v65, 4294901760
    %v3508 = vsub.f32 %v65, %v3507
    %3509 = vmatmul.mubr.f32.gmra.mxu0 %v3508
    %v3510 = vpop.f32.mrf.mxu0
    %v3511 = vadd.f32 %v3418, %v3510
    %v3512 = vpop.f32.mrf.mxu0
    %3513 = vmatprep.mubr.f32.mxu0 0.0
    %v3514 = vand.u32 %v67, 4294901760
    %v3515 = vsub.f32 %v67, %v3514
    %3516 = vmatmul.mubr.f32.gmra.mxu0 %v3515
    %v3517 = vpop.f32.mrf.mxu0
    %v3518 = vadd.f32 %v3424, %v3517
    %v3519 = vpop.f32.mrf.mxu0
    %3520 = vmatprep.mubr.f32.mxu0 0.0
    %v3521 = vand.u32 %v69, 4294901760
    %v3522 = vsub.f32 %v69, %v3521
    %3523 = vmatmul.mubr.f32.gmra.mxu0 %v3522
    %v3524 = vpop.f32.mrf.mxu0
    %v3525 = vadd.f32 %v3430, %v3524
    %v3526 = vpop.f32.mrf.mxu0
    %3527 = vdwg.mxu0
    %3528 = vmatprep.subr.mxu0 0.0
    %3529 = vmatpush1.msra.mxu0 0.0
    %3530 = vmatprep.subr.mxu0 0.0
    %3531 = vmatpush1.msra.mxu0 0.0
    %3532 = vmatprep.subr.mxu0 0.0
    %3533 = vmatpush1.msra.mxu0 0.0
    %3534 = vmatprep.subr.mxu0 0.0
    %3535 = vmatpush1.msra.mxu0 0.0
    %3536 = vmatprep.subr.mxu0 0.0
    %3537 = vmatpush1.msra.mxu0 0.0
    %3538 = vmatprep.subr.mxu0 0.0
    %3539 = vmatpush1.msra.mxu0 0.0
    %3540 = vmatprep.subr.mxu0 0.0
    %3541 = vmatpush1.msra.mxu0 0.0
    %3542 = vmatprep.subr.mxu0 0.0
    %3543 = vmatpush1.msra.mxu0 0.0
    %3544 = vmatprep.subr.mxu0 0.0
    %3545 = vmatpush1.msra.mxu0 0.0
    %3546 = vmatprep.subr.mxu0 0.0
    %3547 = vmatpush1.msra.mxu0 0.0
    %3548 = vmatprep.subr.mxu0 0.0
    %3549 = vmatpush1.msra.mxu0 0.0
    %3550 = vmatprep.subr.mxu0 0.0
    %3551 = vmatpush1.msra.mxu0 0.0
    %3552 = vmatprep.subr.mxu0 0.0
    %3553 = vmatpush1.msra.mxu0 0.0
    %3554 = vmatprep.subr.mxu0 0.0
    %3555 = vmatpush1.msra.mxu0 0.0
    %3556 = vmatprep.subr.mxu0 0.0
    %3557 = vmatpush1.msra.mxu0 0.0
    %3558 = vmatprep.subr.mxu0 0.0
    %v3559 = vand.u32 %v3231, 4294901760
    %3560 = vmatpush1.msra.mxu0 %v3559
    %3561 = vmatprep.subr.mxu0 0.0
    %3562 = vmatpush2.msra.mxu0 0.0
    %3563 = vmatprep.subr.mxu0 0.0
    %3564 = vmatpush2.msra.mxu0 0.0
    %3565 = vmatprep.subr.mxu0 0.0
    %3566 = vmatpush2.msra.mxu0 0.0
    %3567 = vmatprep.subr.mxu0 0.0
    %3568 = vmatpush2.msra.mxu0 0.0
    %3569 = vmatprep.subr.mxu0 0.0
    %3570 = vmatpush2.msra.mxu0 0.0
    %3571 = vmatprep.subr.mxu0 0.0
    %3572 = vmatpush2.msra.mxu0 0.0
    %3573 = vmatprep.subr.mxu0 0.0
    %3574 = vmatpush2.msra.mxu0 0.0
    %3575 = vmatprep.subr.mxu0 0.0
    %3576 = vmatpush2.msra.mxu0 0.0
    %3577 = vmatprep.subr.mxu0 0.0
    %3578 = vmatpush2.msra.mxu0 0.0
    %3579 = vmatprep.subr.mxu0 0.0
    %3580 = vmatpush2.msra.mxu0 0.0
    %3581 = vmatprep.subr.mxu0 0.0
    %3582 = vmatpush2.msra.mxu0 0.0
    %3583 = vmatprep.subr.mxu0 0.0
    %3584 = vmatpush2.msra.mxu0 0.0
    %3585 = vmatprep.subr.mxu0 0.0
    %3586 = vmatpush2.msra.mxu0 0.0
    %3587 = vmatprep.subr.mxu0 0.0
    %3588 = vmatpush2.msra.mxu0 0.0
    %3589 = vmatprep.subr.mxu0 0.0
    %3590 = vmatpush2.msra.mxu0 0.0
    %3591 = vmatprep.subr.mxu0 0.0
    %3592 = vmatpush2.msra.mxu0 0.0
    %3593 = vmatprep.mubr.f32.mxu0 0.0
    %v3594 = vand.u32 %v63, 4294901760
    %v3595 = vsub.f32 %v63, %v3594
    %v3596 = vand.u32 %v3595, 4294901760
    %3597 = vmatmul.mubr.f32.gmra.mxu0 %v3596
    %v3598 = vpop.f32.mrf.mxu0
    %v3599 = vadd.f32 %v3504, %v3598
    %v3600 = vpop.f32.mrf.mxu0
    %3601 = vmatprep.mubr.f32.mxu0 0.0
    %v3602 = vand.u32 %v65, 4294901760
    %v3603 = vsub.f32 %v65, %v3602
    %v3604 = vand.u32 %v3603, 4294901760
    %3605 = vmatmul.mubr.f32.gmra.mxu0 %v3604
    %v3606 = vpop.f32.mrf.mxu0
    %v3607 = vadd.f32 %v3511, %v3606
    %v3608 = vpop.f32.mrf.mxu0
    %3609 = vmatprep.mubr.f32.mxu0 0.0
    %v3610 = vand.u32 %v67, 4294901760
    %v3611 = vsub.f32 %v67, %v3610
    %v3612 = vand.u32 %v3611, 4294901760
    %3613 = vmatmul.mubr.f32.gmra.mxu0 %v3612
    %v3614 = vpop.f32.mrf.mxu0
    %v3615 = vadd.f32 %v3518, %v3614
    %v3616 = vpop.f32.mrf.mxu0
    %3617 = vmatprep.mubr.f32.mxu0 0.0
    %v3618 = vand.u32 %v69, 4294901760
    %v3619 = vsub.f32 %v69, %v3618
    %v3620 = vand.u32 %v3619, 4294901760
    %3621 = vmatmul.mubr.f32.gmra.mxu0 %v3620
    %v3622 = vpop.f32.mrf.mxu0
    %v3623 = vadd.f32 %v3525, %v3622
    %v3624 = vpop.f32.mrf.mxu0
    %3625 = vdwg.mxu0
    %3626 = vmatprep.subr.mxu0 0.0
    %3627 = vmatpush1.msra.mxu0 0.0
    %3628 = vmatprep.subr.mxu0 0.0
    %3629 = vmatpush1.msra.mxu0 0.0
    %3630 = vmatprep.subr.mxu0 0.0
    %3631 = vmatpush1.msra.mxu0 0.0
    %3632 = vmatprep.subr.mxu0 0.0
    %3633 = vmatpush1.msra.mxu0 0.0
    %3634 = vmatprep.subr.mxu0 0.0
    %3635 = vmatpush1.msra.mxu0 0.0
    %3636 = vmatprep.subr.mxu0 0.0
    %3637 = vmatpush1.msra.mxu0 0.0
    %3638 = vmatprep.subr.mxu0 0.0
    %3639 = vmatpush1.msra.mxu0 0.0
    %3640 = vmatprep.subr.mxu0 0.0
    %3641 = vmatpush1.msra.mxu0 0.0
    %3642 = vmatprep.subr.mxu0 0.0
    %3643 = vmatpush1.msra.mxu0 0.0
    %3644 = vmatprep.subr.mxu0 0.0
    %3645 = vmatpush1.msra.mxu0 0.0
    %3646 = vmatprep.subr.mxu0 0.0
    %3647 = vmatpush1.msra.mxu0 0.0
    %3648 = vmatprep.subr.mxu0 0.0
    %3649 = vmatpush1.msra.mxu0 0.0
    %3650 = vmatprep.subr.mxu0 0.0
    %3651 = vmatpush1.msra.mxu0 0.0
    %3652 = vmatprep.subr.mxu0 0.0
    %3653 = vmatpush1.msra.mxu0 0.0
    %3654 = vmatprep.subr.mxu0 0.0
    %3655 = vmatpush1.msra.mxu0 0.0
    %3656 = vmatprep.subr.mxu0 0.0
    %v3657 = vand.u32 %v3231, 4294901760
    %v3658 = vsub.f32 %v3231, %v3657
    %v3659 = vand.u32 %v3658, 4294901760
    %3660 = vmatpush1.msra.mxu0 %v3659
    %3661 = vmatprep.subr.mxu0 0.0
    %3662 = vmatpush2.msra.mxu0 0.0
    %3663 = vmatprep.subr.mxu0 0.0
    %3664 = vmatpush2.msra.mxu0 0.0
    %3665 = vmatprep.subr.mxu0 0.0
    %3666 = vmatpush2.msra.mxu0 0.0
    %3667 = vmatprep.subr.mxu0 0.0
    %3668 = vmatpush2.msra.mxu0 0.0
    %3669 = vmatprep.subr.mxu0 0.0
    %3670 = vmatpush2.msra.mxu0 0.0
    %3671 = vmatprep.subr.mxu0 0.0
    %3672 = vmatpush2.msra.mxu0 0.0
    %3673 = vmatprep.subr.mxu0 0.0
    %3674 = vmatpush2.msra.mxu0 0.0
    %3675 = vmatprep.subr.mxu0 0.0
    %3676 = vmatpush2.msra.mxu0 0.0
    %3677 = vmatprep.subr.mxu0 0.0
    %3678 = vmatpush2.msra.mxu0 0.0
    %3679 = vmatprep.subr.mxu0 0.0
    %3680 = vmatpush2.msra.mxu0 0.0
    %3681 = vmatprep.subr.mxu0 0.0
    %3682 = vmatpush2.msra.mxu0 0.0
    %3683 = vmatprep.subr.mxu0 0.0
    %3684 = vmatpush2.msra.mxu0 0.0
    %3685 = vmatprep.subr.mxu0 0.0
    %3686 = vmatpush2.msra.mxu0 0.0
    %3687 = vmatprep.subr.mxu0 0.0
    %3688 = vmatpush2.msra.mxu0 0.0
    %3689 = vmatprep.subr.mxu0 0.0
    %3690 = vmatpush2.msra.mxu0 0.0
    %3691 = vmatprep.subr.mxu0 0.0
    %3692 = vmatpush2.msra.mxu0 0.0
    %3693 = vmatprep.mubr.f32.mxu0 0.0
    %v3694 = vand.u32 %v63, 4294901760
    %3695 = vmatmul.mubr.f32.gmra.mxu0 %v3694
    %v3696 = vpop.f32.mrf.mxu0
    %v3697 = vadd.f32 %v3599, %v3696
    %v3698 = vpop.f32.mrf.mxu0
    %3699 = vmatprep.mubr.f32.mxu0 0.0
    %v3700 = vand.u32 %v65, 4294901760
    %3701 = vmatmul.mubr.f32.gmra.mxu0 %v3700
    %v3702 = vpop.f32.mrf.mxu0
    %v3703 = vadd.f32 %v3607, %v3702
    %v3704 = vpop.f32.mrf.mxu0
    %3705 = vmatprep.mubr.f32.mxu0 0.0
    %v3706 = vand.u32 %v67, 4294901760
    %3707 = vmatmul.mubr.f32.gmra.mxu0 %v3706
    %v3708 = vpop.f32.mrf.mxu0
    %v3709 = vadd.f32 %v3615, %v3708
    %v3710 = vpop.f32.mrf.mxu0
    %3711 = vmatprep.mubr.f32.mxu0 0.0
    %v3712 = vand.u32 %v69, 4294901760
    %3713 = vmatmul.mubr.f32.gmra.mxu0 %v3712
    %v3714 = vpop.f32.mrf.mxu0
    %v3715 = vadd.f32 %v3623, %v3714
    %v3716 = vpop.f32.mrf.mxu0
    %3717 = vdwg.mxu0
    %3718 = vmatprep.subr.mxu0 0.0
    %3719 = vmatpush1.msra.mxu0 0.0
    %3720 = vmatprep.subr.mxu0 0.0
    %3721 = vmatpush1.msra.mxu0 0.0
    %3722 = vmatprep.subr.mxu0 0.0
    %3723 = vmatpush1.msra.mxu0 0.0
    %3724 = vmatprep.subr.mxu0 0.0
    %3725 = vmatpush1.msra.mxu0 0.0
    %3726 = vmatprep.subr.mxu0 0.0
    %3727 = vmatpush1.msra.mxu0 0.0
    %3728 = vmatprep.subr.mxu0 0.0
    %3729 = vmatpush1.msra.mxu0 0.0
    %3730 = vmatprep.subr.mxu0 0.0
    %3731 = vmatpush1.msra.mxu0 0.0
    %3732 = vmatprep.subr.mxu0 0.0
    %3733 = vmatpush1.msra.mxu0 0.0
    %3734 = vmatprep.subr.mxu0 0.0
    %3735 = vmatpush1.msra.mxu0 0.0
    %3736 = vmatprep.subr.mxu0 0.0
    %3737 = vmatpush1.msra.mxu0 0.0
    %3738 = vmatprep.subr.mxu0 0.0
    %3739 = vmatpush1.msra.mxu0 0.0
    %3740 = vmatprep.subr.mxu0 0.0
    %3741 = vmatpush1.msra.mxu0 0.0
    %3742 = vmatprep.subr.mxu0 0.0
    %3743 = vmatpush1.msra.mxu0 0.0
    %3744 = vmatprep.subr.mxu0 0.0
    %3745 = vmatpush1.msra.mxu0 0.0
    %3746 = vmatprep.subr.mxu0 0.0
    %3747 = vmatpush1.msra.mxu0 0.0
    %3748 = vmatprep.subr.mxu0 0.0
    %v3749 = vand.u32 %v3231, 4294901760
    %3750 = vmatpush1.msra.mxu0 %v3749
    %3751 = vmatprep.subr.mxu0 0.0
    %3752 = vmatpush2.msra.mxu0 0.0
    %3753 = vmatprep.subr.mxu0 0.0
    %3754 = vmatpush2.msra.mxu0 0.0
    %3755 = vmatprep.subr.mxu0 0.0
    %3756 = vmatpush2.msra.mxu0 0.0
    %3757 = vmatprep.subr.mxu0 0.0
    %3758 = vmatpush2.msra.mxu0 0.0
    %3759 = vmatprep.subr.mxu0 0.0
    %3760 = vmatpush2.msra.mxu0 0.0
    %3761 = vmatprep.subr.mxu0 0.0
    %3762 = vmatpush2.msra.mxu0 0.0
    %3763 = vmatprep.subr.mxu0 0.0
    %3764 = vmatpush2.msra.mxu0 0.0
    %3765 = vmatprep.subr.mxu0 0.0
    %3766 = vmatpush2.msra.mxu0 0.0
    %3767 = vmatprep.subr.mxu0 0.0
    %3768 = vmatpush2.msra.mxu0 0.0
    %3769 = vmatprep.subr.mxu0 0.0
    %3770 = vmatpush2.msra.mxu0 0.0
    %3771 = vmatprep.subr.mxu0 0.0
    %3772 = vmatpush2.msra.mxu0 0.0
    %3773 = vmatprep.subr.mxu0 0.0
    %3774 = vmatpush2.msra.mxu0 0.0
    %3775 = vmatprep.subr.mxu0 0.0
    %3776 = vmatpush2.msra.mxu0 0.0
    %3777 = vmatprep.subr.mxu0 0.0
    %3778 = vmatpush2.msra.mxu0 0.0
    %3779 = vmatprep.subr.mxu0 0.0
    %3780 = vmatpush2.msra.mxu0 0.0
    %3781 = vmatprep.subr.mxu0 0.0
    %3782 = vmatpush2.msra.mxu0 0.0
    %3783 = vmatprep.mubr.f32.mxu0 0.0
    %v3784 = vand.u32 %v63, 4294901760
    %3785 = vmatmul.mubr.f32.gmra.mxu0 %v3784
    %v3786 = vpop.f32.mrf.mxu0
    %v3787 = vadd.f32 %v3697, %v3786
    %v3788 = vpop.f32.mrf.mxu0
    %3789 = vmatprep.mubr.f32.mxu0 0.0
    %v3790 = vand.u32 %v65, 4294901760
    %3791 = vmatmul.mubr.f32.gmra.mxu0 %v3790
    %v3792 = vpop.f32.mrf.mxu0
    %v3793 = vadd.f32 %v3703, %v3792
    %v3794 = vpop.f32.mrf.mxu0
    %3795 = vmatprep.mubr.f32.mxu0 0.0
    %v3796 = vand.u32 %v67, 4294901760
    %3797 = vmatmul.mubr.f32.gmra.mxu0 %v3796
    %v3798 = vpop.f32.mrf.mxu0
    %v3799 = vadd.f32 %v3709, %v3798
    %v3800 = vpop.f32.mrf.mxu0
    %3801 = vmatprep.mubr.f32.mxu0 0.0
    %v3802 = vand.u32 %v69, 4294901760
    %3803 = vmatmul.mubr.f32.gmra.mxu0 %v3802
    %v3804 = vpop.f32.mrf.mxu0
    %v3805 = vadd.f32 %v3715, %v3804
    %v3806 = vpop.f32.mrf.mxu0
    %3807 = vdwg.mxu0
    %3812 = vrot.lane.b32.xlu0 %v3787, 12
    %v3813 = vpop.permute.xlu0 %3812
    %3814 = vrot.lane.b32.xlu0 %v3793, 12
    %v3815 = vpop.permute.xlu0 %3814
    %3816 = vrot.lane.b32.xlu0 %v3799, 12
    %v3817 = vpop.permute.xlu0 %3816
    %3818 = vrot.lane.b32.xlu0 %v3805, 12
    %v3819 = vpop.permute.xlu0 %3818
    %v3824 = vadd.f32 %v3225, %v3813
    %v3825 = vadd.f32 %v3226, %v3815
    %v3826 = vadd.f32 %v3227, %v3817
    %v3827 = vadd.f32 %v3228, %v3819
    %v3828 = vxor.u32 %v3824, 2147483648
    %v3829 = vxor.u32 %v3825, 2147483648
    %v3830 = vmul.f32 %v3828, 1.442695
    %v3831 = vpow.pop %v3830
    %v3832 = vmul.f32 %v3829, 1.442695
    %v3833 = vpow.pop %v3832
    %v3834 = vadd.f32 %v3831, 1.0
    %v3835 = vadd.f32 %v3833, 1.0
    %v3836 = vrcp.pop %v3834
    %v3837 = vmul.f32 1.0, %v3836
    %v3838 = vrcp.pop %v3835
    %v3839 = vmul.f32 1.0, %v3838
    %v3840 = vxor.u32 %v3827, 2147483648
    %v3841 = vmul.f32 %v3840, 1.442695
    %v3842 = vpow.pop %v3841
    %v3843 = vadd.f32 %v3842, 1.0
    %v3844 = vrcp.pop %v3843
    %v3845 = vmul.f32 1.0, %v3844
    %v3846 = vtanh.pop %v3826
    %v3847 = vmul.f32 %v3839, %v3214
    %v3848 = vmul.f32 %v3837, %v3846
    %v3849 = vadd.f32 %v3847, %v3848
    %v3850 = vtanh.pop %v3849
    %v3851 = vmul.f32 %v3845, %v3850
    %v3852 = vlaneseq
    %v3853 = vshrl.u32 %v3852, 7
    %v3854 = vsub.s32 6, %v3853
    %v3855 = vrot.slane %v9, %v3854
    %v3856 = vmul.f32 %v17, %v3855
    %v3857 = vmul.f32 %v22, %v3855
    %v3858 = vmul.f32 %v27, %v3855
    %v3859 = vmul.f32 %v32, %v3855
    %v3860 = vadd.f32 %v3856, %v44
    %v3861 = vadd.f32 %v3857, %v48
    %v3862 = vadd.f32 %v3858, %v52
    %v3863 = vadd.f32 %v3859, %v56
    %3865 = vrot.lane.b32.xlu0 %v3851, 116
    %v3866 = vpop.permute.xlu0 %3865
    %3868 = vmatprep.subr.mxu0 0.0
    %3869 = vmatpush1.msra.mxu0 0.0
    %3870 = vmatprep.subr.mxu0 0.0
    %3871 = vmatpush1.msra.mxu0 0.0
    %3872 = vmatprep.subr.mxu0 0.0
    %3873 = vmatpush1.msra.mxu0 0.0
    %3874 = vmatprep.subr.mxu0 0.0
    %3875 = vmatpush1.msra.mxu0 0.0
    %3876 = vmatprep.subr.mxu0 0.0
    %3877 = vmatpush1.msra.mxu0 0.0
    %3878 = vmatprep.subr.mxu0 0.0
    %3879 = vmatpush1.msra.mxu0 0.0
    %3880 = vmatprep.subr.mxu0 0.0
    %3881 = vmatpush1.msra.mxu0 0.0
    %3882 = vmatprep.subr.mxu0 0.0
    %3883 = vmatpush1.msra.mxu0 0.0
    %3884 = vmatprep.subr.mxu0 0.0
    %3885 = vmatpush1.msra.mxu0 0.0
    %3886 = vmatprep.subr.mxu0 0.0
    %3887 = vmatpush1.msra.mxu0 0.0
    %3888 = vmatprep.subr.mxu0 0.0
    %3889 = vmatpush1.msra.mxu0 0.0
    %3890 = vmatprep.subr.mxu0 0.0
    %3891 = vmatpush1.msra.mxu0 0.0
    %3892 = vmatprep.subr.mxu0 0.0
    %3893 = vmatpush1.msra.mxu0 0.0
    %3894 = vmatprep.subr.mxu0 0.0
    %3895 = vmatpush1.msra.mxu0 0.0
    %3896 = vmatprep.subr.mxu0 0.0
    %3897 = vmatpush1.msra.mxu0 0.0
    %3898 = vmatprep.subr.mxu0 0.0
    %v3899 = vand.u32 %v3866, 4294901760
    %3900 = vmatpush1.msra.mxu0 %v3899
    %3901 = vmatprep.subr.mxu0 0.0
    %3902 = vmatpush2.msra.mxu0 0.0
    %3903 = vmatprep.subr.mxu0 0.0
    %3904 = vmatpush2.msra.mxu0 0.0
    %3905 = vmatprep.subr.mxu0 0.0
    %3906 = vmatpush2.msra.mxu0 0.0
    %3907 = vmatprep.subr.mxu0 0.0
    %3908 = vmatpush2.msra.mxu0 0.0
    %3909 = vmatprep.subr.mxu0 0.0
    %3910 = vmatpush2.msra.mxu0 0.0
    %3911 = vmatprep.subr.mxu0 0.0
    %3912 = vmatpush2.msra.mxu0 0.0
    %3913 = vmatprep.subr.mxu0 0.0
    %3914 = vmatpush2.msra.mxu0 0.0
    %3915 = vmatprep.subr.mxu0 0.0
    %3916 = vmatpush2.msra.mxu0 0.0
    %3917 = vmatprep.subr.mxu0 0.0
    %3918 = vmatpush2.msra.mxu0 0.0
    %3919 = vmatprep.subr.mxu0 0.0
    %3920 = vmatpush2.msra.mxu0 0.0
    %3921 = vmatprep.subr.mxu0 0.0
    %3922 = vmatpush2.msra.mxu0 0.0
    %3923 = vmatprep.subr.mxu0 0.0
    %3924 = vmatpush2.msra.mxu0 0.0
    %3925 = vmatprep.subr.mxu0 0.0
    %3926 = vmatpush2.msra.mxu0 0.0
    %3927 = vmatprep.subr.mxu0 0.0
    %3928 = vmatpush2.msra.mxu0 0.0
    %3929 = vmatprep.subr.mxu0 0.0
    %3930 = vmatpush2.msra.mxu0 0.0
    %3931 = vmatprep.subr.mxu0 0.0
    %3932 = vmatpush2.msra.mxu0 0.0
    %3933 = vmatprep.mubr.f32.mxu0 0.0
    %v3934 = vand.u32 %v63, 4294901760
    %v3935 = vsub.f32 %v63, %v3934
    %v3936 = vand.u32 %v3935, 4294901760
    %v3937 = vsub.f32 %v3935, %v3936
    %v3938 = vand.u32 %v3937, 4294901760
    %3939 = vmatmul.mubr.f32.gmra.mxu0 %v3938
    %v3940 = vpop.f32.mrf.mxu0
    %v3941 = vadd.f32 0.0, %v3940
    %v3942 = vpop.f32.mrf.mxu0
    %3943 = vmatprep.mubr.f32.mxu0 0.0
    %v3944 = vand.u32 %v65, 4294901760
    %v3945 = vsub.f32 %v65, %v3944
    %v3946 = vand.u32 %v3945, 4294901760
    %v3947 = vsub.f32 %v3945, %v3946
    %v3948 = vand.u32 %v3947, 4294901760
    %3949 = vmatmul.mubr.f32.gmra.mxu0 %v3948
    %v3950 = vpop.f32.mrf.mxu0
    %v3951 = vadd.f32 0.0, %v3950
    %v3952 = vpop.f32.mrf.mxu0
    %3953 = vmatprep.mubr.f32.mxu0 0.0
    %v3954 = vand.u32 %v67, 4294901760
    %v3955 = vsub.f32 %v67, %v3954
    %v3956 = vand.u32 %v3955, 4294901760
    %v3957 = vsub.f32 %v3955, %v3956
    %v3958 = vand.u32 %v3957, 4294901760
    %3959 = vmatmul.mubr.f32.gmra.mxu0 %v3958
    %v3960 = vpop.f32.mrf.mxu0
    %v3961 = vadd.f32 0.0, %v3960
    %v3962 = vpop.f32.mrf.mxu0
    %3963 = vmatprep.mubr.f32.mxu0 0.0
    %v3964 = vand.u32 %v69, 4294901760
    %v3965 = vsub.f32 %v69, %v3964
    %v3966 = vand.u32 %v3965, 4294901760
    %v3967 = vsub.f32 %v3965, %v3966
    %v3968 = vand.u32 %v3967, 4294901760
    %3969 = vmatmul.mubr.f32.gmra.mxu0 %v3968
    %v3970 = vpop.f32.mrf.mxu0
    %v3971 = vadd.f32 0.0, %v3970
    %v3972 = vpop.f32.mrf.mxu0
    %3973 = vdwg.mxu0
    %3974 = vmatprep.subr.mxu0 0.0
    %3975 = vmatpush1.msra.mxu0 0.0
    %3976 = vmatprep.subr.mxu0 0.0
    %3977 = vmatpush1.msra.mxu0 0.0
    %3978 = vmatprep.subr.mxu0 0.0
    %3979 = vmatpush1.msra.mxu0 0.0
    %3980 = vmatprep.subr.mxu0 0.0
    %3981 = vmatpush1.msra.mxu0 0.0
    %3982 = vmatprep.subr.mxu0 0.0
    %3983 = vmatpush1.msra.mxu0 0.0
    %3984 = vmatprep.subr.mxu0 0.0
    %3985 = vmatpush1.msra.mxu0 0.0
    %3986 = vmatprep.subr.mxu0 0.0
    %3987 = vmatpush1.msra.mxu0 0.0
    %3988 = vmatprep.subr.mxu0 0.0
    %3989 = vmatpush1.msra.mxu0 0.0
    %3990 = vmatprep.subr.mxu0 0.0
    %3991 = vmatpush1.msra.mxu0 0.0
    %3992 = vmatprep.subr.mxu0 0.0
    %3993 = vmatpush1.msra.mxu0 0.0
    %3994 = vmatprep.subr.mxu0 0.0
    %3995 = vmatpush1.msra.mxu0 0.0
    %3996 = vmatprep.subr.mxu0 0.0
    %3997 = vmatpush1.msra.mxu0 0.0
    %3998 = vmatprep.subr.mxu0 0.0
    %3999 = vmatpush1.msra.mxu0 0.0
    %4000 = vmatprep.subr.mxu0 0.0
    %4001 = vmatpush1.msra.mxu0 0.0
    %4002 = vmatprep.subr.mxu0 0.0
    %4003 = vmatpush1.msra.mxu0 0.0
    %4004 = vmatprep.subr.mxu0 0.0
    %v4005 = vand.u32 %v3866, 4294901760
    %v4006 = vsub.f32 %v3866, %v4005
    %v4007 = vand.u32 %v4006, 4294901760
    %v4008 = vsub.f32 %v4006, %v4007
    %v4009 = vand.u32 %v4008, 4294901760
    %4010 = vmatpush1.msra.mxu0 %v4009
    %4011 = vmatprep.subr.mxu0 0.0
    %4012 = vmatpush2.msra.mxu0 0.0
    %4013 = vmatprep.subr.mxu0 0.0
    %4014 = vmatpush2.msra.mxu0 0.0
    %4015 = vmatprep.subr.mxu0 0.0
    %4016 = vmatpush2.msra.mxu0 0.0
    %4017 = vmatprep.subr.mxu0 0.0
    %4018 = vmatpush2.msra.mxu0 0.0
    %4019 = vmatprep.subr.mxu0 0.0
    %4020 = vmatpush2.msra.mxu0 0.0
    %4021 = vmatprep.subr.mxu0 0.0
    %4022 = vmatpush2.msra.mxu0 0.0
    %4023 = vmatprep.subr.mxu0 0.0
    %4024 = vmatpush2.msra.mxu0 0.0
    %4025 = vmatprep.subr.mxu0 0.0
    %4026 = vmatpush2.msra.mxu0 0.0
    %4027 = vmatprep.subr.mxu0 0.0
    %4028 = vmatpush2.msra.mxu0 0.0
    %4029 = vmatprep.subr.mxu0 0.0
    %4030 = vmatpush2.msra.mxu0 0.0
    %4031 = vmatprep.subr.mxu0 0.0
    %4032 = vmatpush2.msra.mxu0 0.0
    %4033 = vmatprep.subr.mxu0 0.0
    %4034 = vmatpush2.msra.mxu0 0.0
    %4035 = vmatprep.subr.mxu0 0.0
    %4036 = vmatpush2.msra.mxu0 0.0
    %4037 = vmatprep.subr.mxu0 0.0
    %4038 = vmatpush2.msra.mxu0 0.0
    %4039 = vmatprep.subr.mxu0 0.0
    %4040 = vmatpush2.msra.mxu0 0.0
    %4041 = vmatprep.subr.mxu0 0.0
    %4042 = vmatpush2.msra.mxu0 0.0
    %4043 = vmatprep.mubr.f32.mxu0 0.0
    %v4044 = vand.u32 %v63, 4294901760
    %4045 = vmatmul.mubr.f32.gmra.mxu0 %v4044
    %v4046 = vpop.f32.mrf.mxu0
    %v4047 = vadd.f32 %v3941, %v4046
    %v4048 = vpop.f32.mrf.mxu0
    %4049 = vmatprep.mubr.f32.mxu0 0.0
    %v4050 = vand.u32 %v65, 4294901760
    %4051 = vmatmul.mubr.f32.gmra.mxu0 %v4050
    %v4052 = vpop.f32.mrf.mxu0
    %v4053 = vadd.f32 %v3951, %v4052
    %v4054 = vpop.f32.mrf.mxu0
    %4055 = vmatprep.mubr.f32.mxu0 0.0
    %v4056 = vand.u32 %v67, 4294901760
    %4057 = vmatmul.mubr.f32.gmra.mxu0 %v4056
    %v4058 = vpop.f32.mrf.mxu0
    %v4059 = vadd.f32 %v3961, %v4058
    %v4060 = vpop.f32.mrf.mxu0
    %4061 = vmatprep.mubr.f32.mxu0 0.0
    %v4062 = vand.u32 %v69, 4294901760
    %4063 = vmatmul.mubr.f32.gmra.mxu0 %v4062
    %v4064 = vpop.f32.mrf.mxu0
    %v4065 = vadd.f32 %v3971, %v4064
    %v4066 = vpop.f32.mrf.mxu0
    %4067 = vdwg.mxu0
    %4068 = vmatprep.subr.mxu0 0.0
    %4069 = vmatpush1.msra.mxu0 0.0
    %4070 = vmatprep.subr.mxu0 0.0
    %4071 = vmatpush1.msra.mxu0 0.0
    %4072 = vmatprep.subr.mxu0 0.0
    %4073 = vmatpush1.msra.mxu0 0.0
    %4074 = vmatprep.subr.mxu0 0.0
    %4075 = vmatpush1.msra.mxu0 0.0
    %4076 = vmatprep.subr.mxu0 0.0
    %4077 = vmatpush1.msra.mxu0 0.0
    %4078 = vmatprep.subr.mxu0 0.0
    %4079 = vmatpush1.msra.mxu0 0.0
    %4080 = vmatprep.subr.mxu0 0.0
    %4081 = vmatpush1.msra.mxu0 0.0
    %4082 = vmatprep.subr.mxu0 0.0
    %4083 = vmatpush1.msra.mxu0 0.0
    %4084 = vmatprep.subr.mxu0 0.0
    %4085 = vmatpush1.msra.mxu0 0.0
    %4086 = vmatprep.subr.mxu0 0.0
    %4087 = vmatpush1.msra.mxu0 0.0
    %4088 = vmatprep.subr.mxu0 0.0
    %4089 = vmatpush1.msra.mxu0 0.0
    %4090 = vmatprep.subr.mxu0 0.0
    %4091 = vmatpush1.msra.mxu0 0.0
    %4092 = vmatprep.subr.mxu0 0.0
    %4093 = vmatpush1.msra.mxu0 0.0
    %4094 = vmatprep.subr.mxu0 0.0
    %4095 = vmatpush1.msra.mxu0 0.0
    %4096 = vmatprep.subr.mxu0 0.0
    %4097 = vmatpush1.msra.mxu0 0.0
    %4098 = vmatprep.subr.mxu0 0.0
    %v4099 = vand.u32 %v3866, 4294901760
    %v4100 = vsub.f32 %v3866, %v4099
    %4101 = vmatpush1.msra.mxu0 %v4100
    %4102 = vmatprep.subr.mxu0 0.0
    %4103 = vmatpush2.msra.mxu0 0.0
    %4104 = vmatprep.subr.mxu0 0.0
    %4105 = vmatpush2.msra.mxu0 0.0
    %4106 = vmatprep.subr.mxu0 0.0
    %4107 = vmatpush2.msra.mxu0 0.0
    %4108 = vmatprep.subr.mxu0 0.0
    %4109 = vmatpush2.msra.mxu0 0.0
    %4110 = vmatprep.subr.mxu0 0.0
    %4111 = vmatpush2.msra.mxu0 0.0
    %4112 = vmatprep.subr.mxu0 0.0
    %4113 = vmatpush2.msra.mxu0 0.0
    %4114 = vmatprep.subr.mxu0 0.0
    %4115 = vmatpush2.msra.mxu0 0.0
    %4116 = vmatprep.subr.mxu0 0.0
    %4117 = vmatpush2.msra.mxu0 0.0
    %4118 = vmatprep.subr.mxu0 0.0
    %4119 = vmatpush2.msra.mxu0 0.0
    %4120 = vmatprep.subr.mxu0 0.0
    %4121 = vmatpush2.msra.mxu0 0.0
    %4122 = vmatprep.subr.mxu0 0.0
    %4123 = vmatpush2.msra.mxu0 0.0
    %4124 = vmatprep.subr.mxu0 0.0
    %4125 = vmatpush2.msra.mxu0 0.0
    %4126 = vmatprep.subr.mxu0 0.0
    %4127 = vmatpush2.msra.mxu0 0.0
    %4128 = vmatprep.subr.mxu0 0.0
    %4129 = vmatpush2.msra.mxu0 0.0
    %4130 = vmatprep.subr.mxu0 0.0
    %4131 = vmatpush2.msra.mxu0 0.0
    %4132 = vmatprep.subr.mxu0 0.0
    %4133 = vmatpush2.msra.mxu0 0.0
    %4134 = vmatprep.mubr.f32.mxu0 0.0
    %v4135 = vand.u32 %v63, 4294901760
    %v4136 = vsub.f32 %v63, %v4135
    %4137 = vmatmul.mubr.f32.gmra.mxu0 %v4136
    %v4138 = vpop.f32.mrf.mxu0
    %v4139 = vadd.f32 %v4047, %v4138
    %v4140 = vpop.f32.mrf.mxu0
    %4141 = vmatprep.mubr.f32.mxu0 0.0
    %v4142 = vand.u32 %v65, 4294901760
    %v4143 = vsub.f32 %v65, %v4142
    %4144 = vmatmul.mubr.f32.gmra.mxu0 %v4143
    %v4145 = vpop.f32.mrf.mxu0
    %v4146 = vadd.f32 %v4053, %v4145
    %v4147 = vpop.f32.mrf.mxu0
    %4148 = vmatprep.mubr.f32.mxu0 0.0
    %v4149 = vand.u32 %v67, 4294901760
    %v4150 = vsub.f32 %v67, %v4149
    %4151 = vmatmul.mubr.f32.gmra.mxu0 %v4150
    %v4152 = vpop.f32.mrf.mxu0
    %v4153 = vadd.f32 %v4059, %v4152
    %v4154 = vpop.f32.mrf.mxu0
    %4155 = vmatprep.mubr.f32.mxu0 0.0
    %v4156 = vand.u32 %v69, 4294901760
    %v4157 = vsub.f32 %v69, %v4156
    %4158 = vmatmul.mubr.f32.gmra.mxu0 %v4157
    %v4159 = vpop.f32.mrf.mxu0
    %v4160 = vadd.f32 %v4065, %v4159
    %v4161 = vpop.f32.mrf.mxu0
    %4162 = vdwg.mxu0
    %4163 = vmatprep.subr.mxu0 0.0
    %4164 = vmatpush1.msra.mxu0 0.0
    %4165 = vmatprep.subr.mxu0 0.0
    %4166 = vmatpush1.msra.mxu0 0.0
    %4167 = vmatprep.subr.mxu0 0.0
    %4168 = vmatpush1.msra.mxu0 0.0
    %4169 = vmatprep.subr.mxu0 0.0
    %4170 = vmatpush1.msra.mxu0 0.0
    %4171 = vmatprep.subr.mxu0 0.0
    %4172 = vmatpush1.msra.mxu0 0.0
    %4173 = vmatprep.subr.mxu0 0.0
    %4174 = vmatpush1.msra.mxu0 0.0
    %4175 = vmatprep.subr.mxu0 0.0
    %4176 = vmatpush1.msra.mxu0 0.0
    %4177 = vmatprep.subr.mxu0 0.0
    %4178 = vmatpush1.msra.mxu0 0.0
    %4179 = vmatprep.subr.mxu0 0.0
    %4180 = vmatpush1.msra.mxu0 0.0
    %4181 = vmatprep.subr.mxu0 0.0
    %4182 = vmatpush1.msra.mxu0 0.0
    %4183 = vmatprep.subr.mxu0 0.0
    %4184 = vmatpush1.msra.mxu0 0.0
    %4185 = vmatprep.subr.mxu0 0.0
    %4186 = vmatpush1.msra.mxu0 0.0
    %4187 = vmatprep.subr.mxu0 0.0
    %4188 = vmatpush1.msra.mxu0 0.0
    %4189 = vmatprep.subr.mxu0 0.0
    %4190 = vmatpush1.msra.mxu0 0.0
    %4191 = vmatprep.subr.mxu0 0.0
    %4192 = vmatpush1.msra.mxu0 0.0
    %4193 = vmatprep.subr.mxu0 0.0
    %v4194 = vand.u32 %v3866, 4294901760
    %4195 = vmatpush1.msra.mxu0 %v4194
    %4196 = vmatprep.subr.mxu0 0.0
    %4197 = vmatpush2.msra.mxu0 0.0
    %4198 = vmatprep.subr.mxu0 0.0
    %4199 = vmatpush2.msra.mxu0 0.0
    %4200 = vmatprep.subr.mxu0 0.0
    %4201 = vmatpush2.msra.mxu0 0.0
    %4202 = vmatprep.subr.mxu0 0.0
    %4203 = vmatpush2.msra.mxu0 0.0
    %4204 = vmatprep.subr.mxu0 0.0
    %4205 = vmatpush2.msra.mxu0 0.0
    %4206 = vmatprep.subr.mxu0 0.0
    %4207 = vmatpush2.msra.mxu0 0.0
    %4208 = vmatprep.subr.mxu0 0.0
    %4209 = vmatpush2.msra.mxu0 0.0
    %4210 = vmatprep.subr.mxu0 0.0
    %4211 = vmatpush2.msra.mxu0 0.0
    %4212 = vmatprep.subr.mxu0 0.0
    %4213 = vmatpush2.msra.mxu0 0.0
    %4214 = vmatprep.subr.mxu0 0.0
    %4215 = vmatpush2.msra.mxu0 0.0
    %4216 = vmatprep.subr.mxu0 0.0
    %4217 = vmatpush2.msra.mxu0 0.0
    %4218 = vmatprep.subr.mxu0 0.0
    %4219 = vmatpush2.msra.mxu0 0.0
    %4220 = vmatprep.subr.mxu0 0.0
    %4221 = vmatpush2.msra.mxu0 0.0
    %4222 = vmatprep.subr.mxu0 0.0
    %4223 = vmatpush2.msra.mxu0 0.0
    %4224 = vmatprep.subr.mxu0 0.0
    %4225 = vmatpush2.msra.mxu0 0.0
    %4226 = vmatprep.subr.mxu0 0.0
    %4227 = vmatpush2.msra.mxu0 0.0
    %4228 = vmatprep.mubr.f32.mxu0 0.0
    %v4229 = vand.u32 %v63, 4294901760
    %v4230 = vsub.f32 %v63, %v4229
    %v4231 = vand.u32 %v4230, 4294901760
    %4232 = vmatmul.mubr.f32.gmra.mxu0 %v4231
    %v4233 = vpop.f32.mrf.mxu0
    %v4234 = vadd.f32 %v4139, %v4233
    %v4235 = vpop.f32.mrf.mxu0
    %4236 = vmatprep.mubr.f32.mxu0 0.0
    %v4237 = vand.u32 %v65, 4294901760
    %v4238 = vsub.f32 %v65, %v4237
    %v4239 = vand.u32 %v4238, 4294901760
    %4240 = vmatmul.mubr.f32.gmra.mxu0 %v4239
    %v4241 = vpop.f32.mrf.mxu0
    %v4242 = vadd.f32 %v4146, %v4241
    %v4243 = vpop.f32.mrf.mxu0
    %4244 = vmatprep.mubr.f32.mxu0 0.0
    %v4245 = vand.u32 %v67, 4294901760
    %v4246 = vsub.f32 %v67, %v4245
    %v4247 = vand.u32 %v4246, 4294901760
    %4248 = vmatmul.mubr.f32.gmra.mxu0 %v4247
    %v4249 = vpop.f32.mrf.mxu0
    %v4250 = vadd.f32 %v4153, %v4249
    %v4251 = vpop.f32.mrf.mxu0
    %4252 = vmatprep.mubr.f32.mxu0 0.0
    %v4253 = vand.u32 %v69, 4294901760
    %v4254 = vsub.f32 %v69, %v4253
    %v4255 = vand.u32 %v4254, 4294901760
    %4256 = vmatmul.mubr.f32.gmra.mxu0 %v4255
    %v4257 = vpop.f32.mrf.mxu0
    %v4258 = vadd.f32 %v4160, %v4257
    %v4259 = vpop.f32.mrf.mxu0
    %4260 = vdwg.mxu0
    %4261 = vmatprep.subr.mxu0 0.0
    %4262 = vmatpush1.msra.mxu0 0.0
    %4263 = vmatprep.subr.mxu0 0.0
    %4264 = vmatpush1.msra.mxu0 0.0
    %4265 = vmatprep.subr.mxu0 0.0
    %4266 = vmatpush1.msra.mxu0 0.0
    %4267 = vmatprep.subr.mxu0 0.0
    %4268 = vmatpush1.msra.mxu0 0.0
    %4269 = vmatprep.subr.mxu0 0.0
    %4270 = vmatpush1.msra.mxu0 0.0
    %4271 = vmatprep.subr.mxu0 0.0
    %4272 = vmatpush1.msra.mxu0 0.0
    %4273 = vmatprep.subr.mxu0 0.0
    %4274 = vmatpush1.msra.mxu0 0.0
    %4275 = vmatprep.subr.mxu0 0.0
    %4276 = vmatpush1.msra.mxu0 0.0
    %4277 = vmatprep.subr.mxu0 0.0
    %4278 = vmatpush1.msra.mxu0 0.0
    %4279 = vmatprep.subr.mxu0 0.0
    %4280 = vmatpush1.msra.mxu0 0.0
    %4281 = vmatprep.subr.mxu0 0.0
    %4282 = vmatpush1.msra.mxu0 0.0
    %4283 = vmatprep.subr.mxu0 0.0
    %4284 = vmatpush1.msra.mxu0 0.0
    %4285 = vmatprep.subr.mxu0 0.0
    %4286 = vmatpush1.msra.mxu0 0.0
    %4287 = vmatprep.subr.mxu0 0.0
    %4288 = vmatpush1.msra.mxu0 0.0
    %4289 = vmatprep.subr.mxu0 0.0
    %4290 = vmatpush1.msra.mxu0 0.0
    %4291 = vmatprep.subr.mxu0 0.0
    %v4292 = vand.u32 %v3866, 4294901760
    %v4293 = vsub.f32 %v3866, %v4292
    %v4294 = vand.u32 %v4293, 4294901760
    %4295 = vmatpush1.msra.mxu0 %v4294
    %4296 = vmatprep.subr.mxu0 0.0
    %4297 = vmatpush2.msra.mxu0 0.0
    %4298 = vmatprep.subr.mxu0 0.0
    %4299 = vmatpush2.msra.mxu0 0.0
    %4300 = vmatprep.subr.mxu0 0.0
    %4301 = vmatpush2.msra.mxu0 0.0
    %4302 = vmatprep.subr.mxu0 0.0
    %4303 = vmatpush2.msra.mxu0 0.0
    %4304 = vmatprep.subr.mxu0 0.0
    %4305 = vmatpush2.msra.mxu0 0.0
    %4306 = vmatprep.subr.mxu0 0.0
    %4307 = vmatpush2.msra.mxu0 0.0
    %4308 = vmatprep.subr.mxu0 0.0
    %4309 = vmatpush2.msra.mxu0 0.0
    %4310 = vmatprep.subr.mxu0 0.0
    %4311 = vmatpush2.msra.mxu0 0.0
    %4312 = vmatprep.subr.mxu0 0.0
    %4313 = vmatpush2.msra.mxu0 0.0
    %4314 = vmatprep.subr.mxu0 0.0
    %4315 = vmatpush2.msra.mxu0 0.0
    %4316 = vmatprep.subr.mxu0 0.0
    %4317 = vmatpush2.msra.mxu0 0.0
    %4318 = vmatprep.subr.mxu0 0.0
    %4319 = vmatpush2.msra.mxu0 0.0
    %4320 = vmatprep.subr.mxu0 0.0
    %4321 = vmatpush2.msra.mxu0 0.0
    %4322 = vmatprep.subr.mxu0 0.0
    %4323 = vmatpush2.msra.mxu0 0.0
    %4324 = vmatprep.subr.mxu0 0.0
    %4325 = vmatpush2.msra.mxu0 0.0
    %4326 = vmatprep.subr.mxu0 0.0
    %4327 = vmatpush2.msra.mxu0 0.0
    %4328 = vmatprep.mubr.f32.mxu0 0.0
    %v4329 = vand.u32 %v63, 4294901760
    %4330 = vmatmul.mubr.f32.gmra.mxu0 %v4329
    %v4331 = vpop.f32.mrf.mxu0
    %v4332 = vadd.f32 %v4234, %v4331
    %v4333 = vpop.f32.mrf.mxu0
    %4334 = vmatprep.mubr.f32.mxu0 0.0
    %v4335 = vand.u32 %v65, 4294901760
    %4336 = vmatmul.mubr.f32.gmra.mxu0 %v4335
    %v4337 = vpop.f32.mrf.mxu0
    %v4338 = vadd.f32 %v4242, %v4337
    %v4339 = vpop.f32.mrf.mxu0
    %4340 = vmatprep.mubr.f32.mxu0 0.0
    %v4341 = vand.u32 %v67, 4294901760
    %4342 = vmatmul.mubr.f32.gmra.mxu0 %v4341
    %v4343 = vpop.f32.mrf.mxu0
    %v4344 = vadd.f32 %v4250, %v4343
    %v4345 = vpop.f32.mrf.mxu0
    %4346 = vmatprep.mubr.f32.mxu0 0.0
    %v4347 = vand.u32 %v69, 4294901760
    %4348 = vmatmul.mubr.f32.gmra.mxu0 %v4347
    %v4349 = vpop.f32.mrf.mxu0
    %v4350 = vadd.f32 %v4258, %v4349
    %v4351 = vpop.f32.mrf.mxu0
    %4352 = vdwg.mxu0
    %4353 = vmatprep.subr.mxu0 0.0
    %4354 = vmatpush1.msra.mxu0 0.0
    %4355 = vmatprep.subr.mxu0 0.0
    %4356 = vmatpush1.msra.mxu0 0.0
    %4357 = vmatprep.subr.mxu0 0.0
    %4358 = vmatpush1.msra.mxu0 0.0
    %4359 = vmatprep.subr.mxu0 0.0
    %4360 = vmatpush1.msra.mxu0 0.0
    %4361 = vmatprep.subr.mxu0 0.0
    %4362 = vmatpush1.msra.mxu0 0.0
    %4363 = vmatprep.subr.mxu0 0.0
    %4364 = vmatpush1.msra.mxu0 0.0
    %4365 = vmatprep.subr.mxu0 0.0
    %4366 = vmatpush1.msra.mxu0 0.0
    %4367 = vmatprep.subr.mxu0 0.0
    %4368 = vmatpush1.msra.mxu0 0.0
    %4369 = vmatprep.subr.mxu0 0.0
    %4370 = vmatpush1.msra.mxu0 0.0
    %4371 = vmatprep.subr.mxu0 0.0
    %4372 = vmatpush1.msra.mxu0 0.0
    %4373 = vmatprep.subr.mxu0 0.0
    %4374 = vmatpush1.msra.mxu0 0.0
    %4375 = vmatprep.subr.mxu0 0.0
    %4376 = vmatpush1.msra.mxu0 0.0
    %4377 = vmatprep.subr.mxu0 0.0
    %4378 = vmatpush1.msra.mxu0 0.0
    %4379 = vmatprep.subr.mxu0 0.0
    %4380 = vmatpush1.msra.mxu0 0.0
    %4381 = vmatprep.subr.mxu0 0.0
    %4382 = vmatpush1.msra.mxu0 0.0
    %4383 = vmatprep.subr.mxu0 0.0
    %v4384 = vand.u32 %v3866, 4294901760
    %4385 = vmatpush1.msra.mxu0 %v4384
    %4386 = vmatprep.subr.mxu0 0.0
    %4387 = vmatpush2.msra.mxu0 0.0
    %4388 = vmatprep.subr.mxu0 0.0
    %4389 = vmatpush2.msra.mxu0 0.0
    %4390 = vmatprep.subr.mxu0 0.0
    %4391 = vmatpush2.msra.mxu0 0.0
    %4392 = vmatprep.subr.mxu0 0.0
    %4393 = vmatpush2.msra.mxu0 0.0
    %4394 = vmatprep.subr.mxu0 0.0
    %4395 = vmatpush2.msra.mxu0 0.0
    %4396 = vmatprep.subr.mxu0 0.0
    %4397 = vmatpush2.msra.mxu0 0.0
    %4398 = vmatprep.subr.mxu0 0.0
    %4399 = vmatpush2.msra.mxu0 0.0
    %4400 = vmatprep.subr.mxu0 0.0
    %4401 = vmatpush2.msra.mxu0 0.0
    %4402 = vmatprep.subr.mxu0 0.0
    %4403 = vmatpush2.msra.mxu0 0.0
    %4404 = vmatprep.subr.mxu0 0.0
    %4405 = vmatpush2.msra.mxu0 0.0
    %4406 = vmatprep.subr.mxu0 0.0
    %4407 = vmatpush2.msra.mxu0 0.0
    %4408 = vmatprep.subr.mxu0 0.0
    %4409 = vmatpush2.msra.mxu0 0.0
    %4410 = vmatprep.subr.mxu0 0.0
    %4411 = vmatpush2.msra.mxu0 0.0
    %4412 = vmatprep.subr.mxu0 0.0
    %4413 = vmatpush2.msra.mxu0 0.0
    %4414 = vmatprep.subr.mxu0 0.0
    %4415 = vmatpush2.msra.mxu0 0.0
    %4416 = vmatprep.subr.mxu0 0.0
    %4417 = vmatpush2.msra.mxu0 0.0
    %4418 = vmatprep.mubr.f32.mxu0 0.0
    %v4419 = vand.u32 %v63, 4294901760
    %4420 = vmatmul.mubr.f32.gmra.mxu0 %v4419
    %v4421 = vpop.f32.mrf.mxu0
    %v4422 = vadd.f32 %v4332, %v4421
    %v4423 = vpop.f32.mrf.mxu0
    %4424 = vmatprep.mubr.f32.mxu0 0.0
    %v4425 = vand.u32 %v65, 4294901760
    %4426 = vmatmul.mubr.f32.gmra.mxu0 %v4425
    %v4427 = vpop.f32.mrf.mxu0
    %v4428 = vadd.f32 %v4338, %v4427
    %v4429 = vpop.f32.mrf.mxu0
    %4430 = vmatprep.mubr.f32.mxu0 0.0
    %v4431 = vand.u32 %v67, 4294901760
    %4432 = vmatmul.mubr.f32.gmra.mxu0 %v4431
    %v4433 = vpop.f32.mrf.mxu0
    %v4434 = vadd.f32 %v4344, %v4433
    %v4435 = vpop.f32.mrf.mxu0
    %4436 = vmatprep.mubr.f32.mxu0 0.0
    %v4437 = vand.u32 %v69, 4294901760
    %4438 = vmatmul.mubr.f32.gmra.mxu0 %v4437
    %v4439 = vpop.f32.mrf.mxu0
    %v4440 = vadd.f32 %v4350, %v4439
    %v4441 = vpop.f32.mrf.mxu0
    %4442 = vdwg.mxu0
    %4447 = vrot.lane.b32.xlu0 %v4422, 12
    %v4448 = vpop.permute.xlu0 %4447
    %4449 = vrot.lane.b32.xlu0 %v4428, 12
    %v4450 = vpop.permute.xlu0 %4449
    %4451 = vrot.lane.b32.xlu0 %v4434, 12
    %v4452 = vpop.permute.xlu0 %4451
    %4453 = vrot.lane.b32.xlu0 %v4440, 12
    %v4454 = vpop.permute.xlu0 %4453
    %v4459 = vadd.f32 %v3860, %v4448
    %v4460 = vadd.f32 %v3861, %v4450
    %v4461 = vadd.f32 %v3862, %v4452
    %v4462 = vadd.f32 %v3863, %v4454
    %v4463 = vxor.u32 %v4459, 2147483648
    %v4464 = vxor.u32 %v4460, 2147483648
    %v4465 = vmul.f32 %v4463, 1.442695
    %v4466 = vpow.pop %v4465
    %v4467 = vmul.f32 %v4464, 1.442695
    %v4468 = vpow.pop %v4467
    %v4469 = vadd.f32 %v4466, 1.0
    %v4470 = vadd.f32 %v4468, 1.0
    %v4471 = vrcp.pop %v4469
    %v4472 = vmul.f32 1.0, %v4471
    %v4473 = vrcp.pop %v4470
    %v4474 = vmul.f32 1.0, %v4473
    %v4475 = vxor.u32 %v4462, 2147483648
    %v4476 = vmul.f32 %v4475, 1.442695
    %v4477 = vpow.pop %v4476
    %v4478 = vadd.f32 %v4477, 1.0
    %v4479 = vrcp.pop %v4478
    %v4480 = vmul.f32 1.0, %v4479
    %v4481 = vtanh.pop %v4461
    %v4482 = vmul.f32 %v4474, %v3849
    %v4483 = vmul.f32 %v4472, %v4481
    %v4484 = vadd.f32 %v4482, %v4483
    %v4485 = vtanh.pop %v4484
    %v4486 = vmul.f32 %v4480, %v4485
    %v4487 = vlaneseq
    %v4488 = vshrl.u32 %v4487, 7
    %v4489 = vsub.s32 7, %v4488
    %v4490 = vrot.slane %v9, %v4489
    %v4491 = vmul.f32 %v17, %v4490
    %v4492 = vmul.f32 %v22, %v4490
    %v4493 = vmul.f32 %v27, %v4490
    %v4494 = vmul.f32 %v32, %v4490
    %v4495 = vadd.f32 %v4491, %v44
    %v4496 = vadd.f32 %v4492, %v48
    %v4497 = vadd.f32 %v4493, %v52
    %v4498 = vadd.f32 %v4494, %v56
    %4500 = vrot.lane.b32.xlu0 %v4486, 116
    %v4501 = vpop.permute.xlu0 %4500
    %4503 = vmatprep.subr.mxu0 0.0
    %4504 = vmatpush1.msra.mxu0 0.0
    %4505 = vmatprep.subr.mxu0 0.0
    %4506 = vmatpush1.msra.mxu0 0.0
    %4507 = vmatprep.subr.mxu0 0.0
    %4508 = vmatpush1.msra.mxu0 0.0
    %4509 = vmatprep.subr.mxu0 0.0
    %4510 = vmatpush1.msra.mxu0 0.0
    %4511 = vmatprep.subr.mxu0 0.0
    %4512 = vmatpush1.msra.mxu0 0.0
    %4513 = vmatprep.subr.mxu0 0.0
    %4514 = vmatpush1.msra.mxu0 0.0
    %4515 = vmatprep.subr.mxu0 0.0
    %4516 = vmatpush1.msra.mxu0 0.0
    %4517 = vmatprep.subr.mxu0 0.0
    %4518 = vmatpush1.msra.mxu0 0.0
    %4519 = vmatprep.subr.mxu0 0.0
    %4520 = vmatpush1.msra.mxu0 0.0
    %4521 = vmatprep.subr.mxu0 0.0
    %4522 = vmatpush1.msra.mxu0 0.0
    %4523 = vmatprep.subr.mxu0 0.0
    %4524 = vmatpush1.msra.mxu0 0.0
    %4525 = vmatprep.subr.mxu0 0.0
    %4526 = vmatpush1.msra.mxu0 0.0
    %4527 = vmatprep.subr.mxu0 0.0
    %4528 = vmatpush1.msra.mxu0 0.0
    %4529 = vmatprep.subr.mxu0 0.0
    %4530 = vmatpush1.msra.mxu0 0.0
    %4531 = vmatprep.subr.mxu0 0.0
    %4532 = vmatpush1.msra.mxu0 0.0
    %4533 = vmatprep.subr.mxu0 0.0
    %v4534 = vand.u32 %v4501, 4294901760
    %4535 = vmatpush1.msra.mxu0 %v4534
    %4536 = vmatprep.subr.mxu0 0.0
    %4537 = vmatpush2.msra.mxu0 0.0
    %4538 = vmatprep.subr.mxu0 0.0
    %4539 = vmatpush2.msra.mxu0 0.0
    %4540 = vmatprep.subr.mxu0 0.0
    %4541 = vmatpush2.msra.mxu0 0.0
    %4542 = vmatprep.subr.mxu0 0.0
    %4543 = vmatpush2.msra.mxu0 0.0
    %4544 = vmatprep.subr.mxu0 0.0
    %4545 = vmatpush2.msra.mxu0 0.0
    %4546 = vmatprep.subr.mxu0 0.0
    %4547 = vmatpush2.msra.mxu0 0.0
    %4548 = vmatprep.subr.mxu0 0.0
    %4549 = vmatpush2.msra.mxu0 0.0
    %4550 = vmatprep.subr.mxu0 0.0
    %4551 = vmatpush2.msra.mxu0 0.0
    %4552 = vmatprep.subr.mxu0 0.0
    %4553 = vmatpush2.msra.mxu0 0.0
    %4554 = vmatprep.subr.mxu0 0.0
    %4555 = vmatpush2.msra.mxu0 0.0
    %4556 = vmatprep.subr.mxu0 0.0
    %4557 = vmatpush2.msra.mxu0 0.0
    %4558 = vmatprep.subr.mxu0 0.0
    %4559 = vmatpush2.msra.mxu0 0.0
    %4560 = vmatprep.subr.mxu0 0.0
    %4561 = vmatpush2.msra.mxu0 0.0
    %4562 = vmatprep.subr.mxu0 0.0
    %4563 = vmatpush2.msra.mxu0 0.0
    %4564 = vmatprep.subr.mxu0 0.0
    %4565 = vmatpush2.msra.mxu0 0.0
    %4566 = vmatprep.subr.mxu0 0.0
    %4567 = vmatpush2.msra.mxu0 0.0
    %4568 = vmatprep.mubr.f32.mxu0 0.0
    %v4569 = vand.u32 %v63, 4294901760
    %v4570 = vsub.f32 %v63, %v4569
    %v4571 = vand.u32 %v4570, 4294901760
    %v4572 = vsub.f32 %v4570, %v4571
    %v4573 = vand.u32 %v4572, 4294901760
    %4574 = vmatmul.mubr.f32.gmra.mxu0 %v4573
    %v4575 = vpop.f32.mrf.mxu0
    %v4576 = vadd.f32 0.0, %v4575
    %v4577 = vpop.f32.mrf.mxu0
    %4578 = vmatprep.mubr.f32.mxu0 0.0
    %v4579 = vand.u32 %v65, 4294901760
    %v4580 = vsub.f32 %v65, %v4579
    %v4581 = vand.u32 %v4580, 4294901760
    %v4582 = vsub.f32 %v4580, %v4581
    %v4583 = vand.u32 %v4582, 4294901760
    %4584 = vmatmul.mubr.f32.gmra.mxu0 %v4583
    %v4585 = vpop.f32.mrf.mxu0
    %v4586 = vadd.f32 0.0, %v4585
    %v4587 = vpop.f32.mrf.mxu0
    %4588 = vmatprep.mubr.f32.mxu0 0.0
    %v4589 = vand.u32 %v67, 4294901760
    %v4590 = vsub.f32 %v67, %v4589
    %v4591 = vand.u32 %v4590, 4294901760
    %v4592 = vsub.f32 %v4590, %v4591
    %v4593 = vand.u32 %v4592, 4294901760
    %4594 = vmatmul.mubr.f32.gmra.mxu0 %v4593
    %v4595 = vpop.f32.mrf.mxu0
    %v4596 = vadd.f32 0.0, %v4595
    %v4597 = vpop.f32.mrf.mxu0
    %4598 = vmatprep.mubr.f32.mxu0 0.0
    %v4599 = vand.u32 %v69, 4294901760
    %v4600 = vsub.f32 %v69, %v4599
    %v4601 = vand.u32 %v4600, 4294901760
    %v4602 = vsub.f32 %v4600, %v4601
    %v4603 = vand.u32 %v4602, 4294901760
    %4604 = vmatmul.mubr.f32.gmra.mxu0 %v4603
    %v4605 = vpop.f32.mrf.mxu0
    %v4606 = vadd.f32 0.0, %v4605
    %v4607 = vpop.f32.mrf.mxu0
    %4608 = vdwg.mxu0
    %4609 = vmatprep.subr.mxu0 0.0
    %4610 = vmatpush1.msra.mxu0 0.0
    %4611 = vmatprep.subr.mxu0 0.0
    %4612 = vmatpush1.msra.mxu0 0.0
    %4613 = vmatprep.subr.mxu0 0.0
    %4614 = vmatpush1.msra.mxu0 0.0
    %4615 = vmatprep.subr.mxu0 0.0
    %4616 = vmatpush1.msra.mxu0 0.0
    %4617 = vmatprep.subr.mxu0 0.0
    %4618 = vmatpush1.msra.mxu0 0.0
    %4619 = vmatprep.subr.mxu0 0.0
    %4620 = vmatpush1.msra.mxu0 0.0
    %4621 = vmatprep.subr.mxu0 0.0
    %4622 = vmatpush1.msra.mxu0 0.0
    %4623 = vmatprep.subr.mxu0 0.0
    %4624 = vmatpush1.msra.mxu0 0.0
    %4625 = vmatprep.subr.mxu0 0.0
    %4626 = vmatpush1.msra.mxu0 0.0
    %4627 = vmatprep.subr.mxu0 0.0
    %4628 = vmatpush1.msra.mxu0 0.0
    %4629 = vmatprep.subr.mxu0 0.0
    %4630 = vmatpush1.msra.mxu0 0.0
    %4631 = vmatprep.subr.mxu0 0.0
    %4632 = vmatpush1.msra.mxu0 0.0
    %4633 = vmatprep.subr.mxu0 0.0
    %4634 = vmatpush1.msra.mxu0 0.0
    %4635 = vmatprep.subr.mxu0 0.0
    %4636 = vmatpush1.msra.mxu0 0.0
    %4637 = vmatprep.subr.mxu0 0.0
    %4638 = vmatpush1.msra.mxu0 0.0
    %4639 = vmatprep.subr.mxu0 0.0
    %v4640 = vand.u32 %v4501, 4294901760
    %v4641 = vsub.f32 %v4501, %v4640
    %v4642 = vand.u32 %v4641, 4294901760
    %v4643 = vsub.f32 %v4641, %v4642
    %v4644 = vand.u32 %v4643, 4294901760
    %4645 = vmatpush1.msra.mxu0 %v4644
    %4646 = vmatprep.subr.mxu0 0.0
    %4647 = vmatpush2.msra.mxu0 0.0
    %4648 = vmatprep.subr.mxu0 0.0
    %4649 = vmatpush2.msra.mxu0 0.0
    %4650 = vmatprep.subr.mxu0 0.0
    %4651 = vmatpush2.msra.mxu0 0.0
    %4652 = vmatprep.subr.mxu0 0.0
    %4653 = vmatpush2.msra.mxu0 0.0
    %4654 = vmatprep.subr.mxu0 0.0
    %4655 = vmatpush2.msra.mxu0 0.0
    %4656 = vmatprep.subr.mxu0 0.0
    %4657 = vmatpush2.msra.mxu0 0.0
    %4658 = vmatprep.subr.mxu0 0.0
    %4659 = vmatpush2.msra.mxu0 0.0
    %4660 = vmatprep.subr.mxu0 0.0
    %4661 = vmatpush2.msra.mxu0 0.0
    %4662 = vmatprep.subr.mxu0 0.0
    %4663 = vmatpush2.msra.mxu0 0.0
    %4664 = vmatprep.subr.mxu0 0.0
    %4665 = vmatpush2.msra.mxu0 0.0
    %4666 = vmatprep.subr.mxu0 0.0
    %4667 = vmatpush2.msra.mxu0 0.0
    %4668 = vmatprep.subr.mxu0 0.0
    %4669 = vmatpush2.msra.mxu0 0.0
    %4670 = vmatprep.subr.mxu0 0.0
    %4671 = vmatpush2.msra.mxu0 0.0
    %4672 = vmatprep.subr.mxu0 0.0
    %4673 = vmatpush2.msra.mxu0 0.0
    %4674 = vmatprep.subr.mxu0 0.0
    %4675 = vmatpush2.msra.mxu0 0.0
    %4676 = vmatprep.subr.mxu0 0.0
    %4677 = vmatpush2.msra.mxu0 0.0
    %4678 = vmatprep.mubr.f32.mxu0 0.0
    %v4679 = vand.u32 %v63, 4294901760
    %4680 = vmatmul.mubr.f32.gmra.mxu0 %v4679
    %v4681 = vpop.f32.mrf.mxu0
    %v4682 = vadd.f32 %v4576, %v4681
    %v4683 = vpop.f32.mrf.mxu0
    %4684 = vmatprep.mubr.f32.mxu0 0.0
    %v4685 = vand.u32 %v65, 4294901760
    %4686 = vmatmul.mubr.f32.gmra.mxu0 %v4685
    %v4687 = vpop.f32.mrf.mxu0
    %v4688 = vadd.f32 %v4586, %v4687
    %v4689 = vpop.f32.mrf.mxu0
    %4690 = vmatprep.mubr.f32.mxu0 0.0
    %v4691 = vand.u32 %v67, 4294901760
    %4692 = vmatmul.mubr.f32.gmra.mxu0 %v4691
    %v4693 = vpop.f32.mrf.mxu0
    %v4694 = vadd.f32 %v4596, %v4693
    %v4695 = vpop.f32.mrf.mxu0
    %4696 = vmatprep.mubr.f32.mxu0 0.0
    %v4697 = vand.u32 %v69, 4294901760
    %4698 = vmatmul.mubr.f32.gmra.mxu0 %v4697
    %v4699 = vpop.f32.mrf.mxu0
    %v4700 = vadd.f32 %v4606, %v4699
    %v4701 = vpop.f32.mrf.mxu0
    %4702 = vdwg.mxu0
    %4703 = vmatprep.subr.mxu0 0.0
    %4704 = vmatpush1.msra.mxu0 0.0
    %4705 = vmatprep.subr.mxu0 0.0
    %4706 = vmatpush1.msra.mxu0 0.0
    %4707 = vmatprep.subr.mxu0 0.0
    %4708 = vmatpush1.msra.mxu0 0.0
    %4709 = vmatprep.subr.mxu0 0.0
    %4710 = vmatpush1.msra.mxu0 0.0
    %4711 = vmatprep.subr.mxu0 0.0
    %4712 = vmatpush1.msra.mxu0 0.0
    %4713 = vmatprep.subr.mxu0 0.0
    %4714 = vmatpush1.msra.mxu0 0.0
    %4715 = vmatprep.subr.mxu0 0.0
    %4716 = vmatpush1.msra.mxu0 0.0
    %4717 = vmatprep.subr.mxu0 0.0
    %4718 = vmatpush1.msra.mxu0 0.0
    %4719 = vmatprep.subr.mxu0 0.0
    %4720 = vmatpush1.msra.mxu0 0.0
    %4721 = vmatprep.subr.mxu0 0.0
    %4722 = vmatpush1.msra.mxu0 0.0
    %4723 = vmatprep.subr.mxu0 0.0
    %4724 = vmatpush1.msra.mxu0 0.0
    %4725 = vmatprep.subr.mxu0 0.0
    %4726 = vmatpush1.msra.mxu0 0.0
    %4727 = vmatprep.subr.mxu0 0.0
    %4728 = vmatpush1.msra.mxu0 0.0
    %4729 = vmatprep.subr.mxu0 0.0
    %4730 = vmatpush1.msra.mxu0 0.0
    %4731 = vmatprep.subr.mxu0 0.0
    %4732 = vmatpush1.msra.mxu0 0.0
    %4733 = vmatprep.subr.mxu0 0.0
    %v4734 = vand.u32 %v4501, 4294901760
    %v4735 = vsub.f32 %v4501, %v4734
    %4736 = vmatpush1.msra.mxu0 %v4735
    %4737 = vmatprep.subr.mxu0 0.0
    %4738 = vmatpush2.msra.mxu0 0.0
    %4739 = vmatprep.subr.mxu0 0.0
    %4740 = vmatpush2.msra.mxu0 0.0
    %4741 = vmatprep.subr.mxu0 0.0
    %4742 = vmatpush2.msra.mxu0 0.0
    %4743 = vmatprep.subr.mxu0 0.0
    %4744 = vmatpush2.msra.mxu0 0.0
    %4745 = vmatprep.subr.mxu0 0.0
    %4746 = vmatpush2.msra.mxu0 0.0
    %4747 = vmatprep.subr.mxu0 0.0
    %4748 = vmatpush2.msra.mxu0 0.0
    %4749 = vmatprep.subr.mxu0 0.0
    %4750 = vmatpush2.msra.mxu0 0.0
    %4751 = vmatprep.subr.mxu0 0.0
    %4752 = vmatpush2.msra.mxu0 0.0
    %4753 = vmatprep.subr.mxu0 0.0
    %4754 = vmatpush2.msra.mxu0 0.0
    %4755 = vmatprep.subr.mxu0 0.0
    %4756 = vmatpush2.msra.mxu0 0.0
    %4757 = vmatprep.subr.mxu0 0.0
    %4758 = vmatpush2.msra.mxu0 0.0
    %4759 = vmatprep.subr.mxu0 0.0
    %4760 = vmatpush2.msra.mxu0 0.0
    %4761 = vmatprep.subr.mxu0 0.0
    %4762 = vmatpush2.msra.mxu0 0.0
    %4763 = vmatprep.subr.mxu0 0.0
    %4764 = vmatpush2.msra.mxu0 0.0
    %4765 = vmatprep.subr.mxu0 0.0
    %4766 = vmatpush2.msra.mxu0 0.0
    %4767 = vmatprep.subr.mxu0 0.0
    %4768 = vmatpush2.msra.mxu0 0.0
    %4769 = vmatprep.mubr.f32.mxu0 0.0
    %v4770 = vand.u32 %v63, 4294901760
    %v4771 = vsub.f32 %v63, %v4770
    %4772 = vmatmul.mubr.f32.gmra.mxu0 %v4771
    %v4773 = vpop.f32.mrf.mxu0
    %v4774 = vadd.f32 %v4682, %v4773
    %v4775 = vpop.f32.mrf.mxu0
    %4776 = vmatprep.mubr.f32.mxu0 0.0
    %v4777 = vand.u32 %v65, 4294901760
    %v4778 = vsub.f32 %v65, %v4777
    %4779 = vmatmul.mubr.f32.gmra.mxu0 %v4778
    %v4780 = vpop.f32.mrf.mxu0
    %v4781 = vadd.f32 %v4688, %v4780
    %v4782 = vpop.f32.mrf.mxu0
    %4783 = vmatprep.mubr.f32.mxu0 0.0
    %v4784 = vand.u32 %v67, 4294901760
    %v4785 = vsub.f32 %v67, %v4784
    %4786 = vmatmul.mubr.f32.gmra.mxu0 %v4785
    %v4787 = vpop.f32.mrf.mxu0
    %v4788 = vadd.f32 %v4694, %v4787
    %v4789 = vpop.f32.mrf.mxu0
    %4790 = vmatprep.mubr.f32.mxu0 0.0
    %v4791 = vand.u32 %v69, 4294901760
    %v4792 = vsub.f32 %v69, %v4791
    %4793 = vmatmul.mubr.f32.gmra.mxu0 %v4792
    %v4794 = vpop.f32.mrf.mxu0
    %v4795 = vadd.f32 %v4700, %v4794
    %v4796 = vpop.f32.mrf.mxu0
    %4797 = vdwg.mxu0
    %4798 = vmatprep.subr.mxu0 0.0
    %4799 = vmatpush1.msra.mxu0 0.0
    %4800 = vmatprep.subr.mxu0 0.0
    %4801 = vmatpush1.msra.mxu0 0.0
    %4802 = vmatprep.subr.mxu0 0.0
    %4803 = vmatpush1.msra.mxu0 0.0
    %4804 = vmatprep.subr.mxu0 0.0
    %4805 = vmatpush1.msra.mxu0 0.0
    %4806 = vmatprep.subr.mxu0 0.0
    %4807 = vmatpush1.msra.mxu0 0.0
    %4808 = vmatprep.subr.mxu0 0.0
    %4809 = vmatpush1.msra.mxu0 0.0
    %4810 = vmatprep.subr.mxu0 0.0
    %4811 = vmatpush1.msra.mxu0 0.0
    %4812 = vmatprep.subr.mxu0 0.0
    %4813 = vmatpush1.msra.mxu0 0.0
    %4814 = vmatprep.subr.mxu0 0.0
    %4815 = vmatpush1.msra.mxu0 0.0
    %4816 = vmatprep.subr.mxu0 0.0
    %4817 = vmatpush1.msra.mxu0 0.0
    %4818 = vmatprep.subr.mxu0 0.0
    %4819 = vmatpush1.msra.mxu0 0.0
    %4820 = vmatprep.subr.mxu0 0.0
    %4821 = vmatpush1.msra.mxu0 0.0
    %4822 = vmatprep.subr.mxu0 0.0
    %4823 = vmatpush1.msra.mxu0 0.0
    %4824 = vmatprep.subr.mxu0 0.0
    %4825 = vmatpush1.msra.mxu0 0.0
    %4826 = vmatprep.subr.mxu0 0.0
    %4827 = vmatpush1.msra.mxu0 0.0
    %4828 = vmatprep.subr.mxu0 0.0
    %v4829 = vand.u32 %v4501, 4294901760
    %4830 = vmatpush1.msra.mxu0 %v4829
    %4831 = vmatprep.subr.mxu0 0.0
    %4832 = vmatpush2.msra.mxu0 0.0
    %4833 = vmatprep.subr.mxu0 0.0
    %4834 = vmatpush2.msra.mxu0 0.0
    %4835 = vmatprep.subr.mxu0 0.0
    %4836 = vmatpush2.msra.mxu0 0.0
    %4837 = vmatprep.subr.mxu0 0.0
    %4838 = vmatpush2.msra.mxu0 0.0
    %4839 = vmatprep.subr.mxu0 0.0
    %4840 = vmatpush2.msra.mxu0 0.0
    %4841 = vmatprep.subr.mxu0 0.0
    %4842 = vmatpush2.msra.mxu0 0.0
    %4843 = vmatprep.subr.mxu0 0.0
    %4844 = vmatpush2.msra.mxu0 0.0
    %4845 = vmatprep.subr.mxu0 0.0
    %4846 = vmatpush2.msra.mxu0 0.0
    %4847 = vmatprep.subr.mxu0 0.0
    %4848 = vmatpush2.msra.mxu0 0.0
    %4849 = vmatprep.subr.mxu0 0.0
    %4850 = vmatpush2.msra.mxu0 0.0
    %4851 = vmatprep.subr.mxu0 0.0
    %4852 = vmatpush2.msra.mxu0 0.0
    %4853 = vmatprep.subr.mxu0 0.0
    %4854 = vmatpush2.msra.mxu0 0.0
    %4855 = vmatprep.subr.mxu0 0.0
    %4856 = vmatpush2.msra.mxu0 0.0
    %4857 = vmatprep.subr.mxu0 0.0
    %4858 = vmatpush2.msra.mxu0 0.0
    %4859 = vmatprep.subr.mxu0 0.0
    %4860 = vmatpush2.msra.mxu0 0.0
    %4861 = vmatprep.subr.mxu0 0.0
    %4862 = vmatpush2.msra.mxu0 0.0
    %4863 = vmatprep.mubr.f32.mxu0 0.0
    %v4864 = vand.u32 %v63, 4294901760
    %v4865 = vsub.f32 %v63, %v4864
    %v4866 = vand.u32 %v4865, 4294901760
    %4867 = vmatmul.mubr.f32.gmra.mxu0 %v4866
    %v4868 = vpop.f32.mrf.mxu0
    %v4869 = vadd.f32 %v4774, %v4868
    %v4870 = vpop.f32.mrf.mxu0
    %4871 = vmatprep.mubr.f32.mxu0 0.0
    %v4872 = vand.u32 %v65, 4294901760
    %v4873 = vsub.f32 %v65, %v4872
    %v4874 = vand.u32 %v4873, 4294901760
    %4875 = vmatmul.mubr.f32.gmra.mxu0 %v4874
    %v4876 = vpop.f32.mrf.mxu0
    %v4877 = vadd.f32 %v4781, %v4876
    %v4878 = vpop.f32.mrf.mxu0
    %4879 = vmatprep.mubr.f32.mxu0 0.0
    %v4880 = vand.u32 %v67, 4294901760
    %v4881 = vsub.f32 %v67, %v4880
    %v4882 = vand.u32 %v4881, 4294901760
    %4883 = vmatmul.mubr.f32.gmra.mxu0 %v4882
    %v4884 = vpop.f32.mrf.mxu0
    %v4885 = vadd.f32 %v4788, %v4884
    %v4886 = vpop.f32.mrf.mxu0
    %4887 = vmatprep.mubr.f32.mxu0 0.0
    %v4888 = vand.u32 %v69, 4294901760
    %v4889 = vsub.f32 %v69, %v4888
    %v4890 = vand.u32 %v4889, 4294901760
    %4891 = vmatmul.mubr.f32.gmra.mxu0 %v4890
    %v4892 = vpop.f32.mrf.mxu0
    %v4893 = vadd.f32 %v4795, %v4892
    %v4894 = vpop.f32.mrf.mxu0
    %4895 = vdwg.mxu0
    %4896 = vmatprep.subr.mxu0 0.0
    %4897 = vmatpush1.msra.mxu0 0.0
    %4898 = vmatprep.subr.mxu0 0.0
    %4899 = vmatpush1.msra.mxu0 0.0
    %4900 = vmatprep.subr.mxu0 0.0
    %4901 = vmatpush1.msra.mxu0 0.0
    %4902 = vmatprep.subr.mxu0 0.0
    %4903 = vmatpush1.msra.mxu0 0.0
    %4904 = vmatprep.subr.mxu0 0.0
    %4905 = vmatpush1.msra.mxu0 0.0
    %4906 = vmatprep.subr.mxu0 0.0
    %4907 = vmatpush1.msra.mxu0 0.0
    %4908 = vmatprep.subr.mxu0 0.0
    %4909 = vmatpush1.msra.mxu0 0.0
    %4910 = vmatprep.subr.mxu0 0.0
    %4911 = vmatpush1.msra.mxu0 0.0
    %4912 = vmatprep.subr.mxu0 0.0
    %4913 = vmatpush1.msra.mxu0 0.0
    %4914 = vmatprep.subr.mxu0 0.0
    %4915 = vmatpush1.msra.mxu0 0.0
    %4916 = vmatprep.subr.mxu0 0.0
    %4917 = vmatpush1.msra.mxu0 0.0
    %4918 = vmatprep.subr.mxu0 0.0
    %4919 = vmatpush1.msra.mxu0 0.0
    %4920 = vmatprep.subr.mxu0 0.0
    %4921 = vmatpush1.msra.mxu0 0.0
    %4922 = vmatprep.subr.mxu0 0.0
    %4923 = vmatpush1.msra.mxu0 0.0
    %4924 = vmatprep.subr.mxu0 0.0
    %4925 = vmatpush1.msra.mxu0 0.0
    %4926 = vmatprep.subr.mxu0 0.0
    %v4927 = vand.u32 %v4501, 4294901760
    %v4928 = vsub.f32 %v4501, %v4927
    %v4929 = vand.u32 %v4928, 4294901760
    %4930 = vmatpush1.msra.mxu0 %v4929
    %4931 = vmatprep.subr.mxu0 0.0
    %4932 = vmatpush2.msra.mxu0 0.0
    %4933 = vmatprep.subr.mxu0 0.0
    %4934 = vmatpush2.msra.mxu0 0.0
    %4935 = vmatprep.subr.mxu0 0.0
    %4936 = vmatpush2.msra.mxu0 0.0
    %4937 = vmatprep.subr.mxu0 0.0
    %4938 = vmatpush2.msra.mxu0 0.0
    %4939 = vmatprep.subr.mxu0 0.0
    %4940 = vmatpush2.msra.mxu0 0.0
    %4941 = vmatprep.subr.mxu0 0.0
    %4942 = vmatpush2.msra.mxu0 0.0
    %4943 = vmatprep.subr.mxu0 0.0
    %4944 = vmatpush2.msra.mxu0 0.0
    %4945 = vmatprep.subr.mxu0 0.0
    %4946 = vmatpush2.msra.mxu0 0.0
    %4947 = vmatprep.subr.mxu0 0.0
    %4948 = vmatpush2.msra.mxu0 0.0
    %4949 = vmatprep.subr.mxu0 0.0
    %4950 = vmatpush2.msra.mxu0 0.0
    %4951 = vmatprep.subr.mxu0 0.0
    %4952 = vmatpush2.msra.mxu0 0.0
    %4953 = vmatprep.subr.mxu0 0.0
    %4954 = vmatpush2.msra.mxu0 0.0
    %4955 = vmatprep.subr.mxu0 0.0
    %4956 = vmatpush2.msra.mxu0 0.0
    %4957 = vmatprep.subr.mxu0 0.0
    %4958 = vmatpush2.msra.mxu0 0.0
    %4959 = vmatprep.subr.mxu0 0.0
    %4960 = vmatpush2.msra.mxu0 0.0
    %4961 = vmatprep.subr.mxu0 0.0
    %4962 = vmatpush2.msra.mxu0 0.0
    %4963 = vmatprep.mubr.f32.mxu0 0.0
    %v4964 = vand.u32 %v63, 4294901760
    %4965 = vmatmul.mubr.f32.gmra.mxu0 %v4964
    %v4966 = vpop.f32.mrf.mxu0
    %v4967 = vadd.f32 %v4869, %v4966
    %v4968 = vpop.f32.mrf.mxu0
    %4969 = vmatprep.mubr.f32.mxu0 0.0
    %v4970 = vand.u32 %v65, 4294901760
    %4971 = vmatmul.mubr.f32.gmra.mxu0 %v4970
    %v4972 = vpop.f32.mrf.mxu0
    %v4973 = vadd.f32 %v4877, %v4972
    %v4974 = vpop.f32.mrf.mxu0
    %4975 = vmatprep.mubr.f32.mxu0 0.0
    %v4976 = vand.u32 %v67, 4294901760
    %4977 = vmatmul.mubr.f32.gmra.mxu0 %v4976
    %v4978 = vpop.f32.mrf.mxu0
    %v4979 = vadd.f32 %v4885, %v4978
    %v4980 = vpop.f32.mrf.mxu0
    %4981 = vmatprep.mubr.f32.mxu0 0.0
    %v4982 = vand.u32 %v69, 4294901760
    %4983 = vmatmul.mubr.f32.gmra.mxu0 %v4982
    %v4984 = vpop.f32.mrf.mxu0
    %v4985 = vadd.f32 %v4893, %v4984
    %v4986 = vpop.f32.mrf.mxu0
    %4987 = vdwg.mxu0
    %4988 = vmatprep.subr.mxu0 0.0
    %4989 = vmatpush1.msra.mxu0 0.0
    %4990 = vmatprep.subr.mxu0 0.0
    %4991 = vmatpush1.msra.mxu0 0.0
    %4992 = vmatprep.subr.mxu0 0.0
    %4993 = vmatpush1.msra.mxu0 0.0
    %4994 = vmatprep.subr.mxu0 0.0
    %4995 = vmatpush1.msra.mxu0 0.0
    %4996 = vmatprep.subr.mxu0 0.0
    %4997 = vmatpush1.msra.mxu0 0.0
    %4998 = vmatprep.subr.mxu0 0.0
    %4999 = vmatpush1.msra.mxu0 0.0
    %5000 = vmatprep.subr.mxu0 0.0
    %5001 = vmatpush1.msra.mxu0 0.0
    %5002 = vmatprep.subr.mxu0 0.0
    %5003 = vmatpush1.msra.mxu0 0.0
    %5004 = vmatprep.subr.mxu0 0.0
    %5005 = vmatpush1.msra.mxu0 0.0
    %5006 = vmatprep.subr.mxu0 0.0
    %5007 = vmatpush1.msra.mxu0 0.0
    %5008 = vmatprep.subr.mxu0 0.0
    %5009 = vmatpush1.msra.mxu0 0.0
    %5010 = vmatprep.subr.mxu0 0.0
    %5011 = vmatpush1.msra.mxu0 0.0
    %5012 = vmatprep.subr.mxu0 0.0
    %5013 = vmatpush1.msra.mxu0 0.0
    %5014 = vmatprep.subr.mxu0 0.0
    %5015 = vmatpush1.msra.mxu0 0.0
    %5016 = vmatprep.subr.mxu0 0.0
    %5017 = vmatpush1.msra.mxu0 0.0
    %5018 = vmatprep.subr.mxu0 0.0
    %v5019 = vand.u32 %v4501, 4294901760
    %5020 = vmatpush1.msra.mxu0 %v5019
    %5021 = vmatprep.subr.mxu0 0.0
    %5022 = vmatpush2.msra.mxu0 0.0
    %5023 = vmatprep.subr.mxu0 0.0
    %5024 = vmatpush2.msra.mxu0 0.0
    %5025 = vmatprep.subr.mxu0 0.0
    %5026 = vmatpush2.msra.mxu0 0.0
    %5027 = vmatprep.subr.mxu0 0.0
    %5028 = vmatpush2.msra.mxu0 0.0
    %5029 = vmatprep.subr.mxu0 0.0
    %5030 = vmatpush2.msra.mxu0 0.0
    %5031 = vmatprep.subr.mxu0 0.0
    %5032 = vmatpush2.msra.mxu0 0.0
    %5033 = vmatprep.subr.mxu0 0.0
    %5034 = vmatpush2.msra.mxu0 0.0
    %5035 = vmatprep.subr.mxu0 0.0
    %5036 = vmatpush2.msra.mxu0 0.0
    %5037 = vmatprep.subr.mxu0 0.0
    %5038 = vmatpush2.msra.mxu0 0.0
    %5039 = vmatprep.subr.mxu0 0.0
    %5040 = vmatpush2.msra.mxu0 0.0
    %5041 = vmatprep.subr.mxu0 0.0
    %5042 = vmatpush2.msra.mxu0 0.0
    %5043 = vmatprep.subr.mxu0 0.0
    %5044 = vmatpush2.msra.mxu0 0.0
    %5045 = vmatprep.subr.mxu0 0.0
    %5046 = vmatpush2.msra.mxu0 0.0
    %5047 = vmatprep.subr.mxu0 0.0
    %5048 = vmatpush2.msra.mxu0 0.0
    %5049 = vmatprep.subr.mxu0 0.0
    %5050 = vmatpush2.msra.mxu0 0.0
    %5051 = vmatprep.subr.mxu0 0.0
    %5052 = vmatpush2.msra.mxu0 0.0
    %5053 = vmatprep.mubr.f32.mxu0 0.0
    %v5054 = vand.u32 %v63, 4294901760
    %5055 = vmatmul.mubr.f32.gmra.mxu0 %v5054
    %v5056 = vpop.f32.mrf.mxu0
    %v5057 = vadd.f32 %v4967, %v5056
    %v5058 = vpop.f32.mrf.mxu0
    %5059 = vmatprep.mubr.f32.mxu0 0.0
    %v5060 = vand.u32 %v65, 4294901760
    %5061 = vmatmul.mubr.f32.gmra.mxu0 %v5060
    %v5062 = vpop.f32.mrf.mxu0
    %v5063 = vadd.f32 %v4973, %v5062
    %v5064 = vpop.f32.mrf.mxu0
    %5065 = vmatprep.mubr.f32.mxu0 0.0
    %v5066 = vand.u32 %v67, 4294901760
    %5067 = vmatmul.mubr.f32.gmra.mxu0 %v5066
    %v5068 = vpop.f32.mrf.mxu0
    %v5069 = vadd.f32 %v4979, %v5068
    %v5070 = vpop.f32.mrf.mxu0
    %5071 = vmatprep.mubr.f32.mxu0 0.0
    %v5072 = vand.u32 %v69, 4294901760
    %5073 = vmatmul.mubr.f32.gmra.mxu0 %v5072
    %v5074 = vpop.f32.mrf.mxu0
    %v5075 = vadd.f32 %v4985, %v5074
    %v5076 = vpop.f32.mrf.mxu0
    %5077 = vdwg.mxu0
    %5082 = vrot.lane.b32.xlu0 %v5057, 12
    %v5083 = vpop.permute.xlu0 %5082
    %5084 = vrot.lane.b32.xlu0 %v5063, 12
    %v5085 = vpop.permute.xlu0 %5084
    %5086 = vrot.lane.b32.xlu0 %v5069, 12
    %v5087 = vpop.permute.xlu0 %5086
    %5088 = vrot.lane.b32.xlu0 %v5075, 12
    %v5089 = vpop.permute.xlu0 %5088
    %v5094 = vadd.f32 %v4495, %v5083
    %v5095 = vadd.f32 %v4496, %v5085
    %v5096 = vadd.f32 %v4497, %v5087
    %v5097 = vadd.f32 %v4498, %v5089
    %v5098 = vxor.u32 %v5094, 2147483648
    %v5099 = vxor.u32 %v5095, 2147483648
    %v5100 = vmul.f32 %v5098, 1.442695
    %v5101 = vpow.pop %v5100
    %v5102 = vmul.f32 %v5099, 1.442695
    %v5103 = vpow.pop %v5102
    %v5104 = vadd.f32 %v5101, 1.0
    %v5105 = vadd.f32 %v5103, 1.0
    %v5106 = vrcp.pop %v5104
    %v5107 = vmul.f32 1.0, %v5106
    %v5108 = vrcp.pop %v5105
    %v5109 = vmul.f32 1.0, %v5108
    %v5110 = vxor.u32 %v5097, 2147483648
    %v5111 = vmul.f32 %v5110, 1.442695
    %v5112 = vpow.pop %v5111
    %v5113 = vadd.f32 %v5112, 1.0
    %v5114 = vrcp.pop %v5113
    %v5115 = vmul.f32 1.0, %v5114
    %v5116 = vtanh.pop %v5096
    %v5117 = vmul.f32 %v5109, %v4484
    %v5118 = vmul.f32 %v5107, %v5116
    %v5119 = vadd.f32 %v5117, %v5118
    %v5120 = vtanh.pop %v5119
    %v5121 = vmul.f32 %v5115, %v5120
    %5122 = vset.pattern.permute.xlu0 10
    %5123 = vperm.xlu0 %5122, %v9
    %v5124 = vpop.permute.xlu0 %5123
    %v5126 = vmul.f32 %v5124, %v5121
    %vm5127 = vcmask 113760
    %v5128 = vsel %vm5127, %v5126, 0.0
    %v5129 = vrot.slane %v5128, 4
    %v5130 = vadd.f32 %v5128, %v5129
    %v5131 = vrot.slane %v5130, 2
    %v5132 = vadd.f32 %v5130, %v5131
    %v5133 = vrot.slane %v5132, 1
    %v5134 = vadd.f32 %v5132, %v5133
    %5136 = vset.pattern.permute.xlu0 11
    %5137 = vperm.xlu0 %5136, %v13
    %v5138 = vpop.permute.xlu0 %5137
    %v5140 = vadd.f32 %v5134, %v5138
    %v5141 = vxor.u32 %v5140, 2147483648
    %v5142 = vmul.f32 %v5141, 1.442695
    %v5143 = vpow.pop %v5142
    %v5144 = vadd.f32 %v5143, 1.0
    %v5145 = vrcp.pop %v5144
    %v5146 = vmul.f32 1.0, %v5145
    %5148 = vrot.lane.b32.xlu0 %v5146, 116
    %v5149 = vpop.permute.xlu0 %5148
    %vm5151 = vcmask 8192
    %5152 = vst.msk [vmem:[#allocation2] sm:$0x1] %vm5151, %v5149
    // Predicated region
    $region6: #{tpu_custom_call.1} parent=1 // pred_check
      _
    $region7: #{tpu_custom_call.1} parent=1 // pred_check_branch
      %5154 = sbr.rel (0) target = $region9
    $region8: #{tpu_custom_call.1} parent=1 // pred_region
      %s5156 = ssub.s32 16, 16
      %5157 = vsyncadd [#allocation3], %s5156
      %s5159 = sshll.u32 [#allocation2], 4
      %s5160 = int_to_ptr.vmem [resolvable:$true] %s5159
      %5162 = dma.vmem_to_hbm [thread:$0]  %s5160, 16, %s1, [#allocation3]
    $region9: #{tpu_custom_call.1} parent=1 // pred_fallthru
      _
    // Predicated region
    $region10: #{tpu_custom_call.1} parent=1 // pred_check
      _
    $region11: #{tpu_custom_call.1} parent=1 // pred_check_branch
      %5164 = sbr.rel (0) target = $region13
    $region12: #{tpu_custom_call.1} parent=1 // pred_region
      %5165 = dma.done [#allocation3], 16
    $region13: #{tpu_custom_call.1} parent=1 // pred_fallthru
      _
    %5166 = vsyncpa [#allocation3], 1

</llo_original>
